<compile_context>
chip_gen: v5e
topology: v5e:2x2
jax: 0.10.0
libtpu: 0.0.40
codegen_flags: <defaults>
</compile_context>

<pallas_src>
import functools

import jax
import jax.numpy as jnp
from jax.experimental import pallas as pl
from jax.experimental.pallas import tpu as pltpu  # noqa: F401  (TPU backend assumed)


# ------------------------------ in-kernel helpers ------------------------------

def _layernorm_vals(x, g, b, eps=1e-5):
    """x: (N, D); g/b: (1, D). PyTorch LayerNorm semantics (eps=1e-5)."""
    mean = jnp.mean(x, axis=-1, keepdims=True)
    xc = x - mean
    var = jnp.mean(xc * xc, axis=-1, keepdims=True)
    return xc * jax.lax.rsqrt(var + eps) * g + b


def _mha_vals(q_in, k_in, v_in, in_w, in_b, out_w, out_b, *,
              B, L, S, nhead, shared_qk, need_att):
    """nn.MultiheadAttention forward (eval, no masks) on VMEM values.

    q_in: (B*L, D); k_in/v_in: (B*S, D); in_w: (D, 3D); in_b: (1, 3D);
    out_w: (D, D); out_b: (1, D).  Returns (out (B*L, D), att (B, L, S) or None),
    att averaged over heads (average_attn_weights=True).
    """
    D = q_in.shape[-1]
    dh = D // nhead
    scale = 1.0 / float(dh) ** 0.5

    if shared_qk:
        # Q and K use the same input -> one fused (N, D) x (D, 2D) matmul.
        qk = jnp.dot(q_in, in_w[:, :2 * D], preferred_element_type=jnp.float32) + in_b[:, :2 * D]
        q, k = qk[:, :D], qk[:, D:2 * D]
    else:
        q = jnp.dot(q_in, in_w[:, :D], preferred_element_type=jnp.float32) + in_b[:, :D]
        k = jnp.dot(k_in, in_w[:, D:2 * D], preferred_element_type=jnp.float32) + in_b[:, D:2 * D]
    v = jnp.dot(v_in, in_w[:, 2 * D:], preferred_element_type=jnp.float32) + in_b[:, 2 * D:]

    q = (q * scale).reshape(B, L, D)
    k = k.reshape(B, S, D)
    v = v.reshape(B, S, D)

    out = jnp.zeros((B * L, D), jnp.float32)
    att_sum = jnp.zeros((B, L, S), jnp.float32) if need_att else None
    for h in range(nhead):                       # static unroll; independent MXU work
        sl = slice(h * dh, (h + 1) * dh)
        qh, kh, vh = q[:, :, sl], k[:, :, sl], v[:, :, sl]
        # contract head dim directly -> no k.T materialization
        s = jnp.einsum('bqd,bkd->bqk', qh, kh, preferred_element_type=jnp.float32)
        m = jnp.max(s, axis=-1, keepdims=True)
        e = jnp.exp(s - m)
        p = e * pl.reciprocal(jnp.sum(e, axis=-1, keepdims=True), approx=True)
        oh = jnp.einsum('bqk,bkd->bqd', p, vh, preferred_element_type=jnp.float32)
        # concat-free out-projection: sum_h o_h @ W_out[h*dh:(h+1)*dh, :]
        out = out + jnp.dot(oh.reshape(B * L, dh), out_w[sl, :],
                            preferred_element_type=jnp.float32)
        if need_att:
            att_sum = att_sum + p
    out = out + out_b
    att = att_sum * (1.0 / nhead) if need_att else None
    return out, att


# ------------------------------ fused decoder-layer kernel ------------------------------

def _decoder_layer_kernel(tgt_ref, mem_ref, memk_ref, qpos_ref,
                          sa_in_w, sa_in_b, sa_out_w, sa_out_b,
                          ca_in_w, ca_in_b, ca_out_w, ca_out_b,
                          lin1_w, lin1_b, lin2_w, lin2_b,
                          n1_g, n1_b, n2_g, n2_b, n3_g, n3_b,
                          out_ref, att_ref=None, *, nhead):
    """One DETR TransformerDecoderLayer (post-norm), everything resident in VMEM.

    tgt/qpos: (B, T, D); mem/memk: (B, S, D).  att_ref present only when the
    head-averaged cross-attention weights are actually needed (last layer).
    """
    B, L, D = tgt_ref.shape
    S = mem_ref.shape[1]

    tgt = tgt_ref[...].reshape(B * L, D)
    qpos = qpos_ref[...].reshape(B * L, D)
    mem = mem_ref[...].reshape(B * S, D)
    memk = memk_ref[...].reshape(B * S, D)      # memory + pos (precomputed once outside)

    # --- self-attention -> add & norm (dropout = identity) ---
    q_in = tgt + qpos
    sa, _ = _mha_vals(q_in, q_in, tgt,
                      sa_in_w[...], sa_in_b[...], sa_out_w[...], sa_out_b[...],
                      B=B, L=L, S=L, nhead=nhead, shared_qk=True, need_att=False)
    x = _layernorm_vals(tgt + sa, n1_g[...], n1_b[...])

    # --- cross-attention -> add & norm ---
    ca, att = _mha_vals(x + qpos, memk, mem,
                        ca_in_w[...], ca_in_b[...], ca_out_w[...], ca_out_b[...],
                        B=B, L=L, S=S, nhead=nhead, shared_qk=False,
                        need_att=att_ref is not None)
    x = _layernorm_vals(x + ca, n2_g[...], n2_b[...])

    # --- FFN -> add & norm ---
    h = jnp.maximum(jnp.dot(x, lin1_w[...], preferred_element_type=jnp.float32) + lin1_b[...], 0.0)
    y = jnp.dot(h, lin2_w[...], preferred_element_type=jnp.float32) + lin2_b[...]
    x = _layernorm_vals(x + y, n3_g[...], n3_b[...])

    out_ref[...] = x.reshape(B, L, D)
    if att_ref is not None:
        att_ref[...] = att


def _decoder_layer(x, mem, memk, qpos, lp, nhead, with_att):
    """x/qpos: (B, T, D); mem/memk: (B, S, D).  Returns (new x, att or None)."""
    B, T, D = x.shape
    S = mem.shape[1]
    out_shape = [jax.ShapeDtypeStruct((B, T, D), jnp.float32)]
    if with_att:
        out_shape.append(jax.ShapeDtypeStruct((B, T, S), jnp.float32))
    res = pl.pallas_call(
        functools.partial(_decoder_layer_kernel, nhead=nhead),
        out_shape=tuple(out_shape),
    )(x, mem, memk, qpos,
      lp["self_attn"]["in_w"], lp["self_attn"]["in_b"].reshape(1, -1),
      lp["self_attn"]["out_w"], lp["self_attn"]["out_b"].reshape(1, -1),
      lp["cross_attn"]["in_w"], lp["cross_attn"]["in_b"].reshape(1, -1),
      lp["cross_attn"]["out_w"], lp["cross_attn"]["out_b"].reshape(1, -1),
      lp["lin1_w"], lp["lin1_b"].reshape(1, -1),
      lp["lin2_w"], lp["lin2_b"].reshape(1, -1),
      lp["norm1_g"].reshape(1, -1), lp["norm1_b"].reshape(1, -1),
      lp["norm2_g"].reshape(1, -1), lp["norm2_b"].reshape(1, -1),
      lp["norm3_g"].reshape(1, -1), lp["norm3_b"].reshape(1, -1))
    if with_att:
        return res[0], res[1]
    return res[0], None


# ------------------------------ final LayerNorm kernel ------------------------------

def _layernorm_kernel(x_ref, g_ref, b_ref, o_ref):
    o_ref[...] = _layernorm_vals(x_ref[...], g_ref[...], b_ref[...])


def _final_layernorm(x2d, gamma, beta):
    N, D = x2d.shape
    return pl.pallas_call(
        _layernorm_kernel,
        out_shape=jax.ShapeDtypeStruct((N, D), jnp.float32),
    )(x2d, gamma.reshape(1, D), beta.reshape(1, D))


# ------------------------------ full decoder forward (jitted) ------------------------------

@functools.partial(jax.jit, static_argnames=("nhead",))
def transformer_decoder_forward(tgt, memory, params, pos=None, query_pos=None, *, nhead=4):
    """TransformerDecoder.forward with return_intermediate=False and norm != None."""
    # TODO(synk): tgt_mask / memory_mask / *_key_padding_mask are None in this synthetic
    # run and are therefore not applied inside the attention kernel.
    T, B, D = tgt.shape
    pos = jnp.zeros_like(memory) if pos is None else pos
    query_pos = jnp.zeros_like(tgt) if query_pos is None else query_pos

    # batch-first layout inside the kernels (contiguous (B*T, D) rows, no in-kernel transposes)
    x = jnp.transpose(tgt, (1, 0, 2))                       # (B, T, D)
    mem = jnp.transpose(memory, (1, 0, 2))                  # (B, S, D)
    memk = mem + jnp.transpose(pos, (1, 0, 2))              # memory + pos, hoisted out of the loop
    qpos = jnp.transpose(query_pos, (1, 0, 2))              # (B, T, D)

    att = None
    n_layers = len(params["layers"])
    for i, lp in enumerate(params["layers"]):
        x, a = _decoder_layer(x, mem, memk, qpos, lp, nhead, with_att=(i == n_layers - 1))
        if a is not None:
            att = a

    x = _final_layernorm(x.reshape(B * T, D), params["norm_g"], params["norm_b"]).reshape(B, T, D)
    out = jnp.transpose(x, (1, 0, 2))                       # back to (T, B, D)
    return out[None], att[None]                             # (1, T, B, D), (1, B, T, S)


# ------------------------------ deterministic param init ------------------------------

def init_params(key, num_layers, D, ff):
    def dense(k, shape, scale=0.02):
        return scale * jax.random.normal(k, shape, jnp.float32)

    layers = []
    for l in range(num_layers):
        ks = jax.random.split(jax.random.fold_in(key, l), 6)
        layers.append({
            "self_attn": {"in_w": dense(ks[0], (D, 3 * D)), "in_b": jnp.zeros((3 * D,), jnp.float32),
                          "out_w": dense(ks[1], (D, D)), "out_b": jnp.zeros((D,), jnp.float32)},
            "cross_attn": {"in_w": dense(ks[2], (D, 3 * D)), "in_b": jnp.zeros((3 * D,), jnp.float32),
                           "out_w": dense(ks[3], (D, D)), "out_b": jnp.zeros((D,), jnp.float32)},
            "lin1_w": dense(ks[4], (D, ff)), "lin1_b": jnp.zeros((ff,), jnp.float32),
            "lin2_w": dense(ks[5], (ff, D)), "lin2_b": jnp.zeros((D,), jnp.float32),
            "norm1_g": jnp.ones((D,), jnp.float32), "norm1_b": jnp.zeros((D,), jnp.float32),
            "norm2_g": jnp.ones((D,), jnp.float32), "norm2_b": jnp.zeros((D,), jnp.float32),
            "norm3_g": jnp.ones((D,), jnp.float32), "norm3_b": jnp.zeros((D,), jnp.float32),
        })
    return {"layers": layers,
            "norm_g": jnp.ones((D,), jnp.float32),
            "norm_b": jnp.zeros((D,), jnp.float32)}


if __name__ == "__main__":
    T, S, B, D, NHEAD, FF, LAYERS = 8, 16, 2, 32, 4, 64, 2

    key = jax.random.PRNGKey(0)
    k1, k2, k3, k4, kp = jax.random.split(key, 5)
    tgt = jax.random.normal(k1, (T, B, D), jnp.float32)
    memory = jax.random.normal(k2, (S, B, D), jnp.float32)
    query_pos = jax.random.normal(k3, (T, B, D), jnp.float32)
    pos = jax.random.normal(k4, (S, B, D), jnp.float32)
    params = init_params(kp, LAYERS, D, FF)

    out, att = transformer_decoder_forward(tgt, memory, params,
                                           pos=pos, query_pos=query_pos, nhead=NHEAD)
    jax.block_until_ready(out)
    jax.block_until_ready(att)

    assert out.shape == (1, T, B, D), out.shape
    assert att.shape == (1, B, T, S), att.shape
    assert bool(jnp.all(jnp.isfinite(out))) and bool(jnp.all(jnp.isfinite(att)))
    print("KERNEL_OK")
</pallas_src>

<mosaic_0001>
module attributes {stable_mosaic.version = 11 : i64} {
  func.func @_decoder_layer_kernel(%arg0: memref<2x8x32xf32, #tpu.memory_space<vmem>>, %arg1: memref<2x16x32xf32, #tpu.memory_space<vmem>>, %arg2: memref<2x16x32xf32, #tpu.memory_space<vmem>>, %arg3: memref<2x8x32xf32, #tpu.memory_space<vmem>>, %arg4: memref<32x96xf32, #tpu.memory_space<vmem>>, %arg5: memref<1x96xf32, #tpu.memory_space<vmem>>, %arg6: memref<32x32xf32, #tpu.memory_space<vmem>>, %arg7: memref<1x32xf32, #tpu.memory_space<vmem>>, %arg8: memref<32x96xf32, #tpu.memory_space<vmem>>, %arg9: memref<1x96xf32, #tpu.memory_space<vmem>>, %arg10: memref<32x32xf32, #tpu.memory_space<vmem>>, %arg11: memref<1x32xf32, #tpu.memory_space<vmem>>, %arg12: memref<32x64xf32, #tpu.memory_space<vmem>>, %arg13: memref<1x64xf32, #tpu.memory_space<vmem>>, %arg14: memref<64x32xf32, #tpu.memory_space<vmem>>, %arg15: memref<1x32xf32, #tpu.memory_space<vmem>>, %arg16: memref<1x32xf32, #tpu.memory_space<vmem>>, %arg17: memref<1x32xf32, #tpu.memory_space<vmem>>, %arg18: memref<1x32xf32, #tpu.memory_space<vmem>>, %arg19: memref<1x32xf32, #tpu.memory_space<vmem>>, %arg20: memref<1x32xf32, #tpu.memory_space<vmem>>, %arg21: memref<1x32xf32, #tpu.memory_space<vmem>>, %arg22: memref<2x8x32xf32, #tpu.memory_space<vmem>>) attributes {dimension_semantics = [], scalar_prefetch = 0 : i64, scratch_operands = 0 : i64, tpu.core_type = #tpu.core_type<tc>} {
    %c0 = arith.constant 0 : index
    %c0_0 = arith.constant 0 : index
    %c0_1 = arith.constant 0 : index
    %0 = vector.load %arg0[%c0, %c0_0, %c0_1] : memref<2x8x32xf32, #tpu.memory_space<vmem>>, vector<2x8x32xf32>
    %1 = vector.shape_cast %0 : vector<2x8x32xf32> to vector<16x32xf32>
    %c0_2 = arith.constant 0 : index
    %c0_3 = arith.constant 0 : index
    %c0_4 = arith.constant 0 : index
    %2 = vector.load %arg3[%c0_2, %c0_3, %c0_4] : memref<2x8x32xf32, #tpu.memory_space<vmem>>, vector<2x8x32xf32>
    %3 = vector.shape_cast %2 : vector<2x8x32xf32> to vector<16x32xf32>
    %c0_5 = arith.constant 0 : index
    %c0_6 = arith.constant 0 : index
    %c0_7 = arith.constant 0 : index
    %4 = vector.load %arg1[%c0_5, %c0_6, %c0_7] : memref<2x16x32xf32, #tpu.memory_space<vmem>>, vector<2x16x32xf32>
    %5 = vector.shape_cast %4 : vector<2x16x32xf32> to vector<32x32xf32>
    %c0_8 = arith.constant 0 : index
    %c0_9 = arith.constant 0 : index
    %c0_10 = arith.constant 0 : index
    %6 = vector.load %arg2[%c0_8, %c0_9, %c0_10] : memref<2x16x32xf32, #tpu.memory_space<vmem>>, vector<2x16x32xf32>
    %7 = vector.shape_cast %6 : vector<2x16x32xf32> to vector<32x32xf32>
    %8 = arith.addf %1, %3 : vector<16x32xf32>
    %c0_11 = arith.constant 0 : index
    %c0_12 = arith.constant 0 : index
    %9 = vector.load %arg4[%c0_11, %c0_12] : memref<32x96xf32, #tpu.memory_space<vmem>>, vector<32x96xf32>
    %c0_13 = arith.constant 0 : index
    %c0_14 = arith.constant 0 : index
    %10 = vector.load %arg5[%c0_13, %c0_14] : memref<1x96xf32, #tpu.memory_space<vmem>>, vector<1x96xf32>
    %c0_15 = arith.constant 0 : index
    %c0_16 = arith.constant 0 : index
    %11 = vector.load %arg6[%c0_15, %c0_16] : memref<32x32xf32, #tpu.memory_space<vmem>>, vector<32x32xf32>
    %c0_17 = arith.constant 0 : index
    %c0_18 = arith.constant 0 : index
    %12 = vector.load %arg7[%c0_17, %c0_18] : memref<1x32xf32, #tpu.memory_space<vmem>>, vector<1x32xf32>
    %13 = vector.extract_strided_slice %9 {offsets = [0, 0], sizes = [32, 64], strides = [1, 1]} : vector<32x96xf32> to vector<32x64xf32>
    %cst = arith.constant dense<0.000000e+00> : vector<16x64xf32>
    %14 = tpu.matmul %8, %13, %cst {dimension_numbers = #tpu.dot_dimension_numbers<[1], [0], [0], [1], [0, 0, 1, 1], [], []>} : vector<16x32xf32>, vector<32x64xf32>, vector<16x64xf32> -> vector<16x64xf32>
    %15 = vector.extract_strided_slice %10 {offsets = [0, 0], sizes = [1, 64], strides = [1, 1]} : vector<1x96xf32> to vector<1x64xf32>
    %16 = vector.broadcast %15 : vector<1x64xf32> to vector<16x64xf32>
    %17 = arith.addf %14, %16 : vector<16x64xf32>
    %18 = vector.extract_strided_slice %17 {offsets = [0, 0], sizes = [16, 32], strides = [1, 1]} : vector<16x64xf32> to vector<16x32xf32>
    %19 = vector.extract_strided_slice %17 {offsets = [0, 32], sizes = [16, 32], strides = [1, 1]} : vector<16x64xf32> to vector<16x32xf32>
    %20 = vector.extract_strided_slice %9 {offsets = [0, 64], sizes = [32, 32], strides = [1, 1]} : vector<32x96xf32> to vector<32x32xf32>
    %cst_19 = arith.constant dense<0.000000e+00> : vector<16x32xf32>
    %21 = tpu.matmul %1, %20, %cst_19 {dimension_numbers = #tpu.dot_dimension_numbers<[1], [0], [0], [1], [0, 0, 1, 1], [], []>} : vector<16x32xf32>, vector<32x32xf32>, vector<16x32xf32> -> vector<16x32xf32>
    %22 = vector.extract_strided_slice %10 {offsets = [0, 64], sizes = [1, 32], strides = [1, 1]} : vector<1x96xf32> to vector<1x32xf32>
    %23 = vector.broadcast %22 : vector<1x32xf32> to vector<16x32xf32>
    %24 = arith.addf %21, %23 : vector<16x32xf32>
    %cst_20 = arith.constant 0.353553385 : f32
    %25 = vector.broadcast %cst_20 : f32 to vector<16x32xf32>
    %26 = arith.mulf %18, %25 : vector<16x32xf32>
    %27 = vector.shape_cast %26 : vector<16x32xf32> to vector<2x8x32xf32>
    %28 = vector.shape_cast %19 : vector<16x32xf32> to vector<2x8x32xf32>
    %29 = vector.shape_cast %24 : vector<16x32xf32> to vector<2x8x32xf32>
    %cst_21 = arith.constant 0.000000e+00 : f32
    %30 = vector.broadcast %cst_21 : f32 to vector<16x32xf32>
    %31 = vector.extract_strided_slice %27 {offsets = [0, 0, 0], sizes = [2, 8, 8], strides = [1, 1, 1]} : vector<2x8x32xf32> to vector<2x8x8xf32>
    %32 = vector.extract_strided_slice %28 {offsets = [0, 0, 0], sizes = [2, 8, 8], strides = [1, 1, 1]} : vector<2x8x32xf32> to vector<2x8x8xf32>
    %33 = vector.extract_strided_slice %29 {offsets = [0, 0, 0], sizes = [2, 8, 8], strides = [1, 1, 1]} : vector<2x8x32xf32> to vector<2x8x8xf32>
    "tpu.trace_start"() <{level = 10 : i32, message = "bqd,bkd->bqk"}> : () -> ()
    %cst_22 = arith.constant dense<0.000000e+00> : vector<2x8x8xf32>
    %34 = tpu.matmul %31, %32, %cst_22 {dimension_numbers = #tpu.dot_dimension_numbers<[2], [2], [1], [1], [0, 0, 0, 1, 1, 1], [0], [0]>} : vector<2x8x8xf32>, vector<2x8x8xf32>, vector<2x8x8xf32> -> vector<2x8x8xf32>
    "tpu.trace_stop"() : () -> ()
    %cst_23 = arith.constant dense<0xFF800000> : vector<2x8xf32>
    %35 = vector.multi_reduction <maximumf>, %34, %cst_23 [2] : vector<2x8x8xf32> to vector<2x8xf32>
    %36 = vector.shape_cast %35 : vector<2x8xf32> to vector<2x8x1xf32>
    %37 = vector.broadcast %36 : vector<2x8x1xf32> to vector<2x8x8xf32>
    %38 = arith.subf %34, %37 : vector<2x8x8xf32>
    %39 = math.exp %38 : vector<2x8x8xf32>
    %cst_24 = arith.constant dense<0.000000e+00> : vector<2x8xf32>
    %40 = vector.multi_reduction <add>, %39, %cst_24 [2] : vector<2x8x8xf32> to vector<2x8xf32>
    %41 = vector.shape_cast %40 : vector<2x8xf32> to vector<2x8x1xf32>
    %42 = tpu.reciprocal %41 {approx = true} : vector<2x8x1xf32> -> vector<2x8x1xf32>
    %43 = vector.broadcast %42 : vector<2x8x1xf32> to vector<2x8x8xf32>
    %44 = arith.mulf %39, %43 : vector<2x8x8xf32>
    "tpu.trace_start"() <{level = 10 : i32, message = "bqk,bkd->bqd"}> : () -> ()
    %cst_25 = arith.constant dense<0.000000e+00> : vector<2x8x8xf32>
    %45 = tpu.matmul %44, %33, %cst_25 {dimension_numbers = #tpu.dot_dimension_numbers<[2], [1], [1], [2], [0, 0, 0, 1, 1, 2], [0], [0]>} : vector<2x8x8xf32>, vector<2x8x8xf32>, vector<2x8x8xf32> -> vector<2x8x8xf32>
    "tpu.trace_stop"() : () -> ()
    %46 = vector.shape_cast %45 : vector<2x8x8xf32> to vector<16x8xf32>
    %47 = vector.extract_strided_slice %11 {offsets = [0, 0], sizes = [8, 32], strides = [1, 1]} : vector<32x32xf32> to vector<8x32xf32>
    %cst_26 = arith.constant dense<0.000000e+00> : vector<16x32xf32>
    %48 = tpu.matmul %46, %47, %cst_26 {dimension_numbers = #tpu.dot_dimension_numbers<[1], [0], [0], [1], [0, 0, 1, 1], [], []>} : vector<16x8xf32>, vector<8x32xf32>, vector<16x32xf32> -> vector<16x32xf32>
    %49 = arith.addf %30, %48 : vector<16x32xf32>
    %50 = vector.extract_strided_slice %27 {offsets = [0, 0, 8], sizes = [2, 8, 8], strides = [1, 1, 1]} : vector<2x8x32xf32> to vector<2x8x8xf32>
    %51 = vector.extract_strided_slice %28 {offsets = [0, 0, 8], sizes = [2, 8, 8], strides = [1, 1, 1]} : vector<2x8x32xf32> to vector<2x8x8xf32>
    %52 = vector.extract_strided_slice %29 {offsets = [0, 0, 8], sizes = [2, 8, 8], strides = [1, 1, 1]} : vector<2x8x32xf32> to vector<2x8x8xf32>
    "tpu.trace_start"() <{level = 10 : i32, message = "bqd,bkd->bqk"}> : () -> ()
    %cst_27 = arith.constant dense<0.000000e+00> : vector<2x8x8xf32>
    %53 = tpu.matmul %50, %51, %cst_27 {dimension_numbers = #tpu.dot_dimension_numbers<[2], [2], [1], [1], [0, 0, 0, 1, 1, 1], [0], [0]>} : vector<2x8x8xf32>, vector<2x8x8xf32>, vector<2x8x8xf32> -> vector<2x8x8xf32>
    "tpu.trace_stop"() : () -> ()
    %cst_28 = arith.constant dense<0xFF800000> : vector<2x8xf32>
    %54 = vector.multi_reduction <maximumf>, %53, %cst_28 [2] : vector<2x8x8xf32> to vector<2x8xf32>
    %55 = vector.shape_cast %54 : vector<2x8xf32> to vector<2x8x1xf32>
    %56 = vector.broadcast %55 : vector<2x8x1xf32> to vector<2x8x8xf32>
    %57 = arith.subf %53, %56 : vector<2x8x8xf32>
    %58 = math.exp %57 : vector<2x8x8xf32>
    %cst_29 = arith.constant dense<0.000000e+00> : vector<2x8xf32>
    %59 = vector.multi_reduction <add>, %58, %cst_29 [2] : vector<2x8x8xf32> to vector<2x8xf32>
    %60 = vector.shape_cast %59 : vector<2x8xf32> to vector<2x8x1xf32>
    %61 = tpu.reciprocal %60 {approx = true} : vector<2x8x1xf32> -> vector<2x8x1xf32>
    %62 = vector.broadcast %61 : vector<2x8x1xf32> to vector<2x8x8xf32>
    %63 = arith.mulf %58, %62 : vector<2x8x8xf32>
    "tpu.trace_start"() <{level = 10 : i32, message = "bqk,bkd->bqd"}> : () -> ()
    %cst_30 = arith.constant dense<0.000000e+00> : vector<2x8x8xf32>
    %64 = tpu.matmul %63, %52, %cst_30 {dimension_numbers = #tpu.dot_dimension_numbers<[2], [1], [1], [2], [0, 0, 0, 1, 1, 2], [0], [0]>} : vector<2x8x8xf32>, vector<2x8x8xf32>, vector<2x8x8xf32> -> vector<2x8x8xf32>
    "tpu.trace_stop"() : () -> ()
    %65 = vector.shape_cast %64 : vector<2x8x8xf32> to vector<16x8xf32>
    %66 = vector.extract_strided_slice %11 {offsets = [8, 0], sizes = [8, 32], strides = [1, 1]} : vector<32x32xf32> to vector<8x32xf32>
    %cst_31 = arith.constant dense<0.000000e+00> : vector<16x32xf32>
    %67 = tpu.matmul %65, %66, %cst_31 {dimension_numbers = #tpu.dot_dimension_numbers<[1], [0], [0], [1], [0, 0, 1, 1], [], []>} : vector<16x8xf32>, vector<8x32xf32>, vector<16x32xf32> -> vector<16x32xf32>
    %68 = arith.addf %49, %67 : vector<16x32xf32>
    %69 = vector.extract_strided_slice %27 {offsets = [0, 0, 16], sizes = [2, 8, 8], strides = [1, 1, 1]} : vector<2x8x32xf32> to vector<2x8x8xf32>
    %70 = vector.extract_strided_slice %28 {offsets = [0, 0, 16], sizes = [2, 8, 8], strides = [1, 1, 1]} : vector<2x8x32xf32> to vector<2x8x8xf32>
    %71 = vector.extract_strided_slice %29 {offsets = [0, 0, 16], sizes = [2, 8, 8], strides = [1, 1, 1]} : vector<2x8x32xf32> to vector<2x8x8xf32>
    "tpu.trace_start"() <{level = 10 : i32, message = "bqd,bkd->bqk"}> : () -> ()
    %cst_32 = arith.constant dense<0.000000e+00> : vector<2x8x8xf32>
    %72 = tpu.matmul %69, %70, %cst_32 {dimension_numbers = #tpu.dot_dimension_numbers<[2], [2], [1], [1], [0, 0, 0, 1, 1, 1], [0], [0]>} : vector<2x8x8xf32>, vector<2x8x8xf32>, vector<2x8x8xf32> -> vector<2x8x8xf32>
    "tpu.trace_stop"() : () -> ()
    %cst_33 = arith.constant dense<0xFF800000> : vector<2x8xf32>
    %73 = vector.multi_reduction <maximumf>, %72, %cst_33 [2] : vector<2x8x8xf32> to vector<2x8xf32>
    %74 = vector.shape_cast %73 : vector<2x8xf32> to vector<2x8x1xf32>
    %75 = vector.broadcast %74 : vector<2x8x1xf32> to vector<2x8x8xf32>
    %76 = arith.subf %72, %75 : vector<2x8x8xf32>
    %77 = math.exp %76 : vector<2x8x8xf32>
    %cst_34 = arith.constant dense<0.000000e+00> : vector<2x8xf32>
    %78 = vector.multi_reduction <add>, %77, %cst_34 [2] : vector<2x8x8xf32> to vector<2x8xf32>
    %79 = vector.shape_cast %78 : vector<2x8xf32> to vector<2x8x1xf32>
    %80 = tpu.reciprocal %79 {approx = true} : vector<2x8x1xf32> -> vector<2x8x1xf32>
    %81 = vector.broadcast %80 : vector<2x8x1xf32> to vector<2x8x8xf32>
    %82 = arith.mulf %77, %81 : vector<2x8x8xf32>
    "tpu.trace_start"() <{level = 10 : i32, message = "bqk,bkd->bqd"}> : () -> ()
    %cst_35 = arith.constant dense<0.000000e+00> : vector<2x8x8xf32>
    %83 = tpu.matmul %82, %71, %cst_35 {dimension_numbers = #tpu.dot_dimension_numbers<[2], [1], [1], [2], [0, 0, 0, 1, 1, 2], [0], [0]>} : vector<2x8x8xf32>, vector<2x8x8xf32>, vector<2x8x8xf32> -> vector<2x8x8xf32>
    "tpu.trace_stop"() : () -> ()
    %84 = vector.shape_cast %83 : vector<2x8x8xf32> to vector<16x8xf32>
    %85 = vector.extract_strided_slice %11 {offsets = [16, 0], sizes = [8, 32], strides = [1, 1]} : vector<32x32xf32> to vector<8x32xf32>
    %cst_36 = arith.constant dense<0.000000e+00> : vector<16x32xf32>
    %86 = tpu.matmul %84, %85, %cst_36 {dimension_numbers = #tpu.dot_dimension_numbers<[1], [0], [0], [1], [0, 0, 1, 1], [], []>} : vector<16x8xf32>, vector<8x32xf32>, vector<16x32xf32> -> vector<16x32xf32>
    %87 = arith.addf %68, %86 : vector<16x32xf32>
    %88 = vector.extract_strided_slice %27 {offsets = [0, 0, 24], sizes = [2, 8, 8], strides = [1, 1, 1]} : vector<2x8x32xf32> to vector<2x8x8xf32>
    %89 = vector.extract_strided_slice %28 {offsets = [0, 0, 24], sizes = [2, 8, 8], strides = [1, 1, 1]} : vector<2x8x32xf32> to vector<2x8x8xf32>
    %90 = vector.extract_strided_slice %29 {offsets = [0, 0, 24], sizes = [2, 8, 8], strides = [1, 1, 1]} : vector<2x8x32xf32> to vector<2x8x8xf32>
    "tpu.trace_start"() <{level = 10 : i32, message = "bqd,bkd->bqk"}> : () -> ()
    %cst_37 = arith.constant dense<0.000000e+00> : vector<2x8x8xf32>
    %91 = tpu.matmul %88, %89, %cst_37 {dimension_numbers = #tpu.dot_dimension_numbers<[2], [2], [1], [1], [0, 0, 0, 1, 1, 1], [0], [0]>} : vector<2x8x8xf32>, vector<2x8x8xf32>, vector<2x8x8xf32> -> vector<2x8x8xf32>
    "tpu.trace_stop"() : () -> ()
    %cst_38 = arith.constant dense<0xFF800000> : vector<2x8xf32>
    %92 = vector.multi_reduction <maximumf>, %91, %cst_38 [2] : vector<2x8x8xf32> to vector<2x8xf32>
    %93 = vector.shape_cast %92 : vector<2x8xf32> to vector<2x8x1xf32>
    %94 = vector.broadcast %93 : vector<2x8x1xf32> to vector<2x8x8xf32>
    %95 = arith.subf %91, %94 : vector<2x8x8xf32>
    %96 = math.exp %95 : vector<2x8x8xf32>
    %cst_39 = arith.constant dense<0.000000e+00> : vector<2x8xf32>
    %97 = vector.multi_reduction <add>, %96, %cst_39 [2] : vector<2x8x8xf32> to vector<2x8xf32>
    %98 = vector.shape_cast %97 : vector<2x8xf32> to vector<2x8x1xf32>
    %99 = tpu.reciprocal %98 {approx = true} : vector<2x8x1xf32> -> vector<2x8x1xf32>
    %100 = vector.broadcast %99 : vector<2x8x1xf32> to vector<2x8x8xf32>
    %101 = arith.mulf %96, %100 : vector<2x8x8xf32>
    "tpu.trace_start"() <{level = 10 : i32, message = "bqk,bkd->bqd"}> : () -> ()
    %cst_40 = arith.constant dense<0.000000e+00> : vector<2x8x8xf32>
    %102 = tpu.matmul %101, %90, %cst_40 {dimension_numbers = #tpu.dot_dimension_numbers<[2], [1], [1], [2], [0, 0, 0, 1, 1, 2], [0], [0]>} : vector<2x8x8xf32>, vector<2x8x8xf32>, vector<2x8x8xf32> -> vector<2x8x8xf32>
    "tpu.trace_stop"() : () -> ()
    %103 = vector.shape_cast %102 : vector<2x8x8xf32> to vector<16x8xf32>
    %104 = vector.extract_strided_slice %11 {offsets = [24, 0], sizes = [8, 32], strides = [1, 1]} : vector<32x32xf32> to vector<8x32xf32>
    %cst_41 = arith.constant dense<0.000000e+00> : vector<16x32xf32>
    %105 = tpu.matmul %103, %104, %cst_41 {dimension_numbers = #tpu.dot_dimension_numbers<[1], [0], [0], [1], [0, 0, 1, 1], [], []>} : vector<16x8xf32>, vector<8x32xf32>, vector<16x32xf32> -> vector<16x32xf32>
    %106 = arith.addf %87, %105 : vector<16x32xf32>
    %107 = vector.broadcast %12 : vector<1x32xf32> to vector<16x32xf32>
    %108 = arith.addf %106, %107 : vector<16x32xf32>
    %109 = arith.addf %1, %108 : vector<16x32xf32>
    %c0_42 = arith.constant 0 : index
    %c0_43 = arith.constant 0 : index
    %110 = vector.load %arg16[%c0_42, %c0_43] : memref<1x32xf32, #tpu.memory_space<vmem>>, vector<1x32xf32>
    %c0_44 = arith.constant 0 : index
    %c0_45 = arith.constant 0 : index
    %111 = vector.load %arg17[%c0_44, %c0_45] : memref<1x32xf32, #tpu.memory_space<vmem>>, vector<1x32xf32>
    %cst_46 = arith.constant dense<0.000000e+00> : vector<16xf32>
    %112 = vector.multi_reduction <add>, %109, %cst_46 [1] : vector<16x32xf32> to vector<16xf32>
    %113 = vector.shape_cast %112 : vector<16xf32> to vector<16x1xf32>
    %cst_47 = arith.constant 3.200000e+01 : f32
    %114 = vector.broadcast %cst_47 : f32 to vector<16x1xf32>
    %115 = arith.divf %113, %114 : vector<16x1xf32>
    %116 = vector.broadcast %115 : vector<16x1xf32> to vector<16x32xf32>
    %117 = arith.subf %109, %116 : vector<16x32xf32>
    %118 = arith.mulf %117, %117 : vector<16x32xf32>
    %cst_48 = arith.constant dense<0.000000e+00> : vector<16xf32>
    %119 = vector.multi_reduction <add>, %118, %cst_48 [1] : vector<16x32xf32> to vector<16xf32>
    %120 = vector.shape_cast %119 : vector<16xf32> to vector<16x1xf32>
    %cst_49 = arith.constant 3.200000e+01 : f32
    %121 = vector.broadcast %cst_49 : f32 to vector<16x1xf32>
    %122 = arith.divf %120, %121 : vector<16x1xf32>
    %cst_50 = arith.constant 9.99999974E-6 : f32
    %123 = vector.broadcast %cst_50 : f32 to vector<16x1xf32>
    %124 = arith.addf %122, %123 : vector<16x1xf32>
    %125 = math.rsqrt %124 : vector<16x1xf32>
    %126 = vector.broadcast %125 : vector<16x1xf32> to vector<16x32xf32>
    %127 = arith.mulf %117, %126 : vector<16x32xf32>
    %128 = vector.broadcast %110 : vector<1x32xf32> to vector<16x32xf32>
    %129 = arith.mulf %127, %128 : vector<16x32xf32>
    %130 = vector.broadcast %111 : vector<1x32xf32> to vector<16x32xf32>
    %131 = arith.addf %129, %130 : vector<16x32xf32>
    %132 = arith.addf %131, %3 : vector<16x32xf32>
    %c0_51 = arith.constant 0 : index
    %c0_52 = arith.constant 0 : index
    %133 = vector.load %arg8[%c0_51, %c0_52] : memref<32x96xf32, #tpu.memory_space<vmem>>, vector<32x96xf32>
    %c0_53 = arith.constant 0 : index
    %c0_54 = arith.constant 0 : index
    %134 = vector.load %arg9[%c0_53, %c0_54] : memref<1x96xf32, #tpu.memory_space<vmem>>, vector<1x96xf32>
    %c0_55 = arith.constant 0 : index
    %c0_56 = arith.constant 0 : index
    %135 = vector.load %arg10[%c0_55, %c0_56] : memref<32x32xf32, #tpu.memory_space<vmem>>, vector<32x32xf32>
    %c0_57 = arith.constant 0 : index
    %c0_58 = arith.constant 0 : index
    %136 = vector.load %arg11[%c0_57, %c0_58] : memref<1x32xf32, #tpu.memory_space<vmem>>, vector<1x32xf32>
    %137 = vector.extract_strided_slice %133 {offsets = [0, 0], sizes = [32, 32], strides = [1, 1]} : vector<32x96xf32> to vector<32x32xf32>
    %cst_59 = arith.constant dense<0.000000e+00> : vector<16x32xf32>
    %138 = tpu.matmul %132, %137, %cst_59 {dimension_numbers = #tpu.dot_dimension_numbers<[1], [0], [0], [1], [0, 0, 1, 1], [], []>} : vector<16x32xf32>, vector<32x32xf32>, vector<16x32xf32> -> vector<16x32xf32>
    %139 = vector.extract_strided_slice %134 {offsets = [0, 0], sizes = [1, 32], strides = [1, 1]} : vector<1x96xf32> to vector<1x32xf32>
    %140 = vector.broadcast %139 : vector<1x32xf32> to vector<16x32xf32>
    %141 = arith.addf %138, %140 : vector<16x32xf32>
    %142 = vector.extract_strided_slice %133 {offsets = [0, 32], sizes = [32, 32], strides = [1, 1]} : vector<32x96xf32> to vector<32x32xf32>
    %cst_60 = arith.constant dense<0.000000e+00> : vector<32x32xf32>
    %143 = tpu.matmul %7, %142, %cst_60 {dimension_numbers = #tpu.dot_dimension_numbers<[1], [0], [0], [1], [0, 0, 1, 1], [], []>} : vector<32x32xf32>, vector<32x32xf32>, vector<32x32xf32> -> vector<32x32xf32>
    %144 = vector.extract_strided_slice %134 {offsets = [0, 32], sizes = [1, 32], strides = [1, 1]} : vector<1x96xf32> to vector<1x32xf32>
    %145 = vector.broadcast %144 : vector<1x32xf32> to vector<32x32xf32>
    %146 = arith.addf %143, %145 : vector<32x32xf32>
    %147 = vector.extract_strided_slice %133 {offsets = [0, 64], sizes = [32, 32], strides = [1, 1]} : vector<32x96xf32> to vector<32x32xf32>
    %cst_61 = arith.constant dense<0.000000e+00> : vector<32x32xf32>
    %148 = tpu.matmul %5, %147, %cst_61 {dimension_numbers = #tpu.dot_dimension_numbers<[1], [0], [0], [1], [0, 0, 1, 1], [], []>} : vector<32x32xf32>, vector<32x32xf32>, vector<32x32xf32> -> vector<32x32xf32>
    %149 = vector.extract_strided_slice %134 {offsets = [0, 64], sizes = [1, 32], strides = [1, 1]} : vector<1x96xf32> to vector<1x32xf32>
    %150 = vector.broadcast %149 : vector<1x32xf32> to vector<32x32xf32>
    %151 = arith.addf %148, %150 : vector<32x32xf32>
    %cst_62 = arith.constant 0.353553385 : f32
    %152 = vector.broadcast %cst_62 : f32 to vector<16x32xf32>
    %153 = arith.mulf %141, %152 : vector<16x32xf32>
    %154 = vector.shape_cast %153 : vector<16x32xf32> to vector<2x8x32xf32>
    %155 = vector.shape_cast %146 : vector<32x32xf32> to vector<2x16x32xf32>
    %156 = vector.shape_cast %151 : vector<32x32xf32> to vector<2x16x32xf32>
    %cst_63 = arith.constant 0.000000e+00 : f32
    %157 = vector.broadcast %cst_63 : f32 to vector<16x32xf32>
    %158 = vector.extract_strided_slice %154 {offsets = [0, 0, 0], sizes = [2, 8, 8], strides = [1, 1, 1]} : vector<2x8x32xf32> to vector<2x8x8xf32>
    %159 = vector.extract_strided_slice %155 {offsets = [0, 0, 0], sizes = [2, 16, 8], strides = [1, 1, 1]} : vector<2x16x32xf32> to vector<2x16x8xf32>
    %160 = vector.extract_strided_slice %156 {offsets = [0, 0, 0], sizes = [2, 16, 8], strides = [1, 1, 1]} : vector<2x16x32xf32> to vector<2x16x8xf32>
    "tpu.trace_start"() <{level = 10 : i32, message = "bqd,bkd->bqk"}> : () -> ()
    %cst_64 = arith.constant dense<0.000000e+00> : vector<2x8x16xf32>
    %161 = tpu.matmul %158, %159, %cst_64 {dimension_numbers = #tpu.dot_dimension_numbers<[2], [2], [1], [1], [0, 0, 0, 1, 1, 1], [0], [0]>} : vector<2x8x8xf32>, vector<2x16x8xf32>, vector<2x8x16xf32> -> vector<2x8x16xf32>
    "tpu.trace_stop"() : () -> ()
    %cst_65 = arith.constant dense<0xFF800000> : vector<2x8xf32>
    %162 = vector.multi_reduction <maximumf>, %161, %cst_65 [2] : vector<2x8x16xf32> to vector<2x8xf32>
    %163 = vector.shape_cast %162 : vector<2x8xf32> to vector<2x8x1xf32>
    %164 = vector.broadcast %163 : vector<2x8x1xf32> to vector<2x8x16xf32>
    %165 = arith.subf %161, %164 : vector<2x8x16xf32>
    %166 = math.exp %165 : vector<2x8x16xf32>
    %cst_66 = arith.constant dense<0.000000e+00> : vector<2x8xf32>
    %167 = vector.multi_reduction <add>, %166, %cst_66 [2] : vector<2x8x16xf32> to vector<2x8xf32>
    %168 = vector.shape_cast %167 : vector<2x8xf32> to vector<2x8x1xf32>
    %169 = tpu.reciprocal %168 {approx = true} : vector<2x8x1xf32> -> vector<2x8x1xf32>
    %170 = vector.broadcast %169 : vector<2x8x1xf32> to vector<2x8x16xf32>
    %171 = arith.mulf %166, %170 : vector<2x8x16xf32>
    "tpu.trace_start"() <{level = 10 : i32, message = "bqk,bkd->bqd"}> : () -> ()
    %cst_67 = arith.constant dense<0.000000e+00> : vector<2x8x8xf32>
    %172 = tpu.matmul %171, %160, %cst_67 {dimension_numbers = #tpu.dot_dimension_numbers<[2], [1], [1], [2], [0, 0, 0, 1, 1, 2], [0], [0]>} : vector<2x8x16xf32>, vector<2x16x8xf32>, vector<2x8x8xf32> -> vector<2x8x8xf32>
    "tpu.trace_stop"() : () -> ()
    %173 = vector.shape_cast %172 : vector<2x8x8xf32> to vector<16x8xf32>
    %174 = vector.extract_strided_slice %135 {offsets = [0, 0], sizes = [8, 32], strides = [1, 1]} : vector<32x32xf32> to vector<8x32xf32>
    %cst_68 = arith.constant dense<0.000000e+00> : vector<16x32xf32>
    %175 = tpu.matmul %173, %174, %cst_68 {dimension_numbers = #tpu.dot_dimension_numbers<[1], [0], [0], [1], [0, 0, 1, 1], [], []>} : vector<16x8xf32>, vector<8x32xf32>, vector<16x32xf32> -> vector<16x32xf32>
    %176 = arith.addf %157, %175 : vector<16x32xf32>
    %177 = vector.extract_strided_slice %154 {offsets = [0, 0, 8], sizes = [2, 8, 8], strides = [1, 1, 1]} : vector<2x8x32xf32> to vector<2x8x8xf32>
    %178 = vector.extract_strided_slice %155 {offsets = [0, 0, 8], sizes = [2, 16, 8], strides = [1, 1, 1]} : vector<2x16x32xf32> to vector<2x16x8xf32>
    %179 = vector.extract_strided_slice %156 {offsets = [0, 0, 8], sizes = [2, 16, 8], strides = [1, 1, 1]} : vector<2x16x32xf32> to vector<2x16x8xf32>
    "tpu.trace_start"() <{level = 10 : i32, message = "bqd,bkd->bqk"}> : () -> ()
    %cst_69 = arith.constant dense<0.000000e+00> : vector<2x8x16xf32>
    %180 = tpu.matmul %177, %178, %cst_69 {dimension_numbers = #tpu.dot_dimension_numbers<[2], [2], [1], [1], [0, 0, 0, 1, 1, 1], [0], [0]>} : vector<2x8x8xf32>, vector<2x16x8xf32>, vector<2x8x16xf32> -> vector<2x8x16xf32>
    "tpu.trace_stop"() : () -> ()
    %cst_70 = arith.constant dense<0xFF800000> : vector<2x8xf32>
    %181 = vector.multi_reduction <maximumf>, %180, %cst_70 [2] : vector<2x8x16xf32> to vector<2x8xf32>
    %182 = vector.shape_cast %181 : vector<2x8xf32> to vector<2x8x1xf32>
    %183 = vector.broadcast %182 : vector<2x8x1xf32> to vector<2x8x16xf32>
    %184 = arith.subf %180, %183 : vector<2x8x16xf32>
    %185 = math.exp %184 : vector<2x8x16xf32>
    %cst_71 = arith.constant dense<0.000000e+00> : vector<2x8xf32>
    %186 = vector.multi_reduction <add>, %185, %cst_71 [2] : vector<2x8x16xf32> to vector<2x8xf32>
    %187 = vector.shape_cast %186 : vector<2x8xf32> to vector<2x8x1xf32>
    %188 = tpu.reciprocal %187 {approx = true} : vector<2x8x1xf32> -> vector<2x8x1xf32>
    %189 = vector.broadcast %188 : vector<2x8x1xf32> to vector<2x8x16xf32>
    %190 = arith.mulf %185, %189 : vector<2x8x16xf32>
    "tpu.trace_start"() <{level = 10 : i32, message = "bqk,bkd->bqd"}> : () -> ()
    %cst_72 = arith.constant dense<0.000000e+00> : vector<2x8x8xf32>
    %191 = tpu.matmul %190, %179, %cst_72 {dimension_numbers = #tpu.dot_dimension_numbers<[2], [1], [1], [2], [0, 0, 0, 1, 1, 2], [0], [0]>} : vector<2x8x16xf32>, vector<2x16x8xf32>, vector<2x8x8xf32> -> vector<2x8x8xf32>
    "tpu.trace_stop"() : () -> ()
    %192 = vector.shape_cast %191 : vector<2x8x8xf32> to vector<16x8xf32>
    %193 = vector.extract_strided_slice %135 {offsets = [8, 0], sizes = [8, 32], strides = [1, 1]} : vector<32x32xf32> to vector<8x32xf32>
    %cst_73 = arith.constant dense<0.000000e+00> : vector<16x32xf32>
    %194 = tpu.matmul %192, %193, %cst_73 {dimension_numbers = #tpu.dot_dimension_numbers<[1], [0], [0], [1], [0, 0, 1, 1], [], []>} : vector<16x8xf32>, vector<8x32xf32>, vector<16x32xf32> -> vector<16x32xf32>
    %195 = arith.addf %176, %194 : vector<16x32xf32>
    %196 = vector.extract_strided_slice %154 {offsets = [0, 0, 16], sizes = [2, 8, 8], strides = [1, 1, 1]} : vector<2x8x32xf32> to vector<2x8x8xf32>
    %197 = vector.extract_strided_slice %155 {offsets = [0, 0, 16], sizes = [2, 16, 8], strides = [1, 1, 1]} : vector<2x16x32xf32> to vector<2x16x8xf32>
    %198 = vector.extract_strided_slice %156 {offsets = [0, 0, 16], sizes = [2, 16, 8], strides = [1, 1, 1]} : vector<2x16x32xf32> to vector<2x16x8xf32>
    "tpu.trace_start"() <{level = 10 : i32, message = "bqd,bkd->bqk"}> : () -> ()
    %cst_74 = arith.constant dense<0.000000e+00> : vector<2x8x16xf32>
    %199 = tpu.matmul %196, %197, %cst_74 {dimension_numbers = #tpu.dot_dimension_numbers<[2], [2], [1], [1], [0, 0, 0, 1, 1, 1], [0], [0]>} : vector<2x8x8xf32>, vector<2x16x8xf32>, vector<2x8x16xf32> -> vector<2x8x16xf32>
    "tpu.trace_stop"() : () -> ()
    %cst_75 = arith.constant dense<0xFF800000> : vector<2x8xf32>
    %200 = vector.multi_reduction <maximumf>, %199, %cst_75 [2] : vector<2x8x16xf32> to vector<2x8xf32>
    %201 = vector.shape_cast %200 : vector<2x8xf32> to vector<2x8x1xf32>
    %202 = vector.broadcast %201 : vector<2x8x1xf32> to vector<2x8x16xf32>
    %203 = arith.subf %199, %202 : vector<2x8x16xf32>
    %204 = math.exp %203 : vector<2x8x16xf32>
    %cst_76 = arith.constant dense<0.000000e+00> : vector<2x8xf32>
    %205 = vector.multi_reduction <add>, %204, %cst_76 [2] : vector<2x8x16xf32> to vector<2x8xf32>
    %206 = vector.shape_cast %205 : vector<2x8xf32> to vector<2x8x1xf32>
    %207 = tpu.reciprocal %206 {approx = true} : vector<2x8x1xf32> -> vector<2x8x1xf32>
    %208 = vector.broadcast %207 : vector<2x8x1xf32> to vector<2x8x16xf32>
    %209 = arith.mulf %204, %208 : vector<2x8x16xf32>
    "tpu.trace_start"() <{level = 10 : i32, message = "bqk,bkd->bqd"}> : () -> ()
    %cst_77 = arith.constant dense<0.000000e+00> : vector<2x8x8xf32>
    %210 = tpu.matmul %209, %198, %cst_77 {dimension_numbers = #tpu.dot_dimension_numbers<[2], [1], [1], [2], [0, 0, 0, 1, 1, 2], [0], [0]>} : vector<2x8x16xf32>, vector<2x16x8xf32>, vector<2x8x8xf32> -> vector<2x8x8xf32>
    "tpu.trace_stop"() : () -> ()
    %211 = vector.shape_cast %210 : vector<2x8x8xf32> to vector<16x8xf32>
    %212 = vector.extract_strided_slice %135 {offsets = [16, 0], sizes = [8, 32], strides = [1, 1]} : vector<32x32xf32> to vector<8x32xf32>
    %cst_78 = arith.constant dense<0.000000e+00> : vector<16x32xf32>
    %213 = tpu.matmul %211, %212, %cst_78 {dimension_numbers = #tpu.dot_dimension_numbers<[1], [0], [0], [1], [0, 0, 1, 1], [], []>} : vector<16x8xf32>, vector<8x32xf32>, vector<16x32xf32> -> vector<16x32xf32>
    %214 = arith.addf %195, %213 : vector<16x32xf32>
    %215 = vector.extract_strided_slice %154 {offsets = [0, 0, 24], sizes = [2, 8, 8], strides = [1, 1, 1]} : vector<2x8x32xf32> to vector<2x8x8xf32>
    %216 = vector.extract_strided_slice %155 {offsets = [0, 0, 24], sizes = [2, 16, 8], strides = [1, 1, 1]} : vector<2x16x32xf32> to vector<2x16x8xf32>
    %217 = vector.extract_strided_slice %156 {offsets = [0, 0, 24], sizes = [2, 16, 8], strides = [1, 1, 1]} : vector<2x16x32xf32> to vector<2x16x8xf32>
    "tpu.trace_start"() <{level = 10 : i32, message = "bqd,bkd->bqk"}> : () -> ()
    %cst_79 = arith.constant dense<0.000000e+00> : vector<2x8x16xf32>
    %218 = tpu.matmul %215, %216, %cst_79 {dimension_numbers = #tpu.dot_dimension_numbers<[2], [2], [1], [1], [0, 0, 0, 1, 1, 1], [0], [0]>} : vector<2x8x8xf32>, vector<2x16x8xf32>, vector<2x8x16xf32> -> vector<2x8x16xf32>
    "tpu.trace_stop"() : () -> ()
    %cst_80 = arith.constant dense<0xFF800000> : vector<2x8xf32>
    %219 = vector.multi_reduction <maximumf>, %218, %cst_80 [2] : vector<2x8x16xf32> to vector<2x8xf32>
    %220 = vector.shape_cast %219 : vector<2x8xf32> to vector<2x8x1xf32>
    %221 = vector.broadcast %220 : vector<2x8x1xf32> to vector<2x8x16xf32>
    %222 = arith.subf %218, %221 : vector<2x8x16xf32>
    %223 = math.exp %222 : vector<2x8x16xf32>
    %cst_81 = arith.constant dense<0.000000e+00> : vector<2x8xf32>
    %224 = vector.multi_reduction <add>, %223, %cst_81 [2] : vector<2x8x16xf32> to vector<2x8xf32>
    %225 = vector.shape_cast %224 : vector<2x8xf32> to vector<2x8x1xf32>
    %226 = tpu.reciprocal %225 {approx = true} : vector<2x8x1xf32> -> vector<2x8x1xf32>
    %227 = vector.broadcast %226 : vector<2x8x1xf32> to vector<2x8x16xf32>
    %228 = arith.mulf %223, %227 : vector<2x8x16xf32>
    "tpu.trace_start"() <{level = 10 : i32, message = "bqk,bkd->bqd"}> : () -> ()
    %cst_82 = arith.constant dense<0.000000e+00> : vector<2x8x8xf32>
    %229 = tpu.matmul %228, %217, %cst_82 {dimension_numbers = #tpu.dot_dimension_numbers<[2], [1], [1], [2], [0, 0, 0, 1, 1, 2], [0], [0]>} : vector<2x8x16xf32>, vector<2x16x8xf32>, vector<2x8x8xf32> -> vector<2x8x8xf32>
    "tpu.trace_stop"() : () -> ()
    %230 = vector.shape_cast %229 : vector<2x8x8xf32> to vector<16x8xf32>
    %231 = vector.extract_strided_slice %135 {offsets = [24, 0], sizes = [8, 32], strides = [1, 1]} : vector<32x32xf32> to vector<8x32xf32>
    %cst_83 = arith.constant dense<0.000000e+00> : vector<16x32xf32>
    %232 = tpu.matmul %230, %231, %cst_83 {dimension_numbers = #tpu.dot_dimension_numbers<[1], [0], [0], [1], [0, 0, 1, 1], [], []>} : vector<16x8xf32>, vector<8x32xf32>, vector<16x32xf32> -> vector<16x32xf32>
    %233 = arith.addf %214, %232 : vector<16x32xf32>
    %234 = vector.broadcast %136 : vector<1x32xf32> to vector<16x32xf32>
    %235 = arith.addf %233, %234 : vector<16x32xf32>
    %236 = arith.addf %131, %235 : vector<16x32xf32>
    %c0_84 = arith.constant 0 : index
    %c0_85 = arith.constant 0 : index
    %237 = vector.load %arg18[%c0_84, %c0_85] : memref<1x32xf32, #tpu.memory_space<vmem>>, vector<1x32xf32>
    %c0_86 = arith.constant 0 : index
    %c0_87 = arith.constant 0 : index
    %238 = vector.load %arg19[%c0_86, %c0_87] : memref<1x32xf32, #tpu.memory_space<vmem>>, vector<1x32xf32>
    %cst_88 = arith.constant dense<0.000000e+00> : vector<16xf32>
    %239 = vector.multi_reduction <add>, %236, %cst_88 [1] : vector<16x32xf32> to vector<16xf32>
    %240 = vector.shape_cast %239 : vector<16xf32> to vector<16x1xf32>
    %cst_89 = arith.constant 3.200000e+01 : f32
    %241 = vector.broadcast %cst_89 : f32 to vector<16x1xf32>
    %242 = arith.divf %240, %241 : vector<16x1xf32>
    %243 = vector.broadcast %242 : vector<16x1xf32> to vector<16x32xf32>
    %244 = arith.subf %236, %243 : vector<16x32xf32>
    %245 = arith.mulf %244, %244 : vector<16x32xf32>
    %cst_90 = arith.constant dense<0.000000e+00> : vector<16xf32>
    %246 = vector.multi_reduction <add>, %245, %cst_90 [1] : vector<16x32xf32> to vector<16xf32>
    %247 = vector.shape_cast %246 : vector<16xf32> to vector<16x1xf32>
    %cst_91 = arith.constant 3.200000e+01 : f32
    %248 = vector.broadcast %cst_91 : f32 to vector<16x1xf32>
    %249 = arith.divf %247, %248 : vector<16x1xf32>
    %cst_92 = arith.constant 9.99999974E-6 : f32
    %250 = vector.broadcast %cst_92 : f32 to vector<16x1xf32>
    %251 = arith.addf %249, %250 : vector<16x1xf32>
    %252 = math.rsqrt %251 : vector<16x1xf32>
    %253 = vector.broadcast %252 : vector<16x1xf32> to vector<16x32xf32>
    %254 = arith.mulf %244, %253 : vector<16x32xf32>
    %255 = vector.broadcast %237 : vector<1x32xf32> to vector<16x32xf32>
    %256 = arith.mulf %254, %255 : vector<16x32xf32>
    %257 = vector.broadcast %238 : vector<1x32xf32> to vector<16x32xf32>
    %258 = arith.addf %256, %257 : vector<16x32xf32>
    %c0_93 = arith.constant 0 : index
    %c0_94 = arith.constant 0 : index
    %259 = vector.load %arg12[%c0_93, %c0_94] : memref<32x64xf32, #tpu.memory_space<vmem>>, vector<32x64xf32>
    %cst_95 = arith.constant dense<0.000000e+00> : vector<16x64xf32>
    %260 = tpu.matmul %258, %259, %cst_95 {dimension_numbers = #tpu.dot_dimension_numbers<[1], [0], [0], [1], [0, 0, 1, 1], [], []>} : vector<16x32xf32>, vector<32x64xf32>, vector<16x64xf32> -> vector<16x64xf32>
    %c0_96 = arith.constant 0 : index
    %c0_97 = arith.constant 0 : index
    %261 = vector.load %arg13[%c0_96, %c0_97] : memref<1x64xf32, #tpu.memory_space<vmem>>, vector<1x64xf32>
    %262 = vector.broadcast %261 : vector<1x64xf32> to vector<16x64xf32>
    %263 = arith.addf %260, %262 : vector<16x64xf32>
    %cst_98 = arith.constant 0.000000e+00 : f32
    %264 = vector.broadcast %cst_98 : f32 to vector<16x64xf32>
    %265 = arith.maximumf %263, %264 : vector<16x64xf32>
    %c0_99 = arith.constant 0 : index
    %c0_100 = arith.constant 0 : index
    %266 = vector.load %arg14[%c0_99, %c0_100] : memref<64x32xf32, #tpu.memory_space<vmem>>, vector<64x32xf32>
    %cst_101 = arith.constant dense<0.000000e+00> : vector<16x32xf32>
    %267 = tpu.matmul %265, %266, %cst_101 {dimension_numbers = #tpu.dot_dimension_numbers<[1], [0], [0], [1], [0, 0, 1, 1], [], []>} : vector<16x64xf32>, vector<64x32xf32>, vector<16x32xf32> -> vector<16x32xf32>
    %c0_102 = arith.constant 0 : index
    %c0_103 = arith.constant 0 : index
    %268 = vector.load %arg15[%c0_102, %c0_103] : memref<1x32xf32, #tpu.memory_space<vmem>>, vector<1x32xf32>
    %269 = vector.broadcast %268 : vector<1x32xf32> to vector<16x32xf32>
    %270 = arith.addf %267, %269 : vector<16x32xf32>
    %271 = arith.addf %258, %270 : vector<16x32xf32>
    %c0_104 = arith.constant 0 : index
    %c0_105 = arith.constant 0 : index
    %272 = vector.load %arg20[%c0_104, %c0_105] : memref<1x32xf32, #tpu.memory_space<vmem>>, vector<1x32xf32>
    %c0_106 = arith.constant 0 : index
    %c0_107 = arith.constant 0 : index
    %273 = vector.load %arg21[%c0_106, %c0_107] : memref<1x32xf32, #tpu.memory_space<vmem>>, vector<1x32xf32>
    %cst_108 = arith.constant dense<0.000000e+00> : vector<16xf32>
    %274 = vector.multi_reduction <add>, %271, %cst_108 [1] : vector<16x32xf32> to vector<16xf32>
    %275 = vector.shape_cast %274 : vector<16xf32> to vector<16x1xf32>
    %cst_109 = arith.constant 3.200000e+01 : f32
    %276 = vector.broadcast %cst_109 : f32 to vector<16x1xf32>
    %277 = arith.divf %275, %276 : vector<16x1xf32>
    %278 = vector.broadcast %277 : vector<16x1xf32> to vector<16x32xf32>
    %279 = arith.subf %271, %278 : vector<16x32xf32>
    %280 = arith.mulf %279, %279 : vector<16x32xf32>
    %cst_110 = arith.constant dense<0.000000e+00> : vector<16xf32>
    %281 = vector.multi_reduction <add>, %280, %cst_110 [1] : vector<16x32xf32> to vector<16xf32>
    %282 = vector.shape_cast %281 : vector<16xf32> to vector<16x1xf32>
    %cst_111 = arith.constant 3.200000e+01 : f32
    %283 = vector.broadcast %cst_111 : f32 to vector<16x1xf32>
    %284 = arith.divf %282, %283 : vector<16x1xf32>
    %cst_112 = arith.constant 9.99999974E-6 : f32
    %285 = vector.broadcast %cst_112 : f32 to vector<16x1xf32>
    %286 = arith.addf %284, %285 : vector<16x1xf32>
    %287 = math.rsqrt %286 : vector<16x1xf32>
    %288 = vector.broadcast %287 : vector<16x1xf32> to vector<16x32xf32>
    %289 = arith.mulf %279, %288 : vector<16x32xf32>
    %290 = vector.broadcast %272 : vector<1x32xf32> to vector<16x32xf32>
    %291 = arith.mulf %289, %290 : vector<16x32xf32>
    %292 = vector.broadcast %273 : vector<1x32xf32> to vector<16x32xf32>
    %293 = arith.addf %291, %292 : vector<16x32xf32>
    %294 = vector.shape_cast %293 : vector<16x32xf32> to vector<2x8x32xf32>
    %c0_113 = arith.constant 0 : index
    %c0_114 = arith.constant 0 : index
    %c0_115 = arith.constant 0 : index
    %295 = vector.load %arg22[%c0_113, %c0_114, %c0_115] : memref<2x8x32xf32, #tpu.memory_space<vmem>>, vector<2x8x32xf32>
    tpu.vector_store %arg22[%c0_113, %c0_114, %c0_115], %294 {strides = array<i32>} : memref<2x8x32xf32, #tpu.memory_space<vmem>>, vector<2x8x32xf32>,
    return
  }
}

module attributes {stable_mosaic.version = 11 : i64} {
  func.func @_layernorm_kernel(%arg0: memref<16x32xf32, #tpu.memory_space<vmem>>, %arg1: memref<1x32xf32, #tpu.memory_space<vmem>>, %arg2: memref<1x32xf32, #tpu.memory_space<vmem>>, %arg3: memref<16x32xf32, #tpu.memory_space<vmem>>) attributes {dimension_semantics = [], scalar_prefetch = 0 : i64, scratch_operands = 0 : i64, tpu.core_type = #tpu.core_type<tc>} {
    %c0 = arith.constant 0 : index
    %c0_0 = arith.constant 0 : index
    %0 = vector.load %arg0[%c0, %c0_0] : memref<16x32xf32, #tpu.memory_space<vmem>>, vector<16x32xf32>
    %c0_1 = arith.constant 0 : index
    %c0_2 = arith.constant 0 : index
    %1 = vector.load %arg1[%c0_1, %c0_2] : memref<1x32xf32, #tpu.memory_space<vmem>>, vector<1x32xf32>
    %c0_3 = arith.constant 0 : index
    %c0_4 = arith.constant 0 : index
    %2 = vector.load %arg2[%c0_3, %c0_4] : memref<1x32xf32, #tpu.memory_space<vmem>>, vector<1x32xf32>
    %cst = arith.constant dense<0.000000e+00> : vector<16xf32>
    %3 = vector.multi_reduction <add>, %0, %cst [1] : vector<16x32xf32> to vector<16xf32>
    %4 = vector.shape_cast %3 : vector<16xf32> to vector<16x1xf32>
    %cst_5 = arith.constant 3.200000e+01 : f32
    %5 = vector.broadcast %cst_5 : f32 to vector<16x1xf32>
    %6 = arith.divf %4, %5 : vector<16x1xf32>
    %7 = vector.broadcast %6 : vector<16x1xf32> to vector<16x32xf32>
    %8 = arith.subf %0, %7 : vector<16x32xf32>
    %9 = arith.mulf %8, %8 : vector<16x32xf32>
    %cst_6 = arith.constant dense<0.000000e+00> : vector<16xf32>
    %10 = vector.multi_reduction <add>, %9, %cst_6 [1] : vector<16x32xf32> to vector<16xf32>
    %11 = vector.shape_cast %10 : vector<16xf32> to vector<16x1xf32>
    %cst_7 = arith.constant 3.200000e+01 : f32
    %12 = vector.broadcast %cst_7 : f32 to vector<16x1xf32>
    %13 = arith.divf %11, %12 : vector<16x1xf32>
    %cst_8 = arith.constant 9.99999974E-6 : f32
    %14 = vector.broadcast %cst_8 : f32 to vector<16x1xf32>
    %15 = arith.addf %13, %14 : vector<16x1xf32>
    %16 = math.rsqrt %15 : vector<16x1xf32>
    %17 = vector.broadcast %16 : vector<16x1xf32> to vector<16x32xf32>
    %18 = arith.mulf %8, %17 : vector<16x32xf32>
    %19 = vector.broadcast %1 : vector<1x32xf32> to vector<16x32xf32>
    %20 = arith.mulf %18, %19 : vector<16x32xf32>
    %21 = vector.broadcast %2 : vector<1x32xf32> to vector<16x32xf32>
    %22 = arith.addf %20, %21 : vector<16x32xf32>
    %c0_9 = arith.constant 0 : index
    %c0_10 = arith.constant 0 : index
    %23 = vector.load %arg3[%c0_9, %c0_10] : memref<16x32xf32, #tpu.memory_space<vmem>>, vector<16x32xf32>
    tpu.vector_store %arg3[%c0_9, %c0_10], %22 {strides = array<i32>} : memref<16x32xf32, #tpu.memory_space<vmem>>, vector<16x32xf32>,
    return
  }
}

module attributes {stable_mosaic.version = 11 : i64} {
  func.func @_decoder_layer_kernel(%arg0: memref<2x8x32xf32, #tpu.memory_space<vmem>>, %arg1: memref<2x16x32xf32, #tpu.memory_space<vmem>>, %arg2: memref<2x16x32xf32, #tpu.memory_space<vmem>>, %arg3: memref<2x8x32xf32, #tpu.memory_space<vmem>>, %arg4: memref<32x96xf32, #tpu.memory_space<vmem>>, %arg5: memref<1x96xf32, #tpu.memory_space<vmem>>, %arg6: memref<32x32xf32, #tpu.memory_space<vmem>>, %arg7: memref<1x32xf32, #tpu.memory_space<vmem>>, %arg8: memref<32x96xf32, #tpu.memory_space<vmem>>, %arg9: memref<1x96xf32, #tpu.memory_space<vmem>>, %arg10: memref<32x32xf32, #tpu.memory_space<vmem>>, %arg11: memref<1x32xf32, #tpu.memory_space<vmem>>, %arg12: memref<32x64xf32, #tpu.memory_space<vmem>>, %arg13: memref<1x64xf32, #tpu.memory_space<vmem>>, %arg14: memref<64x32xf32, #tpu.memory_space<vmem>>, %arg15: memref<1x32xf32, #tpu.memory_space<vmem>>, %arg16: memref<1x32xf32, #tpu.memory_space<vmem>>, %arg17: memref<1x32xf32, #tpu.memory_space<vmem>>, %arg18: memref<1x32xf32, #tpu.memory_space<vmem>>, %arg19: memref<1x32xf32, #tpu.memory_space<vmem>>, %arg20: memref<1x32xf32, #tpu.memory_space<vmem>>, %arg21: memref<1x32xf32, #tpu.memory_space<vmem>>, %arg22: memref<2x8x32xf32, #tpu.memory_space<vmem>>, %arg23: memref<2x8x16xf32, #tpu.memory_space<vmem>>) attributes {dimension_semantics = [], scalar_prefetch = 0 : i64, scratch_operands = 0 : i64, tpu.core_type = #tpu.core_type<tc>} {
    %c0 = arith.constant 0 : index
    %c0_0 = arith.constant 0 : index
    %c0_1 = arith.constant 0 : index
    %0 = vector.load %arg0[%c0, %c0_0, %c0_1] : memref<2x8x32xf32, #tpu.memory_space<vmem>>, vector<2x8x32xf32>
    %1 = vector.shape_cast %0 : vector<2x8x32xf32> to vector<16x32xf32>
    %c0_2 = arith.constant 0 : index
    %c0_3 = arith.constant 0 : index
    %c0_4 = arith.constant 0 : index
    %2 = vector.load %arg3[%c0_2, %c0_3, %c0_4] : memref<2x8x32xf32, #tpu.memory_space<vmem>>, vector<2x8x32xf32>
    %3 = vector.shape_cast %2 : vector<2x8x32xf32> to vector<16x32xf32>
    %c0_5 = arith.constant 0 : index
    %c0_6 = arith.constant 0 : index
    %c0_7 = arith.constant 0 : index
    %4 = vector.load %arg1[%c0_5, %c0_6, %c0_7] : memref<2x16x32xf32, #tpu.memory_space<vmem>>, vector<2x16x32xf32>
    %5 = vector.shape_cast %4 : vector<2x16x32xf32> to vector<32x32xf32>
    %c0_8 = arith.constant 0 : index
    %c0_9 = arith.constant 0 : index
    %c0_10 = arith.constant 0 : index
    %6 = vector.load %arg2[%c0_8, %c0_9, %c0_10] : memref<2x16x32xf32, #tpu.memory_space<vmem>>, vector<2x16x32xf32>
    %7 = vector.shape_cast %6 : vector<2x16x32xf32> to vector<32x32xf32>
    %8 = arith.addf %1, %3 : vector<16x32xf32>
    %c0_11 = arith.constant 0 : index
    %c0_12 = arith.constant 0 : index
    %9 = vector.load %arg4[%c0_11, %c0_12] : memref<32x96xf32, #tpu.memory_space<vmem>>, vector<32x96xf32>
    %c0_13 = arith.constant 0 : index
    %c0_14 = arith.constant 0 : index
    %10 = vector.load %arg5[%c0_13, %c0_14] : memref<1x96xf32, #tpu.memory_space<vmem>>, vector<1x96xf32>
    %c0_15 = arith.constant 0 : index
    %c0_16 = arith.constant 0 : index
    %11 = vector.load %arg6[%c0_15, %c0_16] : memref<32x32xf32, #tpu.memory_space<vmem>>, vector<32x32xf32>
    %c0_17 = arith.constant 0 : index
    %c0_18 = arith.constant 0 : index
    %12 = vector.load %arg7[%c0_17, %c0_18] : memref<1x32xf32, #tpu.memory_space<vmem>>, vector<1x32xf32>
    %13 = vector.extract_strided_slice %9 {offsets = [0, 0], sizes = [32, 64], strides = [1, 1]} : vector<32x96xf32> to vector<32x64xf32>
    %cst = arith.constant dense<0.000000e+00> : vector<16x64xf32>
    %14 = tpu.matmul %8, %13, %cst {dimension_numbers = #tpu.dot_dimension_numbers<[1], [0], [0], [1], [0, 0, 1, 1], [], []>} : vector<16x32xf32>, vector<32x64xf32>, vector<16x64xf32> -> vector<16x64xf32>
    %15 = vector.extract_strided_slice %10 {offsets = [0, 0], sizes = [1, 64], strides = [1, 1]} : vector<1x96xf32> to vector<1x64xf32>
    %16 = vector.broadcast %15 : vector<1x64xf32> to vector<16x64xf32>
    %17 = arith.addf %14, %16 : vector<16x64xf32>
    %18 = vector.extract_strided_slice %17 {offsets = [0, 0], sizes = [16, 32], strides = [1, 1]} : vector<16x64xf32> to vector<16x32xf32>
    %19 = vector.extract_strided_slice %17 {offsets = [0, 32], sizes = [16, 32], strides = [1, 1]} : vector<16x64xf32> to vector<16x32xf32>
    %20 = vector.extract_strided_slice %9 {offsets = [0, 64], sizes = [32, 32], strides = [1, 1]} : vector<32x96xf32> to vector<32x32xf32>
    %cst_19 = arith.constant dense<0.000000e+00> : vector<16x32xf32>
    %21 = tpu.matmul %1, %20, %cst_19 {dimension_numbers = #tpu.dot_dimension_numbers<[1], [0], [0], [1], [0, 0, 1, 1], [], []>} : vector<16x32xf32>, vector<32x32xf32>, vector<16x32xf32> -> vector<16x32xf32>
    %22 = vector.extract_strided_slice %10 {offsets = [0, 64], sizes = [1, 32], strides = [1, 1]} : vector<1x96xf32> to vector<1x32xf32>
    %23 = vector.broadcast %22 : vector<1x32xf32> to vector<16x32xf32>
    %24 = arith.addf %21, %23 : vector<16x32xf32>
    %cst_20 = arith.constant 0.353553385 : f32
    %25 = vector.broadcast %cst_20 : f32 to vector<16x32xf32>
    %26 = arith.mulf %18, %25 : vector<16x32xf32>
    %27 = vector.shape_cast %26 : vector<16x32xf32> to vector<2x8x32xf32>
    %28 = vector.shape_cast %19 : vector<16x32xf32> to vector<2x8x32xf32>
    %29 = vector.shape_cast %24 : vector<16x32xf32> to vector<2x8x32xf32>
    %cst_21 = arith.constant 0.000000e+00 : f32
    %30 = vector.broadcast %cst_21 : f32 to vector<16x32xf32>
    %31 = vector.extract_strided_slice %27 {offsets = [0, 0, 0], sizes = [2, 8, 8], strides = [1, 1, 1]} : vector<2x8x32xf32> to vector<2x8x8xf32>
    %32 = vector.extract_strided_slice %28 {offsets = [0, 0, 0], sizes = [2, 8, 8], strides = [1, 1, 1]} : vector<2x8x32xf32> to vector<2x8x8xf32>
    %33 = vector.extract_strided_slice %29 {offsets = [0, 0, 0], sizes = [2, 8, 8], strides = [1, 1, 1]} : vector<2x8x32xf32> to vector<2x8x8xf32>
    "tpu.trace_start"() <{level = 10 : i32, message = "bqd,bkd->bqk"}> : () -> ()
    %cst_22 = arith.constant dense<0.000000e+00> : vector<2x8x8xf32>
    %34 = tpu.matmul %31, %32, %cst_22 {dimension_numbers = #tpu.dot_dimension_numbers<[2], [2], [1], [1], [0, 0, 0, 1, 1, 1], [0], [0]>} : vector<2x8x8xf32>, vector<2x8x8xf32>, vector<2x8x8xf32> -> vector<2x8x8xf32>
    "tpu.trace_stop"() : () -> ()
    %cst_23 = arith.constant dense<0xFF800000> : vector<2x8xf32>
    %35 = vector.multi_reduction <maximumf>, %34, %cst_23 [2] : vector<2x8x8xf32> to vector<2x8xf32>
    %36 = vector.shape_cast %35 : vector<2x8xf32> to vector<2x8x1xf32>
    %37 = vector.broadcast %36 : vector<2x8x1xf32> to vector<2x8x8xf32>
    %38 = arith.subf %34, %37 : vector<2x8x8xf32>
    %39 = math.exp %38 : vector<2x8x8xf32>
    %cst_24 = arith.constant dense<0.000000e+00> : vector<2x8xf32>
    %40 = vector.multi_reduction <add>, %39, %cst_24 [2] : vector<2x8x8xf32> to vector<2x8xf32>
    %41 = vector.shape_cast %40 : vector<2x8xf32> to vector<2x8x1xf32>
    %42 = tpu.reciprocal %41 {approx = true} : vector<2x8x1xf32> -> vector<2x8x1xf32>
    %43 = vector.broadcast %42 : vector<2x8x1xf32> to vector<2x8x8xf32>
    %44 = arith.mulf %39, %43 : vector<2x8x8xf32>
    "tpu.trace_start"() <{level = 10 : i32, message = "bqk,bkd->bqd"}> : () -> ()
    %cst_25 = arith.constant dense<0.000000e+00> : vector<2x8x8xf32>
    %45 = tpu.matmul %44, %33, %cst_25 {dimension_numbers = #tpu.dot_dimension_numbers<[2], [1], [1], [2], [0, 0, 0, 1, 1, 2], [0], [0]>} : vector<2x8x8xf32>, vector<2x8x8xf32>, vector<2x8x8xf32> -> vector<2x8x8xf32>
    "tpu.trace_stop"() : () -> ()
    %46 = vector.shape_cast %45 : vector<2x8x8xf32> to vector<16x8xf32>
    %47 = vector.extract_strided_slice %11 {offsets = [0, 0], sizes = [8, 32], strides = [1, 1]} : vector<32x32xf32> to vector<8x32xf32>
    %cst_26 = arith.constant dense<0.000000e+00> : vector<16x32xf32>
    %48 = tpu.matmul %46, %47, %cst_26 {dimension_numbers = #tpu.dot_dimension_numbers<[1], [0], [0], [1], [0, 0, 1, 1], [], []>} : vector<16x8xf32>, vector<8x32xf32>, vector<16x32xf32> -> vector<16x32xf32>
    %49 = arith.addf %30, %48 : vector<16x32xf32>
    %50 = vector.extract_strided_slice %27 {offsets = [0, 0, 8], sizes = [2, 8, 8], strides = [1, 1, 1]} : vector<2x8x32xf32> to vector<2x8x8xf32>
    %51 = vector.extract_strided_slice %28 {offsets = [0, 0, 8], sizes = [2, 8, 8], strides = [1, 1, 1]} : vector<2x8x32xf32> to vector<2x8x8xf32>
    %52 = vector.extract_strided_slice %29 {offsets = [0, 0, 8], sizes = [2, 8, 8], strides = [1, 1, 1]} : vector<2x8x32xf32> to vector<2x8x8xf32>
    "tpu.trace_start"() <{level = 10 : i32, message = "bqd,bkd->bqk"}> : () -> ()
    %cst_27 = arith.constant dense<0.000000e+00> : vector<2x8x8xf32>
    %53 = tpu.matmul %50, %51, %cst_27 {dimension_numbers = #tpu.dot_dimension_numbers<[2], [2], [1], [1], [0, 0, 0, 1, 1, 1], [0], [0]>} : vector<2x8x8xf32>, vector<2x8x8xf32>, vector<2x8x8xf32> -> vector<2x8x8xf32>
    "tpu.trace_stop"() : () -> ()
    %cst_28 = arith.constant dense<0xFF800000> : vector<2x8xf32>
    %54 = vector.multi_reduction <maximumf>, %53, %cst_28 [2] : vector<2x8x8xf32> to vector<2x8xf32>
    %55 = vector.shape_cast %54 : vector<2x8xf32> to vector<2x8x1xf32>
    %56 = vector.broadcast %55 : vector<2x8x1xf32> to vector<2x8x8xf32>
    %57 = arith.subf %53, %56 : vector<2x8x8xf32>
    %58 = math.exp %57 : vector<2x8x8xf32>
    %cst_29 = arith.constant dense<0.000000e+00> : vector<2x8xf32>
    %59 = vector.multi_reduction <add>, %58, %cst_29 [2] : vector<2x8x8xf32> to vector<2x8xf32>
    %60 = vector.shape_cast %59 : vector<2x8xf32> to vector<2x8x1xf32>
    %61 = tpu.reciprocal %60 {approx = true} : vector<2x8x1xf32> -> vector<2x8x1xf32>
    %62 = vector.broadcast %61 : vector<2x8x1xf32> to vector<2x8x8xf32>
    %63 = arith.mulf %58, %62 : vector<2x8x8xf32>
    "tpu.trace_start"() <{level = 10 : i32, message = "bqk,bkd->bqd"}> : () -> ()
    %cst_30 = arith.constant dense<0.000000e+00> : vector<2x8x8xf32>
    %64 = tpu.matmul %63, %52, %cst_30 {dimension_numbers = #tpu.dot_dimension_numbers<[2], [1], [1], [2], [0, 0, 0, 1, 1, 2], [0], [0]>} : vector<2x8x8xf32>, vector<2x8x8xf32>, vector<2x8x8xf32> -> vector<2x8x8xf32>
    "tpu.trace_stop"() : () -> ()
    %65 = vector.shape_cast %64 : vector<2x8x8xf32> to vector<16x8xf32>
    %66 = vector.extract_strided_slice %11 {offsets = [8, 0], sizes = [8, 32], strides = [1, 1]} : vector<32x32xf32> to vector<8x32xf32>
    %cst_31 = arith.constant dense<0.000000e+00> : vector<16x32xf32>
    %67 = tpu.matmul %65, %66, %cst_31 {dimension_numbers = #tpu.dot_dimension_numbers<[1], [0], [0], [1], [0, 0, 1, 1], [], []>} : vector<16x8xf32>, vector<8x32xf32>, vector<16x32xf32> -> vector<16x32xf32>
    %68 = arith.addf %49, %67 : vector<16x32xf32>
    %69 = vector.extract_strided_slice %27 {offsets = [0, 0, 16], sizes = [2, 8, 8], strides = [1, 1, 1]} : vector<2x8x32xf32> to vector<2x8x8xf32>
    %70 = vector.extract_strided_slice %28 {offsets = [0, 0, 16], sizes = [2, 8, 8], strides = [1, 1, 1]} : vector<2x8x32xf32> to vector<2x8x8xf32>
    %71 = vector.extract_strided_slice %29 {offsets = [0, 0, 16], sizes = [2, 8, 8], strides = [1, 1, 1]} : vector<2x8x32xf32> to vector<2x8x8xf32>
    "tpu.trace_start"() <{level = 10 : i32, message = "bqd,bkd->bqk"}> : () -> ()
    %cst_32 = arith.constant dense<0.000000e+00> : vector<2x8x8xf32>
    %72 = tpu.matmul %69, %70, %cst_32 {dimension_numbers = #tpu.dot_dimension_numbers<[2], [2], [1], [1], [0, 0, 0, 1, 1, 1], [0], [0]>} : vector<2x8x8xf32>, vector<2x8x8xf32>, vector<2x8x8xf32> -> vector<2x8x8xf32>
    "tpu.trace_stop"() : () -> ()
    %cst_33 = arith.constant dense<0xFF800000> : vector<2x8xf32>
    %73 = vector.multi_reduction <maximumf>, %72, %cst_33 [2] : vector<2x8x8xf32> to vector<2x8xf32>
    %74 = vector.shape_cast %73 : vector<2x8xf32> to vector<2x8x1xf32>
    %75 = vector.broadcast %74 : vector<2x8x1xf32> to vector<2x8x8xf32>
    %76 = arith.subf %72, %75 : vector<2x8x8xf32>
    %77 = math.exp %76 : vector<2x8x8xf32>
    %cst_34 = arith.constant dense<0.000000e+00> : vector<2x8xf32>
    %78 = vector.multi_reduction <add>, %77, %cst_34 [2] : vector<2x8x8xf32> to vector<2x8xf32>
    %79 = vector.shape_cast %78 : vector<2x8xf32> to vector<2x8x1xf32>
    %80 = tpu.reciprocal %79 {approx = true} : vector<2x8x1xf32> -> vector<2x8x1xf32>
    %81 = vector.broadcast %80 : vector<2x8x1xf32> to vector<2x8x8xf32>
    %82 = arith.mulf %77, %81 : vector<2x8x8xf32>
    "tpu.trace_start"() <{level = 10 : i32, message = "bqk,bkd->bqd"}> : () -> ()
    %cst_35 = arith.constant dense<0.000000e+00> : vector<2x8x8xf32>
    %83 = tpu.matmul %82, %71, %cst_35 {dimension_numbers = #tpu.dot_dimension_numbers<[2], [1], [1], [2], [0, 0, 0, 1, 1, 2], [0], [0]>} : vector<2x8x8xf32>, vector<2x8x8xf32>, vector<2x8x8xf32> -> vector<2x8x8xf32>
    "tpu.trace_stop"() : () -> ()
    %84 = vector.shape_cast %83 : vector<2x8x8xf32> to vector<16x8xf32>
    %85 = vector.extract_strided_slice %11 {offsets = [16, 0], sizes = [8, 32], strides = [1, 1]} : vector<32x32xf32> to vector<8x32xf32>
    %cst_36 = arith.constant dense<0.000000e+00> : vector<16x32xf32>
    %86 = tpu.matmul %84, %85, %cst_36 {dimension_numbers = #tpu.dot_dimension_numbers<[1], [0], [0], [1], [0, 0, 1, 1], [], []>} : vector<16x8xf32>, vector<8x32xf32>, vector<16x32xf32> -> vector<16x32xf32>
    %87 = arith.addf %68, %86 : vector<16x32xf32>
    %88 = vector.extract_strided_slice %27 {offsets = [0, 0, 24], sizes = [2, 8, 8], strides = [1, 1, 1]} : vector<2x8x32xf32> to vector<2x8x8xf32>
    %89 = vector.extract_strided_slice %28 {offsets = [0, 0, 24], sizes = [2, 8, 8], strides = [1, 1, 1]} : vector<2x8x32xf32> to vector<2x8x8xf32>
    %90 = vector.extract_strided_slice %29 {offsets = [0, 0, 24], sizes = [2, 8, 8], strides = [1, 1, 1]} : vector<2x8x32xf32> to vector<2x8x8xf32>
    "tpu.trace_start"() <{level = 10 : i32, message = "bqd,bkd->bqk"}> : () -> ()
    %cst_37 = arith.constant dense<0.000000e+00> : vector<2x8x8xf32>
    %91 = tpu.matmul %88, %89, %cst_37 {dimension_numbers = #tpu.dot_dimension_numbers<[2], [2], [1], [1], [0, 0, 0, 1, 1, 1], [0], [0]>} : vector<2x8x8xf32>, vector<2x8x8xf32>, vector<2x8x8xf32> -> vector<2x8x8xf32>
    "tpu.trace_stop"() : () -> ()
    %cst_38 = arith.constant dense<0xFF800000> : vector<2x8xf32>
    %92 = vector.multi_reduction <maximumf>, %91, %cst_38 [2] : vector<2x8x8xf32> to vector<2x8xf32>
    %93 = vector.shape_cast %92 : vector<2x8xf32> to vector<2x8x1xf32>
    %94 = vector.broadcast %93 : vector<2x8x1xf32> to vector<2x8x8xf32>
    %95 = arith.subf %91, %94 : vector<2x8x8xf32>
    %96 = math.exp %95 : vector<2x8x8xf32>
    %cst_39 = arith.constant dense<0.000000e+00> : vector<2x8xf32>
    %97 = vector.multi_reduction <add>, %96, %cst_39 [2] : vector<2x8x8xf32> to vector<2x8xf32>
    %98 = vector.shape_cast %97 : vector<2x8xf32> to vector<2x8x1xf32>
    %99 = tpu.reciprocal %98 {approx = true} : vector<2x8x1xf32> -> vector<2x8x1xf32>
    %100 = vector.broadcast %99 : vector<2x8x1xf32> to vector<2x8x8xf32>
    %101 = arith.mulf %96, %100 : vector<2x8x8xf32>
    "tpu.trace_start"() <{level = 10 : i32, message = "bqk,bkd->bqd"}> : () -> ()
    %cst_40 = arith.constant dense<0.000000e+00> : vector<2x8x8xf32>
    %102 = tpu.matmul %101, %90, %cst_40 {dimension_numbers = #tpu.dot_dimension_numbers<[2], [1], [1], [2], [0, 0, 0, 1, 1, 2], [0], [0]>} : vector<2x8x8xf32>, vector<2x8x8xf32>, vector<2x8x8xf32> -> vector<2x8x8xf32>
    "tpu.trace_stop"() : () -> ()
    %103 = vector.shape_cast %102 : vector<2x8x8xf32> to vector<16x8xf32>
    %104 = vector.extract_strided_slice %11 {offsets = [24, 0], sizes = [8, 32], strides = [1, 1]} : vector<32x32xf32> to vector<8x32xf32>
    %cst_41 = arith.constant dense<0.000000e+00> : vector<16x32xf32>
    %105 = tpu.matmul %103, %104, %cst_41 {dimension_numbers = #tpu.dot_dimension_numbers<[1], [0], [0], [1], [0, 0, 1, 1], [], []>} : vector<16x8xf32>, vector<8x32xf32>, vector<16x32xf32> -> vector<16x32xf32>
    %106 = arith.addf %87, %105 : vector<16x32xf32>
    %107 = vector.broadcast %12 : vector<1x32xf32> to vector<16x32xf32>
    %108 = arith.addf %106, %107 : vector<16x32xf32>
    %109 = arith.addf %1, %108 : vector<16x32xf32>
    %c0_42 = arith.constant 0 : index
    %c0_43 = arith.constant 0 : index
    %110 = vector.load %arg16[%c0_42, %c0_43] : memref<1x32xf32, #tpu.memory_space<vmem>>, vector<1x32xf32>
    %c0_44 = arith.constant 0 : index
    %c0_45 = arith.constant 0 : index
    %111 = vector.load %arg17[%c0_44, %c0_45] : memref<1x32xf32, #tpu.memory_space<vmem>>, vector<1x32xf32>
    %cst_46 = arith.constant dense<0.000000e+00> : vector<16xf32>
    %112 = vector.multi_reduction <add>, %109, %cst_46 [1] : vector<16x32xf32> to vector<16xf32>
    %113 = vector.shape_cast %112 : vector<16xf32> to vector<16x1xf32>
    %cst_47 = arith.constant 3.200000e+01 : f32
    %114 = vector.broadcast %cst_47 : f32 to vector<16x1xf32>
    %115 = arith.divf %113, %114 : vector<16x1xf32>
    %116 = vector.broadcast %115 : vector<16x1xf32> to vector<16x32xf32>
    %117 = arith.subf %109, %116 : vector<16x32xf32>
    %118 = arith.mulf %117, %117 : vector<16x32xf32>
    %cst_48 = arith.constant dense<0.000000e+00> : vector<16xf32>
    %119 = vector.multi_reduction <add>, %118, %cst_48 [1] : vector<16x32xf32> to vector<16xf32>
    %120 = vector.shape_cast %119 : vector<16xf32> to vector<16x1xf32>
    %cst_49 = arith.constant 3.200000e+01 : f32
    %121 = vector.broadcast %cst_49 : f32 to vector<16x1xf32>
    %122 = arith.divf %120, %121 : vector<16x1xf32>
    %cst_50 = arith.constant 9.99999974E-6 : f32
    %123 = vector.broadcast %cst_50 : f32 to vector<16x1xf32>
    %124 = arith.addf %122, %123 : vector<16x1xf32>
    %125 = math.rsqrt %124 : vector<16x1xf32>
    %126 = vector.broadcast %125 : vector<16x1xf32> to vector<16x32xf32>
    %127 = arith.mulf %117, %126 : vector<16x32xf32>
    %128 = vector.broadcast %110 : vector<1x32xf32> to vector<16x32xf32>
    %129 = arith.mulf %127, %128 : vector<16x32xf32>
    %130 = vector.broadcast %111 : vector<1x32xf32> to vector<16x32xf32>
    %131 = arith.addf %129, %130 : vector<16x32xf32>
    %132 = arith.addf %131, %3 : vector<16x32xf32>
    %c0_51 = arith.constant 0 : index
    %c0_52 = arith.constant 0 : index
    %133 = vector.load %arg8[%c0_51, %c0_52] : memref<32x96xf32, #tpu.memory_space<vmem>>, vector<32x96xf32>
    %c0_53 = arith.constant 0 : index
    %c0_54 = arith.constant 0 : index
    %134 = vector.load %arg9[%c0_53, %c0_54] : memref<1x96xf32, #tpu.memory_space<vmem>>, vector<1x96xf32>
    %c0_55 = arith.constant 0 : index
    %c0_56 = arith.constant 0 : index
    %135 = vector.load %arg10[%c0_55, %c0_56] : memref<32x32xf32, #tpu.memory_space<vmem>>, vector<32x32xf32>
    %c0_57 = arith.constant 0 : index
    %c0_58 = arith.constant 0 : index
    %136 = vector.load %arg11[%c0_57, %c0_58] : memref<1x32xf32, #tpu.memory_space<vmem>>, vector<1x32xf32>
    %137 = vector.extract_strided_slice %133 {offsets = [0, 0], sizes = [32, 32], strides = [1, 1]} : vector<32x96xf32> to vector<32x32xf32>
    %cst_59 = arith.constant dense<0.000000e+00> : vector<16x32xf32>
    %138 = tpu.matmul %132, %137, %cst_59 {dimension_numbers = #tpu.dot_dimension_numbers<[1], [0], [0], [1], [0, 0, 1, 1], [], []>} : vector<16x32xf32>, vector<32x32xf32>, vector<16x32xf32> -> vector<16x32xf32>
    %139 = vector.extract_strided_slice %134 {offsets = [0, 0], sizes = [1, 32], strides = [1, 1]} : vector<1x96xf32> to vector<1x32xf32>
    %140 = vector.broadcast %139 : vector<1x32xf32> to vector<16x32xf32>
    %141 = arith.addf %138, %140 : vector<16x32xf32>
    %142 = vector.extract_strided_slice %133 {offsets = [0, 32], sizes = [32, 32], strides = [1, 1]} : vector<32x96xf32> to vector<32x32xf32>
    %cst_60 = arith.constant dense<0.000000e+00> : vector<32x32xf32>
    %143 = tpu.matmul %7, %142, %cst_60 {dimension_numbers = #tpu.dot_dimension_numbers<[1], [0], [0], [1], [0, 0, 1, 1], [], []>} : vector<32x32xf32>, vector<32x32xf32>, vector<32x32xf32> -> vector<32x32xf32>
    %144 = vector.extract_strided_slice %134 {offsets = [0, 32], sizes = [1, 32], strides = [1, 1]} : vector<1x96xf32> to vector<1x32xf32>
    %145 = vector.broadcast %144 : vector<1x32xf32> to vector<32x32xf32>
    %146 = arith.addf %143, %145 : vector<32x32xf32>
    %147 = vector.extract_strided_slice %133 {offsets = [0, 64], sizes = [32, 32], strides = [1, 1]} : vector<32x96xf32> to vector<32x32xf32>
    %cst_61 = arith.constant dense<0.000000e+00> : vector<32x32xf32>
    %148 = tpu.matmul %5, %147, %cst_61 {dimension_numbers = #tpu.dot_dimension_numbers<[1], [0], [0], [1], [0, 0, 1, 1], [], []>} : vector<32x32xf32>, vector<32x32xf32>, vector<32x32xf32> -> vector<32x32xf32>
    %149 = vector.extract_strided_slice %134 {offsets = [0, 64], sizes = [1, 32], strides = [1, 1]} : vector<1x96xf32> to vector<1x32xf32>
    %150 = vector.broadcast %149 : vector<1x32xf32> to vector<32x32xf32>
    %151 = arith.addf %148, %150 : vector<32x32xf32>
    %cst_62 = arith.constant 0.353553385 : f32
    %152 = vector.broadcast %cst_62 : f32 to vector<16x32xf32>
    %153 = arith.mulf %141, %152 : vector<16x32xf32>
    %154 = vector.shape_cast %153 : vector<16x32xf32> to vector<2x8x32xf32>
    %155 = vector.shape_cast %146 : vector<32x32xf32> to vector<2x16x32xf32>
    %156 = vector.shape_cast %151 : vector<32x32xf32> to vector<2x16x32xf32>
    %cst_63 = arith.constant 0.000000e+00 : f32
    %157 = vector.broadcast %cst_63 : f32 to vector<16x32xf32>
    %cst_64 = arith.constant 0.000000e+00 : f32
    %158 = vector.broadcast %cst_64 : f32 to vector<2x8x16xf32>
    %159 = vector.extract_strided_slice %154 {offsets = [0, 0, 0], sizes = [2, 8, 8], strides = [1, 1, 1]} : vector<2x8x32xf32> to vector<2x8x8xf32>
    %160 = vector.extract_strided_slice %155 {offsets = [0, 0, 0], sizes = [2, 16, 8], strides = [1, 1, 1]} : vector<2x16x32xf32> to vector<2x16x8xf32>
    %161 = vector.extract_strided_slice %156 {offsets = [0, 0, 0], sizes = [2, 16, 8], strides = [1, 1, 1]} : vector<2x16x32xf32> to vector<2x16x8xf32>
    "tpu.trace_start"() <{level = 10 : i32, message = "bqd,bkd->bqk"}> : () -> ()
    %cst_65 = arith.constant dense<0.000000e+00> : vector<2x8x16xf32>
    %162 = tpu.matmul %159, %160, %cst_65 {dimension_numbers = #tpu.dot_dimension_numbers<[2], [2], [1], [1], [0, 0, 0, 1, 1, 1], [0], [0]>} : vector<2x8x8xf32>, vector<2x16x8xf32>, vector<2x8x16xf32> -> vector<2x8x16xf32>
    "tpu.trace_stop"() : () -> ()
    %cst_66 = arith.constant dense<0xFF800000> : vector<2x8xf32>
    %163 = vector.multi_reduction <maximumf>, %162, %cst_66 [2] : vector<2x8x16xf32> to vector<2x8xf32>
    %164 = vector.shape_cast %163 : vector<2x8xf32> to vector<2x8x1xf32>
    %165 = vector.broadcast %164 : vector<2x8x1xf32> to vector<2x8x16xf32>
    %166 = arith.subf %162, %165 : vector<2x8x16xf32>
    %167 = math.exp %166 : vector<2x8x16xf32>
    %cst_67 = arith.constant dense<0.000000e+00> : vector<2x8xf32>
    %168 = vector.multi_reduction <add>, %167, %cst_67 [2] : vector<2x8x16xf32> to vector<2x8xf32>
    %169 = vector.shape_cast %168 : vector<2x8xf32> to vector<2x8x1xf32>
    %170 = tpu.reciprocal %169 {approx = true} : vector<2x8x1xf32> -> vector<2x8x1xf32>
    %171 = vector.broadcast %170 : vector<2x8x1xf32> to vector<2x8x16xf32>
    %172 = arith.mulf %167, %171 : vector<2x8x16xf32>
    "tpu.trace_start"() <{level = 10 : i32, message = "bqk,bkd->bqd"}> : () -> ()
    %cst_68 = arith.constant dense<0.000000e+00> : vector<2x8x8xf32>
    %173 = tpu.matmul %172, %161, %cst_68 {dimension_numbers = #tpu.dot_dimension_numbers<[2], [1], [1], [2], [0, 0, 0, 1, 1, 2], [0], [0]>} : vector<2x8x16xf32>, vector<2x16x8xf32>, vector<2x8x8xf32> -> vector<2x8x8xf32>
    "tpu.trace_stop"() : () -> ()
    %174 = vector.shape_cast %173 : vector<2x8x8xf32> to vector<16x8xf32>
    %175 = vector.extract_strided_slice %135 {offsets = [0, 0], sizes = [8, 32], strides = [1, 1]} : vector<32x32xf32> to vector<8x32xf32>
    %cst_69 = arith.constant dense<0.000000e+00> : vector<16x32xf32>
    %176 = tpu.matmul %174, %175, %cst_69 {dimension_numbers = #tpu.dot_dimension_numbers<[1], [0], [0], [1], [0, 0, 1, 1], [], []>} : vector<16x8xf32>, vector<8x32xf32>, vector<16x32xf32> -> vector<16x32xf32>
    %177 = arith.addf %157, %176 : vector<16x32xf32>
    %178 = arith.addf %158, %172 : vector<2x8x16xf32>
    %179 = vector.extract_strided_slice %154 {offsets = [0, 0, 8], sizes = [2, 8, 8], strides = [1, 1, 1]} : vector<2x8x32xf32> to vector<2x8x8xf32>
    %180 = vector.extract_strided_slice %155 {offsets = [0, 0, 8], sizes = [2, 16, 8], strides = [1, 1, 1]} : vector<2x16x32xf32> to vector<2x16x8xf32>
    %181 = vector.extract_strided_slice %156 {offsets = [0, 0, 8], sizes = [2, 16, 8], strides = [1, 1, 1]} : vector<2x16x32xf32> to vector<2x16x8xf32>
    "tpu.trace_start"() <{level = 10 : i32, message = "bqd,bkd->bqk"}> : () -> ()
    %cst_70 = arith.constant dense<0.000000e+00> : vector<2x8x16xf32>
    %182 = tpu.matmul %179, %180, %cst_70 {dimension_numbers = #tpu.dot_dimension_numbers<[2], [2], [1], [1], [0, 0, 0, 1, 1, 1], [0], [0]>} : vector<2x8x8xf32>, vector<2x16x8xf32>, vector<2x8x16xf32> -> vector<2x8x16xf32>
    "tpu.trace_stop"() : () -> ()
    %cst_71 = arith.constant dense<0xFF800000> : vector<2x8xf32>
    %183 = vector.multi_reduction <maximumf>, %182, %cst_71 [2] : vector<2x8x16xf32> to vector<2x8xf32>
    %184 = vector.shape_cast %183 : vector<2x8xf32> to vector<2x8x1xf32>
    %185 = vector.broadcast %184 : vector<2x8x1xf32> to vector<2x8x16xf32>
    %186 = arith.subf %182, %185 : vector<2x8x16xf32>
    %187 = math.exp %186 : vector<2x8x16xf32>
    %cst_72 = arith.constant dense<0.000000e+00> : vector<2x8xf32>
    %188 = vector.multi_reduction <add>, %187, %cst_72 [2] : vector<2x8x16xf32> to vector<2x8xf32>
    %189 = vector.shape_cast %188 : vector<2x8xf32> to vector<2x8x1xf32>
    %190 = tpu.reciprocal %189 {approx = true} : vector<2x8x1xf32> -> vector<2x8x1xf32>
    %191 = vector.broadcast %190 : vector<2x8x1xf32> to vector<2x8x16xf32>
    %192 = arith.mulf %187, %191 : vector<2x8x16xf32>
    "tpu.trace_start"() <{level = 10 : i32, message = "bqk,bkd->bqd"}> : () -> ()
    %cst_73 = arith.constant dense<0.000000e+00> : vector<2x8x8xf32>
    %193 = tpu.matmul %192, %181, %cst_73 {dimension_numbers = #tpu.dot_dimension_numbers<[2], [1], [1], [2], [0, 0, 0, 1, 1, 2], [0], [0]>} : vector<2x8x16xf32>, vector<2x16x8xf32>, vector<2x8x8xf32> -> vector<2x8x8xf32>
    "tpu.trace_stop"() : () -> ()
    %194 = vector.shape_cast %193 : vector<2x8x8xf32> to vector<16x8xf32>
    %195 = vector.extract_strided_slice %135 {offsets = [8, 0], sizes = [8, 32], strides = [1, 1]} : vector<32x32xf32> to vector<8x32xf32>
    %cst_74 = arith.constant dense<0.000000e+00> : vector<16x32xf32>
    %196 = tpu.matmul %194, %195, %cst_74 {dimension_numbers = #tpu.dot_dimension_numbers<[1], [0], [0], [1], [0, 0, 1, 1], [], []>} : vector<16x8xf32>, vector<8x32xf32>, vector<16x32xf32> -> vector<16x32xf32>
    %197 = arith.addf %177, %196 : vector<16x32xf32>
    %198 = arith.addf %178, %192 : vector<2x8x16xf32>
    %199 = vector.extract_strided_slice %154 {offsets = [0, 0, 16], sizes = [2, 8, 8], strides = [1, 1, 1]} : vector<2x8x32xf32> to vector<2x8x8xf32>
    %200 = vector.extract_strided_slice %155 {offsets = [0, 0, 16], sizes = [2, 16, 8], strides = [1, 1, 1]} : vector<2x16x32xf32> to vector<2x16x8xf32>
    %201 = vector.extract_strided_slice %156 {offsets = [0, 0, 16], sizes = [2, 16, 8], strides = [1, 1, 1]} : vector<2x16x32xf32> to vector<2x16x8xf32>
    "tpu.trace_start"() <{level = 10 : i32, message = "bqd,bkd->bqk"}> : () -> ()
    %cst_75 = arith.constant dense<0.000000e+00> : vector<2x8x16xf32>
    %202 = tpu.matmul %199, %200, %cst_75 {dimension_numbers = #tpu.dot_dimension_numbers<[2], [2], [1], [1], [0, 0, 0, 1, 1, 1], [0], [0]>} : vector<2x8x8xf32>, vector<2x16x8xf32>, vector<2x8x16xf32> -> vector<2x8x16xf32>
    "tpu.trace_stop"() : () -> ()
    %cst_76 = arith.constant dense<0xFF800000> : vector<2x8xf32>
    %203 = vector.multi_reduction <maximumf>, %202, %cst_76 [2] : vector<2x8x16xf32> to vector<2x8xf32>
    %204 = vector.shape_cast %203 : vector<2x8xf32> to vector<2x8x1xf32>
    %205 = vector.broadcast %204 : vector<2x8x1xf32> to vector<2x8x16xf32>
    %206 = arith.subf %202, %205 : vector<2x8x16xf32>
    %207 = math.exp %206 : vector<2x8x16xf32>
    %cst_77 = arith.constant dense<0.000000e+00> : vector<2x8xf32>
    %208 = vector.multi_reduction <add>, %207, %cst_77 [2] : vector<2x8x16xf32> to vector<2x8xf32>
    %209 = vector.shape_cast %208 : vector<2x8xf32> to vector<2x8x1xf32>
    %210 = tpu.reciprocal %209 {approx = true} : vector<2x8x1xf32> -> vector<2x8x1xf32>
    %211 = vector.broadcast %210 : vector<2x8x1xf32> to vector<2x8x16xf32>
    %212 = arith.mulf %207, %211 : vector<2x8x16xf32>
    "tpu.trace_start"() <{level = 10 : i32, message = "bqk,bkd->bqd"}> : () -> ()
    %cst_78 = arith.constant dense<0.000000e+00> : vector<2x8x8xf32>
    %213 = tpu.matmul %212, %201, %cst_78 {dimension_numbers = #tpu.dot_dimension_numbers<[2], [1], [1], [2], [0, 0, 0, 1, 1, 2], [0], [0]>} : vector<2x8x16xf32>, vector<2x16x8xf32>, vector<2x8x8xf32> -> vector<2x8x8xf32>
    "tpu.trace_stop"() : () -> ()
    %214 = vector.shape_cast %213 : vector<2x8x8xf32> to vector<16x8xf32>
    %215 = vector.extract_strided_slice %135 {offsets = [16, 0], sizes = [8, 32], strides = [1, 1]} : vector<32x32xf32> to vector<8x32xf32>
    %cst_79 = arith.constant dense<0.000000e+00> : vector<16x32xf32>
    %216 = tpu.matmul %214, %215, %cst_79 {dimension_numbers = #tpu.dot_dimension_numbers<[1], [0], [0], [1], [0, 0, 1, 1], [], []>} : vector<16x8xf32>, vector<8x32xf32>, vector<16x32xf32> -> vector<16x32xf32>
    %217 = arith.addf %197, %216 : vector<16x32xf32>
    %218 = arith.addf %198, %212 : vector<2x8x16xf32>
    %219 = vector.extract_strided_slice %154 {offsets = [0, 0, 24], sizes = [2, 8, 8], strides = [1, 1, 1]} : vector<2x8x32xf32> to vector<2x8x8xf32>
    %220 = vector.extract_strided_slice %155 {offsets = [0, 0, 24], sizes = [2, 16, 8], strides = [1, 1, 1]} : vector<2x16x32xf32> to vector<2x16x8xf32>
    %221 = vector.extract_strided_slice %156 {offsets = [0, 0, 24], sizes = [2, 16, 8], strides = [1, 1, 1]} : vector<2x16x32xf32> to vector<2x16x8xf32>
    "tpu.trace_start"() <{level = 10 : i32, message = "bqd,bkd->bqk"}> : () -> ()
    %cst_80 = arith.constant dense<0.000000e+00> : vector<2x8x16xf32>
    %222 = tpu.matmul %219, %220, %cst_80 {dimension_numbers = #tpu.dot_dimension_numbers<[2], [2], [1], [1], [0, 0, 0, 1, 1, 1], [0], [0]>} : vector<2x8x8xf32>, vector<2x16x8xf32>, vector<2x8x16xf32> -> vector<2x8x16xf32>
    "tpu.trace_stop"() : () -> ()
    %cst_81 = arith.constant dense<0xFF800000> : vector<2x8xf32>
    %223 = vector.multi_reduction <maximumf>, %222, %cst_81 [2] : vector<2x8x16xf32> to vector<2x8xf32>
    %224 = vector.shape_cast %223 : vector<2x8xf32> to vector<2x8x1xf32>
    %225 = vector.broadcast %224 : vector<2x8x1xf32> to vector<2x8x16xf32>
    %226 = arith.subf %222, %225 : vector<2x8x16xf32>
    %227 = math.exp %226 : vector<2x8x16xf32>
    %cst_82 = arith.constant dense<0.000000e+00> : vector<2x8xf32>
    %228 = vector.multi_reduction <add>, %227, %cst_82 [2] : vector<2x8x16xf32> to vector<2x8xf32>
    %229 = vector.shape_cast %228 : vector<2x8xf32> to vector<2x8x1xf32>
    %230 = tpu.reciprocal %229 {approx = true} : vector<2x8x1xf32> -> vector<2x8x1xf32>
    %231 = vector.broadcast %230 : vector<2x8x1xf32> to vector<2x8x16xf32>
    %232 = arith.mulf %227, %231 : vector<2x8x16xf32>
    "tpu.trace_start"() <{level = 10 : i32, message = "bqk,bkd->bqd"}> : () -> ()
    %cst_83 = arith.constant dense<0.000000e+00> : vector<2x8x8xf32>
    %233 = tpu.matmul %232, %221, %cst_83 {dimension_numbers = #tpu.dot_dimension_numbers<[2], [1], [1], [2], [0, 0, 0, 1, 1, 2], [0], [0]>} : vector<2x8x16xf32>, vector<2x16x8xf32>, vector<2x8x8xf32> -> vector<2x8x8xf32>
    "tpu.trace_stop"() : () -> ()
    %234 = vector.shape_cast %233 : vector<2x8x8xf32> to vector<16x8xf32>
    %235 = vector.extract_strided_slice %135 {offsets = [24, 0], sizes = [8, 32], strides = [1, 1]} : vector<32x32xf32> to vector<8x32xf32>
    %cst_84 = arith.constant dense<0.000000e+00> : vector<16x32xf32>
    %236 = tpu.matmul %234, %235, %cst_84 {dimension_numbers = #tpu.dot_dimension_numbers<[1], [0], [0], [1], [0, 0, 1, 1], [], []>} : vector<16x8xf32>, vector<8x32xf32>, vector<16x32xf32> -> vector<16x32xf32>
    %237 = arith.addf %217, %236 : vector<16x32xf32>
    %238 = arith.addf %218, %232 : vector<2x8x16xf32>
    %239 = vector.broadcast %136 : vector<1x32xf32> to vector<16x32xf32>
    %240 = arith.addf %237, %239 : vector<16x32xf32>
    %cst_85 = arith.constant 2.500000e-01 : f32
    %241 = vector.broadcast %cst_85 : f32 to vector<2x8x16xf32>
    %242 = arith.mulf %238, %241 : vector<2x8x16xf32>
    %243 = arith.addf %131, %240 : vector<16x32xf32>
    %c0_86 = arith.constant 0 : index
    %c0_87 = arith.constant 0 : index
    %244 = vector.load %arg18[%c0_86, %c0_87] : memref<1x32xf32, #tpu.memory_space<vmem>>, vector<1x32xf32>
    %c0_88 = arith.constant 0 : index
    %c0_89 = arith.constant 0 : index
    %245 = vector.load %arg19[%c0_88, %c0_89] : memref<1x32xf32, #tpu.memory_space<vmem>>, vector<1x32xf32>
    %cst_90 = arith.constant dense<0.000000e+00> : vector<16xf32>
    %246 = vector.multi_reduction <add>, %243, %cst_90 [1] : vector<16x32xf32> to vector<16xf32>
    %247 = vector.shape_cast %246 : vector<16xf32> to vector<16x1xf32>
    %cst_91 = arith.constant 3.200000e+01 : f32
    %248 = vector.broadcast %cst_91 : f32 to vector<16x1xf32>
    %249 = arith.divf %247, %248 : vector<16x1xf32>
    %250 = vector.broadcast %249 : vector<16x1xf32> to vector<16x32xf32>
    %251 = arith.subf %243, %250 : vector<16x32xf32>
    %252 = arith.mulf %251, %251 : vector<16x32xf32>
    %cst_92 = arith.constant dense<0.000000e+00> : vector<16xf32>
    %253 = vector.multi_reduction <add>, %252, %cst_92 [1] : vector<16x32xf32> to vector<16xf32>
    %254 = vector.shape_cast %253 : vector<16xf32> to vector<16x1xf32>
    %cst_93 = arith.constant 3.200000e+01 : f32
    %255 = vector.broadcast %cst_93 : f32 to vector<16x1xf32>
    %256 = arith.divf %254, %255 : vector<16x1xf32>
    %cst_94 = arith.constant 9.99999974E-6 : f32
    %257 = vector.broadcast %cst_94 : f32 to vector<16x1xf32>
    %258 = arith.addf %256, %257 : vector<16x1xf32>
    %259 = math.rsqrt %258 : vector<16x1xf32>
    %260 = vector.broadcast %259 : vector<16x1xf32> to vector<16x32xf32>
    %261 = arith.mulf %251, %260 : vector<16x32xf32>
    %262 = vector.broadcast %244 : vector<1x32xf32> to vector<16x32xf32>
    %263 = arith.mulf %261, %262 : vector<16x32xf32>
    %264 = vector.broadcast %245 : vector<1x32xf32> to vector<16x32xf32>
    %265 = arith.addf %263, %264 : vector<16x32xf32>
    %c0_95 = arith.constant 0 : index
    %c0_96 = arith.constant 0 : index
    %266 = vector.load %arg12[%c0_95, %c0_96] : memref<32x64xf32, #tpu.memory_space<vmem>>, vector<32x64xf32>
    %cst_97 = arith.constant dense<0.000000e+00> : vector<16x64xf32>
    %267 = tpu.matmul %265, %266, %cst_97 {dimension_numbers = #tpu.dot_dimension_numbers<[1], [0], [0], [1], [0, 0, 1, 1], [], []>} : vector<16x32xf32>, vector<32x64xf32>, vector<16x64xf32> -> vector<16x64xf32>
    %c0_98 = arith.constant 0 : index
    %c0_99 = arith.constant 0 : index
    %268 = vector.load %arg13[%c0_98, %c0_99] : memref<1x64xf32, #tpu.memory_space<vmem>>, vector<1x64xf32>
    %269 = vector.broadcast %268 : vector<1x64xf32> to vector<16x64xf32>
    %270 = arith.addf %267, %269 : vector<16x64xf32>
    %cst_100 = arith.constant 0.000000e+00 : f32
    %271 = vector.broadcast %cst_100 : f32 to vector<16x64xf32>
    %272 = arith.maximumf %270, %271 : vector<16x64xf32>
    %c0_101 = arith.constant 0 : index
    %c0_102 = arith.constant 0 : index
    %273 = vector.load %arg14[%c0_101, %c0_102] : memref<64x32xf32, #tpu.memory_space<vmem>>, vector<64x32xf32>
    %cst_103 = arith.constant dense<0.000000e+00> : vector<16x32xf32>
    %274 = tpu.matmul %272, %273, %cst_103 {dimension_numbers = #tpu.dot_dimension_numbers<[1], [0], [0], [1], [0, 0, 1, 1], [], []>} : vector<16x64xf32>, vector<64x32xf32>, vector<16x32xf32> -> vector<16x32xf32>
    %c0_104 = arith.constant 0 : index
    %c0_105 = arith.constant 0 : index
    %275 = vector.load %arg15[%c0_104, %c0_105] : memref<1x32xf32, #tpu.memory_space<vmem>>, vector<1x32xf32>
    %276 = vector.broadcast %275 : vector<1x32xf32> to vector<16x32xf32>
    %277 = arith.addf %274, %276 : vector<16x32xf32>
    %278 = arith.addf %265, %277 : vector<16x32xf32>
    %c0_106 = arith.constant 0 : index
    %c0_107 = arith.constant 0 : index
    %279 = vector.load %arg20[%c0_106, %c0_107] : memref<1x32xf32, #tpu.memory_space<vmem>>, vector<1x32xf32>
    %c0_108 = arith.constant 0 : index
    %c0_109 = arith.constant 0 : index
    %280 = vector.load %arg21[%c0_108, %c0_109] : memref<1x32xf32, #tpu.memory_space<vmem>>, vector<1x32xf32>
    %cst_110 = arith.constant dense<0.000000e+00> : vector<16xf32>
    %281 = vector.multi_reduction <add>, %278, %cst_110 [1] : vector<16x32xf32> to vector<16xf32>
    %282 = vector.shape_cast %281 : vector<16xf32> to vector<16x1xf32>
    %cst_111 = arith.constant 3.200000e+01 : f32
    %283 = vector.broadcast %cst_111 : f32 to vector<16x1xf32>
    %284 = arith.divf %282, %283 : vector<16x1xf32>
    %285 = vector.broadcast %284 : vector<16x1xf32> to vector<16x32xf32>
    %286 = arith.subf %278, %285 : vector<16x32xf32>
    %287 = arith.mulf %286, %286 : vector<16x32xf32>
    %cst_112 = arith.constant dense<0.000000e+00> : vector<16xf32>
    %288 = vector.multi_reduction <add>, %287, %cst_112 [1] : vector<16x32xf32> to vector<16xf32>
    %289 = vector.shape_cast %288 : vector<16xf32> to vector<16x1xf32>
    %cst_113 = arith.constant 3.200000e+01 : f32
    %290 = vector.broadcast %cst_113 : f32 to vector<16x1xf32>
    %291 = arith.divf %289, %290 : vector<16x1xf32>
    %cst_114 = arith.constant 9.99999974E-6 : f32
    %292 = vector.broadcast %cst_114 : f32 to vector<16x1xf32>
    %293 = arith.addf %291, %292 : vector<16x1xf32>
    %294 = math.rsqrt %293 : vector<16x1xf32>
    %295 = vector.broadcast %294 : vector<16x1xf32> to vector<16x32xf32>
    %296 = arith.mulf %286, %295 : vector<16x32xf32>
    %297 = vector.broadcast %279 : vector<1x32xf32> to vector<16x32xf32>
    %298 = arith.mulf %296, %297 : vector<16x32xf32>
    %299 = vector.broadcast %280 : vector<1x32xf32> to vector<16x32xf32>
    %300 = arith.addf %298, %299 : vector<16x32xf32>
    %301 = vector.shape_cast %300 : vector<16x32xf32> to vector<2x8x32xf32>
    %c0_115 = arith.constant 0 : index
    %c0_116 = arith.constant 0 : index
    %c0_117 = arith.constant 0 : index
    %302 = vector.load %arg22[%c0_115, %c0_116, %c0_117] : memref<2x8x32xf32, #tpu.memory_space<vmem>>, vector<2x8x32xf32>
    tpu.vector_store %arg22[%c0_115, %c0_116, %c0_117], %301 {strides = array<i32>} : memref<2x8x32xf32, #tpu.memory_space<vmem>>, vector<2x8x32xf32>,
    %c0_118 = arith.constant 0 : index
    %c0_119 = arith.constant 0 : index
    %c0_120 = arith.constant 0 : index
    %303 = vector.load %arg23[%c0_118, %c0_119, %c0_120] : memref<2x8x16xf32, #tpu.memory_space<vmem>>, vector<2x8x16xf32>
    tpu.vector_store %arg23[%c0_118, %c0_119, %c0_120], %242 {strides = array<i32>} : memref<2x8x16xf32, #tpu.memory_space<vmem>>, vector<2x8x16xf32>,
    return
  }
}

</mosaic_0001>

<llo_original>
// kernel: transformer_decoder_forward.5
$region0: #{transformer_decoder_forward.5}
  #allocation0 [shape = 'u32[]', space=smem, size = 0x4, offset = 0x4, fixed_abs, tag = 'smem constant byte address 0x4 - core index']
  #allocation1 [shape = 'u32[72,128]{1,0:T(1,128)}', space=vmem, size = 0x9000, scoped, tag = 'internal scratch']
  %s0 = inlined_call_operand.vmem [shape: f32[16,32], index: 0, kind: input, shape index: {}]
  %s1 = inlined_call_operand.vmem [shape: f32[1,32], index: 1, kind: input, shape index: {}]
  %s2 = inlined_call_operand.vmem [shape: f32[1,32], index: 2, kind: input, shape index: {}]
  %s3 = inlined_call_operand.vmem [shape: f32[16,32], index: 3, kind: output, shape index: {}]
  %s4 = sld [smem:[#allocation0]]
  $region22: #{transformer_decoder_forward.5} parent=0
    _
  %s6 = ssub.s32 1, %s4
  %s7 = scalar_select 0, %s6, %s4
  // Predicated region
  $region2: #{transformer_decoder_forward.5} parent=0 // pred_check
    _
  $region3: #{transformer_decoder_forward.5} parent=0 // pred_check_branch
    %9 = sbr.rel (0) target = $region5
  $region4: #{transformer_decoder_forward.5} parent=0 // pred_region
    _
  $region5: #{transformer_decoder_forward.5} parent=0 // pred_fallthru
    _
  // Predicated region
  $region6: #{transformer_decoder_forward.5} parent=0 // pred_check
    _
  $region7: #{transformer_decoder_forward.5} parent=0 // pred_check_branch
    %11 = sbr.rel (0) target = $region9
  $region8: #{transformer_decoder_forward.5} parent=0 // pred_region
    _
  $region9: #{transformer_decoder_forward.5} parent=0 // pred_fallthru
    _
  // Predicated region
  $region10: #{transformer_decoder_forward.5} parent=0 // pred_check
    _
  $region11: #{transformer_decoder_forward.5} parent=0 // pred_check_branch
    %13 = sbr.rel (0) target = $region13
  $region12: #{transformer_decoder_forward.5} parent=0 // pred_region
    _
  $region13: #{transformer_decoder_forward.5} parent=0 // pred_fallthru
    _
  %v14 = vld [vmem:[%s0] sm:$0xff]
  %v15 = vld [vmem:[%s0 + $0x8] sm:$0xff]
  %v16 = vld [vmem:[%s1] sm:$0x1]
  %v17 = vld [vmem:[%s2] sm:$0x1]
  %vm18 = vcmask 261120
  %v19 = vsel %vm18, %v14, 0.0
  %20 = vadd.xlane.f32.xlu0 %v19
  %v21 = vpop.xlane.xlu0 %20
  %v22 = vsel %vm18, %v15, 0.0
  %23 = vadd.xlane.f32.xlu0 %v22
  %v24 = vpop.xlane.xlu0 %23
  %v25 = vrcp.pop 32.0
  %v26 = vmul.f32 32.0, %v25
  %v27 = vsub.f32 1.0, %v26
  %v28 = vmul.f32 %v25, %v27
  %v29 = vadd.f32 %v25, %v28
  %vm30 = vweird.f32 %v25
  %v31 = vsel %vm30, %v25, %v29
  %v32 = vmul.f32 %v21, %v31
  %v33 = vmul.f32 %v24, %v31
  %v34 = vsub.f32 %v14, %v32
  %v35 = vsub.f32 %v15, %v33
  %v36 = vmul.f32 %v34, %v34
  %v37 = vmul.f32 %v35, %v35
  %v38 = vsel %vm18, %v36, 0.0
  %39 = vadd.xlane.f32.xlu0 %v38
  %v40 = vpop.xlane.xlu0 %39
  %v41 = vsel %vm18, %v37, 0.0
  %42 = vadd.xlane.f32.xlu0 %v41
  %v43 = vpop.xlane.xlu0 %42
  %v44 = vmul.f32 %v40, %v31
  %v45 = vmul.f32 %v43, %v31
  %v46 = vadd.f32 %v44, 1e-05
  %v47 = vadd.f32 %v45, 1e-05
  %v48 = vrsqrt.pop %v46
  %v49 = vmul.f32 %v48, %v46
  %v50 = vmul.f32 %v49, %v48
  %v51 = vmul.f32 0.5, %v50
  %v52 = vsub.f32 1.5, %v51
  %v53 = vmul.f32 %v48, %v52
  %vm54 = vweird.f32 %v46
  %vm55 = vweird.f32 %v48
  %vm56 = vmor %vm54, %vm55
  %v57 = vsel %vm56, %v48, %v53
  %v58 = vrsqrt.pop %v47
  %v59 = vmul.f32 %v58, %v47
  %v60 = vmul.f32 %v59, %v58
  %v61 = vmul.f32 0.5, %v60
  %v62 = vsub.f32 1.5, %v61
  %v63 = vmul.f32 %v58, %v62
  %vm64 = vweird.f32 %v47
  %vm65 = vweird.f32 %v58
  %vm66 = vmor %vm64, %vm65
  %v67 = vsel %vm66, %v58, %v63
  %v68 = vmul.f32 %v34, %v57
  %v69 = vmul.f32 %v35, %v67
  %v71 = vperm.slane %v16, 0
  %v73 = vmul.f32 %v68, %v71
  %v74 = vmul.f32 %v69, %v71
  %v76 = vperm.slane %v17, 0
  %v78 = vadd.f32 %v73, %v76
  %v79 = vadd.f32 %v74, %v76
  %80 = vst.msk [vmem:[%s3] sm:$0xff] %vm18, %v78
  %81 = vst.msk [vmem:[%s3 + $0x8] sm:$0xff] %vm18, %v79
  // Predicated region
  $region14: #{transformer_decoder_forward.5} parent=0 // pred_check
    _
  $region15: #{transformer_decoder_forward.5} parent=0 // pred_check_branch
    %83 = sbr.rel (0) target = $region17
  $region16: #{transformer_decoder_forward.5} parent=0 // pred_region
    _
  $region17: #{transformer_decoder_forward.5} parent=0 // pred_fallthru
    _
  // Predicated region
  $region18: #{transformer_decoder_forward.5} parent=0 // pred_check
    _
  $region19: #{transformer_decoder_forward.5} parent=0 // pred_check_branch
    %85 = sbr.rel (0) target = $region21
  $region20: #{transformer_decoder_forward.5} parent=0 // pred_region
    _
  $region21: #{transformer_decoder_forward.5} parent=0 // pred_fallthru
    _

// kernel: transformer_decoder_forward.3
$region0: #{transformer_decoder_forward.3}
  #allocation0 [shape = 'u32[]', space=smem, size = 0x4, offset = 0x4, fixed_abs, tag = 'smem constant byte address 0x4 - core index']
  #allocation1 [shape = 'u32[72,128]{1,0:T(1,128)}', space=vmem, size = 0x9000, scoped, tag = 'internal scratch']
  %s0 = inlined_call_operand.vmem [shape: f32[2,8,32], index: 0, kind: input, shape index: {}]
  %s1 = inlined_call_operand.vmem [shape: f32[2,16,32], index: 1, kind: input, shape index: {}]
  %s2 = inlined_call_operand.vmem [shape: f32[2,16,32], index: 2, kind: input, shape index: {}]
  %s3 = inlined_call_operand.vmem [shape: f32[2,8,32], index: 3, kind: input, shape index: {}]
  %s4 = inlined_call_operand.vmem [shape: f32[32,96], index: 4, kind: input, shape index: {}]
  %s5 = inlined_call_operand.hbm [shape: f32[1,96], index: 5, kind: input, shape index: {}]
  %s6 = inlined_call_operand.vmem [shape: f32[32,32], index: 6, kind: input, shape index: {}]
  %s7 = inlined_call_operand.hbm [shape: f32[1,32], index: 7, kind: input, shape index: {}]
  %s8 = inlined_call_operand.vmem [shape: f32[32,96], index: 8, kind: input, shape index: {}]
  %s9 = inlined_call_operand.hbm [shape: f32[1,96], index: 9, kind: input, shape index: {}]
  %s10 = inlined_call_operand.vmem [shape: f32[32,32], index: 10, kind: input, shape index: {}]
  %s11 = inlined_call_operand.hbm [shape: f32[1,32], index: 11, kind: input, shape index: {}]
  %s12 = inlined_call_operand.vmem [shape: f32[32,64], index: 12, kind: input, shape index: {}]
  %s13 = inlined_call_operand.hbm [shape: f32[1,64], index: 13, kind: input, shape index: {}]
  %s14 = inlined_call_operand.vmem [shape: f32[64,32], index: 14, kind: input, shape index: {}]
  %s15 = inlined_call_operand.hbm [shape: f32[1,32], index: 15, kind: input, shape index: {}]
  %s16 = inlined_call_operand.hbm [shape: f32[1,32], index: 16, kind: input, shape index: {}]
  %s17 = inlined_call_operand.hbm [shape: f32[1,32], index: 17, kind: input, shape index: {}]
  %s18 = inlined_call_operand.hbm [shape: f32[1,32], index: 18, kind: input, shape index: {}]
  %s19 = inlined_call_operand.hbm [shape: f32[1,32], index: 19, kind: input, shape index: {}]
  %s20 = inlined_call_operand.hbm [shape: f32[1,32], index: 20, kind: input, shape index: {}]
  %s21 = inlined_call_operand.hbm [shape: f32[1,32], index: 21, kind: input, shape index: {}]
  %s22 = inlined_call_operand.vmem [shape: f32[2,8,32], index: 22, kind: output, shape index: {}]
  %s23 = sld [smem:[#allocation0]]
  $region146: #{transformer_decoder_forward.3} parent=0
    _
  %s25 = ssub.s32 1, %s23
  %s26 = scalar_select 0, %s25, %s23
  $region1: #{transformer_decoder_forward.3} parent=0
    #allocation2 [shape = 'u8[512]{0}', space=vmem, size = 0x400, scoped, tag = 'input window, operand 5, single buffered']
    #allocation3 [shape = 's32[1]{0}', space=sflag, size = 0x4, scoped, tag = 'scoped memory for transformer_decoder_forward.3']
    #allocation4 [shape = 'u8[512]{0}', space=vmem, size = 0x400, scoped, tag = 'input window, operand 7, single buffered']
    #allocation5 [shape = 's32[1]{0}', space=sflag, size = 0x4, scoped, tag = 'scoped memory for transformer_decoder_forward.3']
    #allocation6 [shape = 'u8[512]{0}', space=vmem, size = 0x400, scoped, tag = 'input window, operand 9, single buffered']
    #allocation7 [shape = 'u8[512]{0}', space=vmem, size = 0x400, scoped, tag = 'input window, operand 11, single buffered']
    #allocation8 [shape = 's32[1]{0}', space=sflag, size = 0x4, scoped, tag = 'scoped memory for transformer_decoder_forward.3']
    #allocation9 [shape = 'u8[512]{0}', space=vmem, size = 0x400, scoped, tag = 'input window, operand 13, single buffered']
    #allocation10 [shape = 'u8[512]{0}', space=vmem, size = 0x400, scoped, tag = 'input window, operand 15, single buffered']
    #allocation11 [shape = 's32[1]{0}', space=sflag, size = 0x4, scoped, tag = 'scoped memory for transformer_decoder_forward.3']
    #allocation12 [shape = 'u8[512]{0}', space=vmem, size = 0x400, scoped, tag = 'input window, operand 16, single buffered']
    #allocation13 [shape = 'u8[512]{0}', space=vmem, size = 0x400, scoped, tag = 'input window, operand 17, single buffered']
    #allocation14 [shape = 's32[1]{0}', space=sflag, size = 0x4, scoped, tag = 'scoped memory for transformer_decoder_forward.3']
    #allocation15 [shape = 'u8[512]{0}', space=vmem, size = 0x400, scoped, tag = 'input window, operand 18, single buffered']
    #allocation16 [shape = 'u8[512]{0}', space=vmem, size = 0x400, scoped, tag = 'input window, operand 19, single buffered']
    #allocation17 [shape = 's32[1]{0}', space=sflag, size = 0x4, scoped, tag = 'scoped memory for transformer_decoder_forward.3']
    #allocation18 [shape = 'u8[512]{0}', space=vmem, size = 0x400, scoped, tag = 'input window, operand 20, single buffered']
    #allocation19 [shape = 'u8[512]{0}', space=vmem, size = 0x400, scoped, tag = 'input window, operand 21, single buffered']
    #allocation20 [shape = 's32[1]{0}', space=sflag, size = 0x4, scoped, tag = 'scoped memory for transformer_decoder_forward.3']
    %27 = vsyncpa [#allocation3], 0
    %28 = vsyncpa [#allocation5], 0
    %29 = vsyncpa [#allocation8], 0
    %30 = vsyncpa [#allocation11], 0
    %31 = vsyncpa [#allocation14], 0
    %32 = vsyncpa [#allocation17], 0
    %33 = vsyncpa [#allocation20], 0
    // Predicated region
    $region2: #{transformer_decoder_forward.3} parent=1 // pred_check
      _
    $region3: #{transformer_decoder_forward.3} parent=1 // pred_check_branch
      %35 = sbr.rel (0) target = $region5
    $region4: #{transformer_decoder_forward.3} parent=1 // pred_region
      _
    $region5: #{transformer_decoder_forward.3} parent=1 // pred_fallthru
      _
    // Predicated region
    $region6: #{transformer_decoder_forward.3} parent=1 // pred_check
      _
    $region7: #{transformer_decoder_forward.3} parent=1 // pred_check_branch
      %37 = sbr.rel (0) target = $region9
    $region8: #{transformer_decoder_forward.3} parent=1 // pred_region
      _
    $region9: #{transformer_decoder_forward.3} parent=1 // pred_fallthru
      _
    // Predicated region
    $region10: #{transformer_decoder_forward.3} parent=1 // pred_check
      _
    $region11: #{transformer_decoder_forward.3} parent=1 // pred_check_branch
      %39 = sbr.rel (0) target = $region13
    $region12: #{transformer_decoder_forward.3} parent=1 // pred_region
      _
    $region13: #{transformer_decoder_forward.3} parent=1 // pred_fallthru
      _
    // Predicated region
    $region14: #{transformer_decoder_forward.3} parent=1 // pred_check
      _
    $region15: #{transformer_decoder_forward.3} parent=1 // pred_check_branch
      %41 = sbr.rel (0) target = $region17
    $region16: #{transformer_decoder_forward.3} parent=1 // pred_region
      _
    $region17: #{transformer_decoder_forward.3} parent=1 // pred_fallthru
      _
    // Predicated region
    $region18: #{transformer_decoder_forward.3} parent=1 // pred_check
      _
    $region19: #{transformer_decoder_forward.3} parent=1 // pred_check_branch
      %43 = sbr.rel (0) target = $region21
    $region20: #{transformer_decoder_forward.3} parent=1 // pred_region
      _
    $region21: #{transformer_decoder_forward.3} parent=1 // pred_fallthru
      _
    // Predicated region
    $region22: #{transformer_decoder_forward.3} parent=1 // pred_check
      _
    $region23: #{transformer_decoder_forward.3} parent=1 // pred_check_branch
      %45 = sbr.rel (0) target = $region25
    $region24: #{transformer_decoder_forward.3} parent=1 // pred_region
      %47 = vsyncadd [#allocation3], 0
      %s49 = sshll.u32 %s5, 4
      %s50 = int_to_ptr.hbm [resolvable:$true] %s49
      %s51 = sshll.u32 [#allocation2], 4
      %s52 = int_to_ptr.vmem [resolvable:$true] %s51
      %54 = dma.hbm_to_vmem [thread:$0]  %s50, 16, %s52, [#allocation3]
    $region25: #{transformer_decoder_forward.3} parent=1 // pred_fallthru
      _
    // Predicated region
    $region26: #{transformer_decoder_forward.3} parent=1 // pred_check
      _
    $region27: #{transformer_decoder_forward.3} parent=1 // pred_check_branch
      %56 = sbr.rel (0) target = $region29
    $region28: #{transformer_decoder_forward.3} parent=1 // pred_region
      _
    $region29: #{transformer_decoder_forward.3} parent=1 // pred_fallthru
      _
    // Predicated region
    $region30: #{transformer_decoder_forward.3} parent=1 // pred_check
      _
    $region31: #{transformer_decoder_forward.3} parent=1 // pred_check_branch
      %58 = sbr.rel (0) target = $region33
    $region32: #{transformer_decoder_forward.3} parent=1 // pred_region
      %60 = vsyncadd [#allocation5], 0
      %s62 = sshll.u32 %s7, 4
      %s63 = int_to_ptr.hbm [resolvable:$true] %s62
      %s64 = sshll.u32 [#allocation4], 4
      %s65 = int_to_ptr.vmem [resolvable:$true] %s64
      %67 = dma.hbm_to_vmem [thread:$0]  %s63, 16, %s65, [#allocation5]
    $region33: #{transformer_decoder_forward.3} parent=1 // pred_fallthru
      _
    // Predicated region
    $region34: #{transformer_decoder_forward.3} parent=1 // pred_check
      _
    $region35: #{transformer_decoder_forward.3} parent=1 // pred_check_branch
      %69 = sbr.rel (0) target = $region37
    $region36: #{transformer_decoder_forward.3} parent=1 // pred_region
      _
    $region37: #{transformer_decoder_forward.3} parent=1 // pred_fallthru
      _
    // Predicated region
    $region38: #{transformer_decoder_forward.3} parent=1 // pred_check
      _
    $region39: #{transformer_decoder_forward.3} parent=1 // pred_check_branch
      %71 = sbr.rel (0) target = $region41
    $region40: #{transformer_decoder_forward.3} parent=1 // pred_region
      %73 = vsyncadd [#allocation5], 0
      %s75 = sshll.u32 %s9, 4
      %s76 = int_to_ptr.hbm [resolvable:$true] %s75
      %s77 = sshll.u32 [#allocation6], 4
      %s78 = int_to_ptr.vmem [resolvable:$true] %s77
      %80 = dma.hbm_to_vmem [thread:$0]  %s76, 16, %s78, [#allocation5]
    $region41: #{transformer_decoder_forward.3} parent=1 // pred_fallthru
      _
    // Predicated region
    $region42: #{transformer_decoder_forward.3} parent=1 // pred_check
      _
    $region43: #{transformer_decoder_forward.3} parent=1 // pred_check_branch
      %82 = sbr.rel (0) target = $region45
    $region44: #{transformer_decoder_forward.3} parent=1 // pred_region
      _
    $region45: #{transformer_decoder_forward.3} parent=1 // pred_fallthru
      _
    // Predicated region
    $region46: #{transformer_decoder_forward.3} parent=1 // pred_check
      _
    $region47: #{transformer_decoder_forward.3} parent=1 // pred_check_branch
      %84 = sbr.rel (0) target = $region49
    $region48: #{transformer_decoder_forward.3} parent=1 // pred_region
      %86 = vsyncadd [#allocation8], 0
      %s88 = sshll.u32 %s11, 4
      %s89 = int_to_ptr.hbm [resolvable:$true] %s88
      %s90 = sshll.u32 [#allocation7], 4
      %s91 = int_to_ptr.vmem [resolvable:$true] %s90
      %93 = dma.hbm_to_vmem [thread:$0]  %s89, 16, %s91, [#allocation8]
    $region49: #{transformer_decoder_forward.3} parent=1 // pred_fallthru
      _
    // Predicated region
    $region50: #{transformer_decoder_forward.3} parent=1 // pred_check
      _
    $region51: #{transformer_decoder_forward.3} parent=1 // pred_check_branch
      %95 = sbr.rel (0) target = $region53
    $region52: #{transformer_decoder_forward.3} parent=1 // pred_region
      _
    $region53: #{transformer_decoder_forward.3} parent=1 // pred_fallthru
      _
    // Predicated region
    $region54: #{transformer_decoder_forward.3} parent=1 // pred_check
      _
    $region55: #{transformer_decoder_forward.3} parent=1 // pred_check_branch
      %97 = sbr.rel (0) target = $region57
    $region56: #{transformer_decoder_forward.3} parent=1 // pred_region
      %99 = vsyncadd [#allocation8], 0
      %s101 = sshll.u32 %s13, 4
      %s102 = int_to_ptr.hbm [resolvable:$true] %s101
      %s103 = sshll.u32 [#allocation9], 4
      %s104 = int_to_ptr.vmem [resolvable:$true] %s103
      %106 = dma.hbm_to_vmem [thread:$0]  %s102, 16, %s104, [#allocation8]
    $region57: #{transformer_decoder_forward.3} parent=1 // pred_fallthru
      _
    // Predicated region
    $region58: #{transformer_decoder_forward.3} parent=1 // pred_check
      _
    $region59: #{transformer_decoder_forward.3} parent=1 // pred_check_branch
      %108 = sbr.rel (0) target = $region61
    $region60: #{transformer_decoder_forward.3} parent=1 // pred_region
      _
    $region61: #{transformer_decoder_forward.3} parent=1 // pred_fallthru
      _
    // Predicated region
    $region62: #{transformer_decoder_forward.3} parent=1 // pred_check
      _
    $region63: #{transformer_decoder_forward.3} parent=1 // pred_check_branch
      %110 = sbr.rel (0) target = $region65
    $region64: #{transformer_decoder_forward.3} parent=1 // pred_region
      %112 = vsyncadd [#allocation11], 0
      %s114 = sshll.u32 %s15, 4
      %s115 = int_to_ptr.hbm [resolvable:$true] %s114
      %s116 = sshll.u32 [#allocation10], 4
      %s117 = int_to_ptr.vmem [resolvable:$true] %s116
      %119 = dma.hbm_to_vmem [thread:$0]  %s115, 16, %s117, [#allocation11]
    $region65: #{transformer_decoder_forward.3} parent=1 // pred_fallthru
      _
    // Predicated region
    $region66: #{transformer_decoder_forward.3} parent=1 // pred_check
      _
    $region67: #{transformer_decoder_forward.3} parent=1 // pred_check_branch
      %121 = sbr.rel (0) target = $region69
    $region68: #{transformer_decoder_forward.3} parent=1 // pred_region
      %123 = vsyncadd [#allocation11], 0
      %s125 = sshll.u32 %s16, 4
      %s126 = int_to_ptr.hbm [resolvable:$true] %s125
      %s127 = sshll.u32 [#allocation12], 4
      %s128 = int_to_ptr.vmem [resolvable:$true] %s127
      %130 = dma.hbm_to_vmem [thread:$0]  %s126, 16, %s128, [#allocation11]
    $region69: #{transformer_decoder_forward.3} parent=1 // pred_fallthru
      _
    // Predicated region
    $region70: #{transformer_decoder_forward.3} parent=1 // pred_check
      _
    $region71: #{transformer_decoder_forward.3} parent=1 // pred_check_branch
      %132 = sbr.rel (0) target = $region73
    $region72: #{transformer_decoder_forward.3} parent=1 // pred_region
      %134 = vsyncadd [#allocation14], 0
      %s136 = sshll.u32 %s17, 4
      %s137 = int_to_ptr.hbm [resolvable:$true] %s136
      %s138 = sshll.u32 [#allocation13], 4
      %s139 = int_to_ptr.vmem [resolvable:$true] %s138
      %141 = dma.hbm_to_vmem [thread:$0]  %s137, 16, %s139, [#allocation14]
    $region73: #{transformer_decoder_forward.3} parent=1 // pred_fallthru
      _
    // Predicated region
    $region74: #{transformer_decoder_forward.3} parent=1 // pred_check
      _
    $region75: #{transformer_decoder_forward.3} parent=1 // pred_check_branch
      %143 = sbr.rel (0) target = $region77
    $region76: #{transformer_decoder_forward.3} parent=1 // pred_region
      %145 = vsyncadd [#allocation14], 0
      %s147 = sshll.u32 %s18, 4
      %s148 = int_to_ptr.hbm [resolvable:$true] %s147
      %s149 = sshll.u32 [#allocation15], 4
      %s150 = int_to_ptr.vmem [resolvable:$true] %s149
      %152 = dma.hbm_to_vmem [thread:$0]  %s148, 16, %s150, [#allocation14]
    $region77: #{transformer_decoder_forward.3} parent=1 // pred_fallthru
      _
    // Predicated region
    $region78: #{transformer_decoder_forward.3} parent=1 // pred_check
      _
    $region79: #{transformer_decoder_forward.3} parent=1 // pred_check_branch
      %154 = sbr.rel (0) target = $region81
    $region80: #{transformer_decoder_forward.3} parent=1 // pred_region
      %156 = vsyncadd [#allocation17], 0
      %s158 = sshll.u32 %s19, 4
      %s159 = int_to_ptr.hbm [resolvable:$true] %s158
      %s160 = sshll.u32 [#allocation16], 4
      %s161 = int_to_ptr.vmem [resolvable:$true] %s160
      %163 = dma.hbm_to_vmem [thread:$0]  %s159, 16, %s161, [#allocation17]
    $region81: #{transformer_decoder_forward.3} parent=1 // pred_fallthru
      _
    // Predicated region
    $region82: #{transformer_decoder_forward.3} parent=1 // pred_check
      _
    $region83: #{transformer_decoder_forward.3} parent=1 // pred_check_branch
      %165 = sbr.rel (0) target = $region85
    $region84: #{transformer_decoder_forward.3} parent=1 // pred_region
      %167 = vsyncadd [#allocation17], 0
      %s169 = sshll.u32 %s20, 4
      %s170 = int_to_ptr.hbm [resolvable:$true] %s169
      %s171 = sshll.u32 [#allocation18], 4
      %s172 = int_to_ptr.vmem [resolvable:$true] %s171
      %174 = dma.hbm_to_vmem [thread:$0]  %s170, 16, %s172, [#allocation17]
    $region85: #{transformer_decoder_forward.3} parent=1 // pred_fallthru
      _
    // Predicated region
    $region86: #{transformer_decoder_forward.3} parent=1 // pred_check
      _
    $region87: #{transformer_decoder_forward.3} parent=1 // pred_check_branch
      %176 = sbr.rel (0) target = $region89
    $region88: #{transformer_decoder_forward.3} parent=1 // pred_region
      %178 = vsyncadd [#allocation20], 0
      %s180 = sshll.u32 %s21, 4
      %s181 = int_to_ptr.hbm [resolvable:$true] %s180
      %s182 = sshll.u32 [#allocation19], 4
      %s183 = int_to_ptr.vmem [resolvable:$true] %s182
      %185 = dma.hbm_to_vmem [thread:$0]  %s181, 16, %s183, [#allocation20]
    $region89: #{transformer_decoder_forward.3} parent=1 // pred_fallthru
      _
    // Predicated region
    $region90: #{transformer_decoder_forward.3} parent=1 // pred_check
      _
    $region91: #{transformer_decoder_forward.3} parent=1 // pred_check_branch
      %187 = sbr.rel (0) target = $region93
    $region92: #{transformer_decoder_forward.3} parent=1 // pred_region
      %189 = dma.done [#allocation3], 16
    $region93: #{transformer_decoder_forward.3} parent=1 // pred_fallthru
      _
    // Predicated region
    $region94: #{transformer_decoder_forward.3} parent=1 // pred_check
      _
    $region95: #{transformer_decoder_forward.3} parent=1 // pred_check_branch
      %191 = sbr.rel (0) target = $region97
    $region96: #{transformer_decoder_forward.3} parent=1 // pred_region
      %193 = dma.done [#allocation5], 16
    $region97: #{transformer_decoder_forward.3} parent=1 // pred_fallthru
      _
    // Predicated region
    $region98: #{transformer_decoder_forward.3} parent=1 // pred_check
      _
    $region99: #{transformer_decoder_forward.3} parent=1 // pred_check_branch
      %195 = sbr.rel (0) target = $region101
    $region100: #{transformer_decoder_forward.3} parent=1 // pred_region
      %197 = dma.done [#allocation5], 16
    $region101: #{transformer_decoder_forward.3} parent=1 // pred_fallthru
      _
    // Predicated region
    $region102: #{transformer_decoder_forward.3} parent=1 // pred_check
      _
    $region103: #{transformer_decoder_forward.3} parent=1 // pred_check_branch
      %199 = sbr.rel (0) target = $region105
    $region104: #{transformer_decoder_forward.3} parent=1 // pred_region
      %201 = dma.done [#allocation8], 16
    $region105: #{transformer_decoder_forward.3} parent=1 // pred_fallthru
      _
    // Predicated region
    $region106: #{transformer_decoder_forward.3} parent=1 // pred_check
      _
    $region107: #{transformer_decoder_forward.3} parent=1 // pred_check_branch
      %203 = sbr.rel (0) target = $region109
    $region108: #{transformer_decoder_forward.3} parent=1 // pred_region
      %205 = dma.done [#allocation8], 16
    $region109: #{transformer_decoder_forward.3} parent=1 // pred_fallthru
      _
    // Predicated region
    $region110: #{transformer_decoder_forward.3} parent=1 // pred_check
      _
    $region111: #{transformer_decoder_forward.3} parent=1 // pred_check_branch
      %207 = sbr.rel (0) target = $region113
    $region112: #{transformer_decoder_forward.3} parent=1 // pred_region
      %209 = dma.done [#allocation11], 16
    $region113: #{transformer_decoder_forward.3} parent=1 // pred_fallthru
      _
    // Predicated region
    $region114: #{transformer_decoder_forward.3} parent=1 // pred_check
      _
    $region115: #{transformer_decoder_forward.3} parent=1 // pred_check_branch
      %211 = sbr.rel (0) target = $region117
    $region116: #{transformer_decoder_forward.3} parent=1 // pred_region
      %213 = dma.done [#allocation11], 16
    $region117: #{transformer_decoder_forward.3} parent=1 // pred_fallthru
      _
    // Predicated region
    $region118: #{transformer_decoder_forward.3} parent=1 // pred_check
      _
    $region119: #{transformer_decoder_forward.3} parent=1 // pred_check_branch
      %215 = sbr.rel (0) target = $region121
    $region120: #{transformer_decoder_forward.3} parent=1 // pred_region
      %217 = dma.done [#allocation14], 16
    $region121: #{transformer_decoder_forward.3} parent=1 // pred_fallthru
      _
    // Predicated region
    $region122: #{transformer_decoder_forward.3} parent=1 // pred_check
      _
    $region123: #{transformer_decoder_forward.3} parent=1 // pred_check_branch
      %219 = sbr.rel (0) target = $region125
    $region124: #{transformer_decoder_forward.3} parent=1 // pred_region
      %221 = dma.done [#allocation14], 16
    $region125: #{transformer_decoder_forward.3} parent=1 // pred_fallthru
      _
    // Predicated region
    $region126: #{transformer_decoder_forward.3} parent=1 // pred_check
      _
    $region127: #{transformer_decoder_forward.3} parent=1 // pred_check_branch
      %223 = sbr.rel (0) target = $region129
    $region128: #{transformer_decoder_forward.3} parent=1 // pred_region
      %225 = dma.done [#allocation17], 16
    $region129: #{transformer_decoder_forward.3} parent=1 // pred_fallthru
      _
    // Predicated region
    $region130: #{transformer_decoder_forward.3} parent=1 // pred_check
      _
    $region131: #{transformer_decoder_forward.3} parent=1 // pred_check_branch
      %227 = sbr.rel (0) target = $region133
    $region132: #{transformer_decoder_forward.3} parent=1 // pred_region
      %229 = dma.done [#allocation17], 16
    $region133: #{transformer_decoder_forward.3} parent=1 // pred_fallthru
      _
    // Predicated region
    $region134: #{transformer_decoder_forward.3} parent=1 // pred_check
      _
    $region135: #{transformer_decoder_forward.3} parent=1 // pred_check_branch
      %231 = sbr.rel (0) target = $region137
    $region136: #{transformer_decoder_forward.3} parent=1 // pred_region
      %233 = dma.done [#allocation20], 16
    $region137: #{transformer_decoder_forward.3} parent=1 // pred_fallthru
      _
    %v234 = vld [vmem:[%s0] sm:$0xff]
    %v235 = vld [vmem:[%s0 + $0x8] sm:$0xff]
    %v236 = vld [vmem:[%s3] sm:$0xff]
    %v237 = vld [vmem:[%s3 + $0x8] sm:$0xff]
    %v238 = vld [vmem:[%s1] sm:$0xff]
    %v239 = vld [vmem:[%s1 + $0x8] sm:$0xff]
    %v240 = vld [vmem:[%s1 + $0x10] sm:$0xff]
    %v241 = vld [vmem:[%s1 + $0x18] sm:$0xff]
    %v242 = vld [vmem:[%s2] sm:$0xff]
    %v243 = vld [vmem:[%s2 + $0x8] sm:$0xff]
    %v244 = vld [vmem:[%s2 + $0x10] sm:$0xff]
    %v245 = vld [vmem:[%s2 + $0x18] sm:$0xff]
    %v246 = vadd.f32 %v234, %v236
    %v247 = vadd.f32 %v235, %v237
    %v248 = vld [vmem:[%s4] sm:$0xff]
    %v249 = vld [vmem:[%s4 + $0x8] sm:$0xff]
    %v250 = vld [vmem:[%s4 + $0x10] sm:$0xff]
    %v251 = vld [vmem:[%s4 + $0x18] sm:$0xff]
    %v252 = vld [vmem:[#allocation2] sm:$0x1]
    %v253 = vld [vmem:[%s6] sm:$0xff]
    %v254 = vld [vmem:[%s6 + $0x8] sm:$0xff]
    %v255 = vld [vmem:[%s6 + $0x10] sm:$0xff]
    %v256 = vld [vmem:[%s6 + $0x18] sm:$0xff]
    %v257 = vld [vmem:[#allocation4] sm:$0x1]
    %v259 = vperm.slane %v252, 0
    %vm261 = vcmask 261120
    %v263 = vsel %vm261, %v246, 0
    %v266 = vsel %vm261, %v247, 0
    %268 = vmatpush.msra.mxu0 0.0
    %269 = vmatpush.msra.mxu0 0.0
    %270 = vmatpush.msra.mxu0 0.0
    %271 = vmatpush.msra.mxu0 0.0
    %272 = vmatpush.msra.mxu0 0.0
    %273 = vmatpush.msra.mxu0 0.0
    %274 = vmatpush.msra.mxu0 0.0
    %275 = vmatpush.msra.mxu0 0.0
    %276 = vmatpush.msra.mxu0 0.0
    %277 = vmatpush.msra.mxu0 0.0
    %278 = vmatpush.msra.mxu0 0.0
    %279 = vmatpush.msra.mxu0 0.0
    %280 = vmatpush.msra.mxu0 %v251
    %281 = vmatpush.msra.mxu0 %v250
    %282 = vmatpush.msra.mxu0 %v249
    %283 = vmatpush.msra.mxu0 %v248
    %284 = vmatmul.f32.gmra.mxu0 %v263
    %v285 = vpop.f32.mrf.mxu0
    %v286 = vadd.f32 %v259, %v285
    %287 = vmatmul.f32.gmra.mxu0 %v266
    %v288 = vpop.f32.mrf.mxu0
    %v289 = vadd.f32 %v259, %v288
    %290 = vdwg.mxu0
    %295 = vrot.lane.b32.xlu0 %v248, 64
    %v296 = vpop.permute.xlu0 %295
    %297 = vrot.lane.b32.xlu0 %v249, 64
    %v298 = vpop.permute.xlu0 %297
    %299 = vrot.lane.b32.xlu0 %v250, 64
    %v300 = vpop.permute.xlu0 %299
    %301 = vrot.lane.b32.xlu0 %v251, 64
    %v302 = vpop.permute.xlu0 %301
    %307 = vrot.lane.b32.xlu0 %v259, 64
    %v308 = vpop.permute.xlu0 %307
    %v311 = vsel %vm261, %v234, 0
    %v314 = vsel %vm261, %v235, 0
    %316 = vmatpush.msra.mxu0 0.0
    %317 = vmatpush.msra.mxu0 0.0
    %318 = vmatpush.msra.mxu0 0.0
    %319 = vmatpush.msra.mxu0 0.0
    %320 = vmatpush.msra.mxu0 0.0
    %321 = vmatpush.msra.mxu0 0.0
    %322 = vmatpush.msra.mxu0 0.0
    %323 = vmatpush.msra.mxu0 0.0
    %324 = vmatpush.msra.mxu0 0.0
    %325 = vmatpush.msra.mxu0 0.0
    %326 = vmatpush.msra.mxu0 0.0
    %327 = vmatpush.msra.mxu0 0.0
    %328 = vmatpush.msra.mxu0 %v302
    %329 = vmatpush.msra.mxu0 %v300
    %330 = vmatpush.msra.mxu0 %v298
    %331 = vmatpush.msra.mxu0 %v296
    %332 = vmatmul.f32.gmra.mxu0 %v311
    %v333 = vpop.f32.mrf.mxu0
    %v334 = vadd.f32 %v308, %v333
    %335 = vmatmul.f32.gmra.mxu0 %v314
    %v336 = vpop.f32.mrf.mxu0
    %v337 = vadd.f32 %v308, %v336
    %338 = vdwg.mxu0
    %v339 = vmul.f32 %v286, 0.35355338
    %v340 = vmul.f32 %v289, 0.35355338
    %342 = vrot.lane.b32.xlu0 %v286, 96
    %v343 = vpop.permute.xlu0 %342
    %vm344 = vcmask 64512
    %v346 = vsel %vm344, %v339, 0
    %v348 = vsel %vm344, %v343, 0
    %350 = vmatpush.xpose.msra.mxu0 0.0
    %351 = vmatpush.xpose.msra.mxu0 0.0
    %352 = vmatpush.xpose.msra.mxu0 0.0
    %353 = vmatpush.xpose.msra.mxu0 0.0
    %354 = vmatpush.xpose.msra.mxu0 0.0
    %355 = vmatpush.xpose.msra.mxu0 0.0
    %356 = vmatpush.xpose.msra.mxu0 0.0
    %357 = vmatpush.xpose.msra.mxu0 0.0
    %358 = vmatpush.xpose.msra.mxu0 0.0
    %359 = vmatpush.xpose.msra.mxu0 0.0
    %360 = vmatpush.xpose.msra.mxu0 0.0
    %361 = vmatpush.xpose.msra.mxu0 0.0
    %362 = vmatpush.xpose.msra.mxu0 0.0
    %363 = vmatpush.xpose.msra.mxu0 0.0
    %364 = vmatpush.xpose.msra.mxu0 0.0
    %365 = vmatpush.xpose.msra.mxu0 %v348
    %366 = vmatmul.f32.gmra.mxu0 %v346
    %v367 = vpop.f32.mrf.mxu0
    %v368 = vadd.f32 0.0, %v367
    %369 = vdwg.mxu0
    %371 = vrot.lane.b32.xlu0 %v289, 96
    %v372 = vpop.permute.xlu0 %371
    %v374 = vsel %vm344, %v340, 0
    %v376 = vsel %vm344, %v372, 0
    %378 = vmatpush.xpose.msra.mxu0 0.0
    %379 = vmatpush.xpose.msra.mxu0 0.0
    %380 = vmatpush.xpose.msra.mxu0 0.0
    %381 = vmatpush.xpose.msra.mxu0 0.0
    %382 = vmatpush.xpose.msra.mxu0 0.0
    %383 = vmatpush.xpose.msra.mxu0 0.0
    %384 = vmatpush.xpose.msra.mxu0 0.0
    %385 = vmatpush.xpose.msra.mxu0 0.0
    %386 = vmatpush.xpose.msra.mxu0 0.0
    %387 = vmatpush.xpose.msra.mxu0 0.0
    %388 = vmatpush.xpose.msra.mxu0 0.0
    %389 = vmatpush.xpose.msra.mxu0 0.0
    %390 = vmatpush.xpose.msra.mxu0 0.0
    %391 = vmatpush.xpose.msra.mxu0 0.0
    %392 = vmatpush.xpose.msra.mxu0 0.0
    %393 = vmatpush.xpose.msra.mxu0 %v376
    %394 = vmatmul.f32.gmra.mxu0 %v374
    %v395 = vpop.f32.mrf.mxu0
    %v396 = vadd.f32 0.0, %v395
    %397 = vdwg.mxu0
    %v398 = vsel %vm344, %v368, -inf
    %399 = vmax.xlane.f32.xlu0 %v398
    %v400 = vpop.xlane.xlu0 %399
    %v401 = vsel %vm344, %v396, -inf
    %402 = vmax.xlane.f32.xlu0 %v401
    %v403 = vpop.xlane.xlu0 %402
    %v404 = vsub.f32 %v368, %v400
    %v405 = vsub.f32 %v396, %v403
    %v406 = vmul.f32 %v404, 1.442695
    %v407 = vpow.pop %v406
    %v408 = vmul.f32 %v405, 1.442695
    %v409 = vpow.pop %v408
    %v410 = vsel %vm344, %v407, 0.0
    %411 = vadd.xlane.f32.xlu0 %v410
    %v412 = vpop.xlane.xlu0 %411
    %v413 = vsel %vm344, %v409, 0.0
    %414 = vadd.xlane.f32.xlu0 %v413
    %v415 = vpop.xlane.xlu0 %414
    %v416 = vrcp.pop %v412
    %v417 = vrcp.pop %v415
    %v418 = vmul.f32 %v407, %v416
    %v419 = vmul.f32 %v409, %v417
    %v421 = vsel %vm344, %v418, 0
    %423 = vmatpush.msra.mxu0 0.0
    %424 = vmatpush.msra.mxu0 0.0
    %425 = vmatpush.msra.mxu0 0.0
    %426 = vmatpush.msra.mxu0 0.0
    %427 = vmatpush.msra.mxu0 0.0
    %428 = vmatpush.msra.mxu0 0.0
    %429 = vmatpush.msra.mxu0 0.0
    %430 = vmatpush.msra.mxu0 0.0
    %431 = vmatpush.msra.mxu0 0.0
    %432 = vmatpush.msra.mxu0 0.0
    %433 = vmatpush.msra.mxu0 0.0
    %434 = vmatpush.msra.mxu0 0.0
    %435 = vmatpush.msra.mxu0 0.0
    %436 = vmatpush.msra.mxu0 0.0
    %437 = vmatpush.msra.mxu0 0.0
    %438 = vmatpush.msra.mxu0 %v334
    %439 = vmatmul.f32.gmra.mxu0 %v421
    %v440 = vpop.f32.mrf.mxu0
    %v441 = vadd.f32 0.0, %v440
    %442 = vdwg.mxu0
    %v444 = vsel %vm344, %v419, 0
    %446 = vmatpush.msra.mxu0 0.0
    %447 = vmatpush.msra.mxu0 0.0
    %448 = vmatpush.msra.mxu0 0.0
    %449 = vmatpush.msra.mxu0 0.0
    %450 = vmatpush.msra.mxu0 0.0
    %451 = vmatpush.msra.mxu0 0.0
    %452 = vmatpush.msra.mxu0 0.0
    %453 = vmatpush.msra.mxu0 0.0
    %454 = vmatpush.msra.mxu0 0.0
    %455 = vmatpush.msra.mxu0 0.0
    %456 = vmatpush.msra.mxu0 0.0
    %457 = vmatpush.msra.mxu0 0.0
    %458 = vmatpush.msra.mxu0 0.0
    %459 = vmatpush.msra.mxu0 0.0
    %460 = vmatpush.msra.mxu0 0.0
    %461 = vmatpush.msra.mxu0 %v337
    %462 = vmatmul.f32.gmra.mxu0 %v444
    %v463 = vpop.f32.mrf.mxu0
    %v464 = vadd.f32 0.0, %v463
    %465 = vdwg.mxu0
    %466 = vrot.lane.b32.xlu0 %v339, 120
    %v467 = vpop.permute.xlu0 %466
    %468 = vrot.lane.b32.xlu0 %v286, 88
    %v469 = vpop.permute.xlu0 %468
    %v470 = vsel %vm344, %v467, 0
    %v472 = vsel %vm344, %v469, 0
    %474 = vmatpush.xpose.msra.mxu0 0.0
    %475 = vmatpush.xpose.msra.mxu0 0.0
    %476 = vmatpush.xpose.msra.mxu0 0.0
    %477 = vmatpush.xpose.msra.mxu0 0.0
    %478 = vmatpush.xpose.msra.mxu0 0.0
    %479 = vmatpush.xpose.msra.mxu0 0.0
    %480 = vmatpush.xpose.msra.mxu0 0.0
    %481 = vmatpush.xpose.msra.mxu0 0.0
    %482 = vmatpush.xpose.msra.mxu0 0.0
    %483 = vmatpush.xpose.msra.mxu0 0.0
    %484 = vmatpush.xpose.msra.mxu0 0.0
    %485 = vmatpush.xpose.msra.mxu0 0.0
    %486 = vmatpush.xpose.msra.mxu0 0.0
    %487 = vmatpush.xpose.msra.mxu0 0.0
    %488 = vmatpush.xpose.msra.mxu0 0.0
    %489 = vmatpush.xpose.msra.mxu0 %v472
    %490 = vmatmul.f32.gmra.mxu0 %v470
    %v491 = vpop.f32.mrf.mxu0
    %v492 = vadd.f32 0.0, %v491
    %493 = vdwg.mxu0
    %494 = vrot.lane.b32.xlu0 %v340, 120
    %v495 = vpop.permute.xlu0 %494
    %496 = vrot.lane.b32.xlu0 %v289, 88
    %v497 = vpop.permute.xlu0 %496
    %v498 = vsel %vm344, %v495, 0
    %v500 = vsel %vm344, %v497, 0
    %502 = vmatpush.xpose.msra.mxu0 0.0
    %503 = vmatpush.xpose.msra.mxu0 0.0
    %504 = vmatpush.xpose.msra.mxu0 0.0
    %505 = vmatpush.xpose.msra.mxu0 0.0
    %506 = vmatpush.xpose.msra.mxu0 0.0
    %507 = vmatpush.xpose.msra.mxu0 0.0
    %508 = vmatpush.xpose.msra.mxu0 0.0
    %509 = vmatpush.xpose.msra.mxu0 0.0
    %510 = vmatpush.xpose.msra.mxu0 0.0
    %511 = vmatpush.xpose.msra.mxu0 0.0
    %512 = vmatpush.xpose.msra.mxu0 0.0
    %513 = vmatpush.xpose.msra.mxu0 0.0
    %514 = vmatpush.xpose.msra.mxu0 0.0
    %515 = vmatpush.xpose.msra.mxu0 0.0
    %516 = vmatpush.xpose.msra.mxu0 0.0
    %517 = vmatpush.xpose.msra.mxu0 %v500
    %518 = vmatmul.f32.gmra.mxu0 %v498
    %v519 = vpop.f32.mrf.mxu0
    %v520 = vadd.f32 0.0, %v519
    %521 = vdwg.mxu0
    %v522 = vsel %vm344, %v492, -inf
    %523 = vmax.xlane.f32.xlu0 %v522
    %v524 = vpop.xlane.xlu0 %523
    %v525 = vsel %vm344, %v520, -inf
    %526 = vmax.xlane.f32.xlu0 %v525
    %v527 = vpop.xlane.xlu0 %526
    %v528 = vsub.f32 %v492, %v524
    %v529 = vsub.f32 %v520, %v527
    %v530 = vmul.f32 %v528, 1.442695
    %v531 = vpow.pop %v530
    %v532 = vmul.f32 %v529, 1.442695
    %v533 = vpow.pop %v532
    %v534 = vsel %vm344, %v531, 0.0
    %535 = vadd.xlane.f32.xlu0 %v534
    %v536 = vpop.xlane.xlu0 %535
    %v537 = vsel %vm344, %v533, 0.0
    %538 = vadd.xlane.f32.xlu0 %v537
    %v539 = vpop.xlane.xlu0 %538
    %v540 = vrcp.pop %v536
    %v541 = vrcp.pop %v539
    %v542 = vmul.f32 %v531, %v540
    %v543 = vmul.f32 %v533, %v541
    %545 = vrot.lane.b32.xlu0 %v334, 120
    %v546 = vpop.permute.xlu0 %545
    %v549 = vsel %vm344, %v542, 0
    %551 = vmatpush.msra.mxu0 0.0
    %552 = vmatpush.msra.mxu0 0.0
    %553 = vmatpush.msra.mxu0 0.0
    %554 = vmatpush.msra.mxu0 0.0
    %555 = vmatpush.msra.mxu0 0.0
    %556 = vmatpush.msra.mxu0 0.0
    %557 = vmatpush.msra.mxu0 0.0
    %558 = vmatpush.msra.mxu0 0.0
    %559 = vmatpush.msra.mxu0 0.0
    %560 = vmatpush.msra.mxu0 0.0
    %561 = vmatpush.msra.mxu0 0.0
    %562 = vmatpush.msra.mxu0 0.0
    %563 = vmatpush.msra.mxu0 0.0
    %564 = vmatpush.msra.mxu0 0.0
    %565 = vmatpush.msra.mxu0 0.0
    %566 = vmatpush.msra.mxu0 %v546
    %567 = vmatmul.f32.gmra.mxu0 %v549
    %v568 = vpop.f32.mrf.mxu0
    %v569 = vadd.f32 0.0, %v568
    %570 = vdwg.mxu0
    %572 = vrot.lane.b32.xlu0 %v337, 120
    %v573 = vpop.permute.xlu0 %572
    %v576 = vsel %vm344, %v543, 0
    %578 = vmatpush.msra.mxu0 0.0
    %579 = vmatpush.msra.mxu0 0.0
    %580 = vmatpush.msra.mxu0 0.0
    %581 = vmatpush.msra.mxu0 0.0
    %582 = vmatpush.msra.mxu0 0.0
    %583 = vmatpush.msra.mxu0 0.0
    %584 = vmatpush.msra.mxu0 0.0
    %585 = vmatpush.msra.mxu0 0.0
    %586 = vmatpush.msra.mxu0 0.0
    %587 = vmatpush.msra.mxu0 0.0
    %588 = vmatpush.msra.mxu0 0.0
    %589 = vmatpush.msra.mxu0 0.0
    %590 = vmatpush.msra.mxu0 0.0
    %591 = vmatpush.msra.mxu0 0.0
    %592 = vmatpush.msra.mxu0 0.0
    %593 = vmatpush.msra.mxu0 %v573
    %594 = vmatmul.f32.gmra.mxu0 %v576
    %v595 = vpop.f32.mrf.mxu0
    %v596 = vadd.f32 0.0, %v595
    %597 = vdwg.mxu0
    %v599 = vsel %vm344, %v569, 0
    %v602 = vsel %vm344, %v596, 0
    %604 = vmatpush.msra.mxu0 0.0
    %605 = vmatpush.msra.mxu0 0.0
    %606 = vmatpush.msra.mxu0 0.0
    %607 = vmatpush.msra.mxu0 0.0
    %608 = vmatpush.msra.mxu0 0.0
    %609 = vmatpush.msra.mxu0 0.0
    %610 = vmatpush.msra.mxu0 0.0
    %611 = vmatpush.msra.mxu0 0.0
    %612 = vmatpush.msra.mxu0 0.0
    %613 = vmatpush.msra.mxu0 0.0
    %614 = vmatpush.msra.mxu0 0.0
    %615 = vmatpush.msra.mxu0 0.0
    %616 = vmatpush.msra.mxu0 0.0
    %617 = vmatpush.msra.mxu0 0.0
    %618 = vmatpush.msra.mxu0 0.0
    %619 = vmatpush.msra.mxu0 %v254
    %620 = vmatmul.f32.gmra.mxu0 %v599
    %v621 = vpop.f32.mrf.mxu0
    %v622 = vadd.f32 0.0, %v621
    %623 = vmatmul.f32.gmra.mxu0 %v602
    %v624 = vpop.f32.mrf.mxu0
    %v625 = vadd.f32 0.0, %v624
    %626 = vdwg.mxu0
    %v628 = vsel %vm344, %v441, 0
    %v631 = vsel %vm344, %v464, 0
    %633 = vmatpush.msra.mxu0 0.0
    %634 = vmatpush.msra.mxu0 0.0
    %635 = vmatpush.msra.mxu0 0.0
    %636 = vmatpush.msra.mxu0 0.0
    %637 = vmatpush.msra.mxu0 0.0
    %638 = vmatpush.msra.mxu0 0.0
    %639 = vmatpush.msra.mxu0 0.0
    %640 = vmatpush.msra.mxu0 0.0
    %641 = vmatpush.msra.mxu0 0.0
    %642 = vmatpush.msra.mxu0 0.0
    %643 = vmatpush.msra.mxu0 0.0
    %644 = vmatpush.msra.mxu0 0.0
    %645 = vmatpush.msra.mxu0 0.0
    %646 = vmatpush.msra.mxu0 0.0
    %647 = vmatpush.msra.mxu0 0.0
    %648 = vmatpush.msra.mxu0 %v253
    %649 = vmatmul.f32.gmra.mxu0 %v628
    %v650 = vpop.f32.mrf.mxu0
    %v651 = vadd.f32 %v622, %v650
    %652 = vmatmul.f32.gmra.mxu0 %v631
    %v653 = vpop.f32.mrf.mxu0
    %v654 = vadd.f32 %v625, %v653
    %655 = vdwg.mxu0
    %656 = vrot.lane.b32.xlu0 %v339, 112
    %v657 = vpop.permute.xlu0 %656
    %658 = vrot.lane.b32.xlu0 %v286, 80
    %v659 = vpop.permute.xlu0 %658
    %v660 = vsel %vm344, %v657, 0
    %v662 = vsel %vm344, %v659, 0
    %664 = vmatpush.xpose.msra.mxu0 0.0
    %665 = vmatpush.xpose.msra.mxu0 0.0
    %666 = vmatpush.xpose.msra.mxu0 0.0
    %667 = vmatpush.xpose.msra.mxu0 0.0
    %668 = vmatpush.xpose.msra.mxu0 0.0
    %669 = vmatpush.xpose.msra.mxu0 0.0
    %670 = vmatpush.xpose.msra.mxu0 0.0
    %671 = vmatpush.xpose.msra.mxu0 0.0
    %672 = vmatpush.xpose.msra.mxu0 0.0
    %673 = vmatpush.xpose.msra.mxu0 0.0
    %674 = vmatpush.xpose.msra.mxu0 0.0
    %675 = vmatpush.xpose.msra.mxu0 0.0
    %676 = vmatpush.xpose.msra.mxu0 0.0
    %677 = vmatpush.xpose.msra.mxu0 0.0
    %678 = vmatpush.xpose.msra.mxu0 0.0
    %679 = vmatpush.xpose.msra.mxu0 %v662
    %680 = vmatmul.f32.gmra.mxu0 %v660
    %v681 = vpop.f32.mrf.mxu0
    %v682 = vadd.f32 0.0, %v681
    %683 = vdwg.mxu0
    %684 = vrot.lane.b32.xlu0 %v340, 112
    %v685 = vpop.permute.xlu0 %684
    %686 = vrot.lane.b32.xlu0 %v289, 80
    %v687 = vpop.permute.xlu0 %686
    %v688 = vsel %vm344, %v685, 0
    %v690 = vsel %vm344, %v687, 0
    %692 = vmatpush.xpose.msra.mxu0 0.0
    %693 = vmatpush.xpose.msra.mxu0 0.0
    %694 = vmatpush.xpose.msra.mxu0 0.0
    %695 = vmatpush.xpose.msra.mxu0 0.0
    %696 = vmatpush.xpose.msra.mxu0 0.0
    %697 = vmatpush.xpose.msra.mxu0 0.0
    %698 = vmatpush.xpose.msra.mxu0 0.0
    %699 = vmatpush.xpose.msra.mxu0 0.0
    %700 = vmatpush.xpose.msra.mxu0 0.0
    %701 = vmatpush.xpose.msra.mxu0 0.0
    %702 = vmatpush.xpose.msra.mxu0 0.0
    %703 = vmatpush.xpose.msra.mxu0 0.0
    %704 = vmatpush.xpose.msra.mxu0 0.0
    %705 = vmatpush.xpose.msra.mxu0 0.0
    %706 = vmatpush.xpose.msra.mxu0 0.0
    %707 = vmatpush.xpose.msra.mxu0 %v690
    %708 = vmatmul.f32.gmra.mxu0 %v688
    %v709 = vpop.f32.mrf.mxu0
    %v710 = vadd.f32 0.0, %v709
    %711 = vdwg.mxu0
    %v712 = vsel %vm344, %v682, -inf
    %713 = vmax.xlane.f32.xlu0 %v712
    %v714 = vpop.xlane.xlu0 %713
    %v715 = vsel %vm344, %v710, -inf
    %716 = vmax.xlane.f32.xlu0 %v715
    %v717 = vpop.xlane.xlu0 %716
    %v718 = vsub.f32 %v682, %v714
    %v719 = vsub.f32 %v710, %v717
    %v720 = vmul.f32 %v718, 1.442695
    %v721 = vpow.pop %v720
    %v722 = vmul.f32 %v719, 1.442695
    %v723 = vpow.pop %v722
    %v724 = vsel %vm344, %v721, 0.0
    %725 = vadd.xlane.f32.xlu0 %v724
    %v726 = vpop.xlane.xlu0 %725
    %v727 = vsel %vm344, %v723, 0.0
    %728 = vadd.xlane.f32.xlu0 %v727
    %v729 = vpop.xlane.xlu0 %728
    %v730 = vrcp.pop %v726
    %v731 = vrcp.pop %v729
    %v732 = vmul.f32 %v721, %v730
    %v733 = vmul.f32 %v723, %v731
    %734 = vrot.lane.b32.xlu0 %v334, 112
    %v735 = vpop.permute.xlu0 %734
    %v738 = vsel %vm344, %v732, 0
    %740 = vmatpush.msra.mxu0 0.0
    %741 = vmatpush.msra.mxu0 0.0
    %742 = vmatpush.msra.mxu0 0.0
    %743 = vmatpush.msra.mxu0 0.0
    %744 = vmatpush.msra.mxu0 0.0
    %745 = vmatpush.msra.mxu0 0.0
    %746 = vmatpush.msra.mxu0 0.0
    %747 = vmatpush.msra.mxu0 0.0
    %748 = vmatpush.msra.mxu0 0.0
    %749 = vmatpush.msra.mxu0 0.0
    %750 = vmatpush.msra.mxu0 0.0
    %751 = vmatpush.msra.mxu0 0.0
    %752 = vmatpush.msra.mxu0 0.0
    %753 = vmatpush.msra.mxu0 0.0
    %754 = vmatpush.msra.mxu0 0.0
    %755 = vmatpush.msra.mxu0 %v735
    %756 = vmatmul.f32.gmra.mxu0 %v738
    %v757 = vpop.f32.mrf.mxu0
    %v758 = vadd.f32 0.0, %v757
    %759 = vdwg.mxu0
    %760 = vrot.lane.b32.xlu0 %v337, 112
    %v761 = vpop.permute.xlu0 %760
    %v764 = vsel %vm344, %v733, 0
    %766 = vmatpush.msra.mxu0 0.0
    %767 = vmatpush.msra.mxu0 0.0
    %768 = vmatpush.msra.mxu0 0.0
    %769 = vmatpush.msra.mxu0 0.0
    %770 = vmatpush.msra.mxu0 0.0
    %771 = vmatpush.msra.mxu0 0.0
    %772 = vmatpush.msra.mxu0 0.0
    %773 = vmatpush.msra.mxu0 0.0
    %774 = vmatpush.msra.mxu0 0.0
    %775 = vmatpush.msra.mxu0 0.0
    %776 = vmatpush.msra.mxu0 0.0
    %777 = vmatpush.msra.mxu0 0.0
    %778 = vmatpush.msra.mxu0 0.0
    %779 = vmatpush.msra.mxu0 0.0
    %780 = vmatpush.msra.mxu0 0.0
    %781 = vmatpush.msra.mxu0 %v761
    %782 = vmatmul.f32.gmra.mxu0 %v764
    %v783 = vpop.f32.mrf.mxu0
    %v784 = vadd.f32 0.0, %v783
    %785 = vdwg.mxu0
    %v787 = vsel %vm344, %v758, 0
    %v790 = vsel %vm344, %v784, 0
    %792 = vmatpush.msra.mxu0 0.0
    %793 = vmatpush.msra.mxu0 0.0
    %794 = vmatpush.msra.mxu0 0.0
    %795 = vmatpush.msra.mxu0 0.0
    %796 = vmatpush.msra.mxu0 0.0
    %797 = vmatpush.msra.mxu0 0.0
    %798 = vmatpush.msra.mxu0 0.0
    %799 = vmatpush.msra.mxu0 0.0
    %800 = vmatpush.msra.mxu0 0.0
    %801 = vmatpush.msra.mxu0 0.0
    %802 = vmatpush.msra.mxu0 0.0
    %803 = vmatpush.msra.mxu0 0.0
    %804 = vmatpush.msra.mxu0 0.0
    %805 = vmatpush.msra.mxu0 0.0
    %806 = vmatpush.msra.mxu0 0.0
    %807 = vmatpush.msra.mxu0 %v255
    %808 = vmatmul.f32.gmra.mxu0 %v787
    %v809 = vpop.f32.mrf.mxu0
    %v810 = vadd.f32 0.0, %v809
    %811 = vmatmul.f32.gmra.mxu0 %v790
    %v812 = vpop.f32.mrf.mxu0
    %v813 = vadd.f32 0.0, %v812
    %814 = vdwg.mxu0
    %v815 = vadd.f32 %v651, %v810
    %v816 = vadd.f32 %v654, %v813
    %817 = vrot.lane.b32.xlu0 %v339, 104
    %v818 = vpop.permute.xlu0 %817
    %819 = vrot.lane.b32.xlu0 %v286, 72
    %v820 = vpop.permute.xlu0 %819
    %v821 = vsel %vm344, %v818, 0
    %v823 = vsel %vm344, %v820, 0
    %825 = vmatpush.xpose.msra.mxu0 0.0
    %826 = vmatpush.xpose.msra.mxu0 0.0
    %827 = vmatpush.xpose.msra.mxu0 0.0
    %828 = vmatpush.xpose.msra.mxu0 0.0
    %829 = vmatpush.xpose.msra.mxu0 0.0
    %830 = vmatpush.xpose.msra.mxu0 0.0
    %831 = vmatpush.xpose.msra.mxu0 0.0
    %832 = vmatpush.xpose.msra.mxu0 0.0
    %833 = vmatpush.xpose.msra.mxu0 0.0
    %834 = vmatpush.xpose.msra.mxu0 0.0
    %835 = vmatpush.xpose.msra.mxu0 0.0
    %836 = vmatpush.xpose.msra.mxu0 0.0
    %837 = vmatpush.xpose.msra.mxu0 0.0
    %838 = vmatpush.xpose.msra.mxu0 0.0
    %839 = vmatpush.xpose.msra.mxu0 0.0
    %840 = vmatpush.xpose.msra.mxu0 %v823
    %841 = vmatmul.f32.gmra.mxu0 %v821
    %v842 = vpop.f32.mrf.mxu0
    %v843 = vadd.f32 0.0, %v842
    %844 = vdwg.mxu0
    %845 = vrot.lane.b32.xlu0 %v340, 104
    %v846 = vpop.permute.xlu0 %845
    %847 = vrot.lane.b32.xlu0 %v289, 72
    %v848 = vpop.permute.xlu0 %847
    %v849 = vsel %vm344, %v846, 0
    %v851 = vsel %vm344, %v848, 0
    %853 = vmatpush.xpose.msra.mxu0 0.0
    %854 = vmatpush.xpose.msra.mxu0 0.0
    %855 = vmatpush.xpose.msra.mxu0 0.0
    %856 = vmatpush.xpose.msra.mxu0 0.0
    %857 = vmatpush.xpose.msra.mxu0 0.0
    %858 = vmatpush.xpose.msra.mxu0 0.0
    %859 = vmatpush.xpose.msra.mxu0 0.0
    %860 = vmatpush.xpose.msra.mxu0 0.0
    %861 = vmatpush.xpose.msra.mxu0 0.0
    %862 = vmatpush.xpose.msra.mxu0 0.0
    %863 = vmatpush.xpose.msra.mxu0 0.0
    %864 = vmatpush.xpose.msra.mxu0 0.0
    %865 = vmatpush.xpose.msra.mxu0 0.0
    %866 = vmatpush.xpose.msra.mxu0 0.0
    %867 = vmatpush.xpose.msra.mxu0 0.0
    %868 = vmatpush.xpose.msra.mxu0 %v851
    %869 = vmatmul.f32.gmra.mxu0 %v849
    %v870 = vpop.f32.mrf.mxu0
    %v871 = vadd.f32 0.0, %v870
    %872 = vdwg.mxu0
    %v873 = vsel %vm344, %v843, -inf
    %874 = vmax.xlane.f32.xlu0 %v873
    %v875 = vpop.xlane.xlu0 %874
    %v876 = vsel %vm344, %v871, -inf
    %877 = vmax.xlane.f32.xlu0 %v876
    %v878 = vpop.xlane.xlu0 %877
    %v879 = vsub.f32 %v843, %v875
    %v880 = vsub.f32 %v871, %v878
    %v881 = vmul.f32 %v879, 1.442695
    %v882 = vpow.pop %v881
    %v883 = vmul.f32 %v880, 1.442695
    %v884 = vpow.pop %v883
    %v885 = vsel %vm344, %v882, 0.0
    %886 = vadd.xlane.f32.xlu0 %v885
    %v887 = vpop.xlane.xlu0 %886
    %v888 = vsel %vm344, %v884, 0.0
    %889 = vadd.xlane.f32.xlu0 %v888
    %v890 = vpop.xlane.xlu0 %889
    %v891 = vrcp.pop %v887
    %v892 = vrcp.pop %v890
    %v893 = vmul.f32 %v882, %v891
    %v894 = vmul.f32 %v884, %v892
    %895 = vrot.lane.b32.xlu0 %v334, 104
    %v896 = vpop.permute.xlu0 %895
    %v899 = vsel %vm344, %v893, 0
    %901 = vmatpush.msra.mxu0 0.0
    %902 = vmatpush.msra.mxu0 0.0
    %903 = vmatpush.msra.mxu0 0.0
    %904 = vmatpush.msra.mxu0 0.0
    %905 = vmatpush.msra.mxu0 0.0
    %906 = vmatpush.msra.mxu0 0.0
    %907 = vmatpush.msra.mxu0 0.0
    %908 = vmatpush.msra.mxu0 0.0
    %909 = vmatpush.msra.mxu0 0.0
    %910 = vmatpush.msra.mxu0 0.0
    %911 = vmatpush.msra.mxu0 0.0
    %912 = vmatpush.msra.mxu0 0.0
    %913 = vmatpush.msra.mxu0 0.0
    %914 = vmatpush.msra.mxu0 0.0
    %915 = vmatpush.msra.mxu0 0.0
    %916 = vmatpush.msra.mxu0 %v896
    %917 = vmatmul.f32.gmra.mxu0 %v899
    %v918 = vpop.f32.mrf.mxu0
    %v919 = vadd.f32 0.0, %v918
    %920 = vdwg.mxu0
    %921 = vrot.lane.b32.xlu0 %v337, 104
    %v922 = vpop.permute.xlu0 %921
    %v925 = vsel %vm344, %v894, 0
    %927 = vmatpush.msra.mxu0 0.0
    %928 = vmatpush.msra.mxu0 0.0
    %929 = vmatpush.msra.mxu0 0.0
    %930 = vmatpush.msra.mxu0 0.0
    %931 = vmatpush.msra.mxu0 0.0
    %932 = vmatpush.msra.mxu0 0.0
    %933 = vmatpush.msra.mxu0 0.0
    %934 = vmatpush.msra.mxu0 0.0
    %935 = vmatpush.msra.mxu0 0.0
    %936 = vmatpush.msra.mxu0 0.0
    %937 = vmatpush.msra.mxu0 0.0
    %938 = vmatpush.msra.mxu0 0.0
    %939 = vmatpush.msra.mxu0 0.0
    %940 = vmatpush.msra.mxu0 0.0
    %941 = vmatpush.msra.mxu0 0.0
    %942 = vmatpush.msra.mxu0 %v922
    %943 = vmatmul.f32.gmra.mxu0 %v925
    %v944 = vpop.f32.mrf.mxu0
    %v945 = vadd.f32 0.0, %v944
    %946 = vdwg.mxu0
    %v948 = vsel %vm344, %v919, 0
    %v951 = vsel %vm344, %v945, 0
    %953 = vmatpush.msra.mxu0 0.0
    %954 = vmatpush.msra.mxu0 0.0
    %955 = vmatpush.msra.mxu0 0.0
    %956 = vmatpush.msra.mxu0 0.0
    %957 = vmatpush.msra.mxu0 0.0
    %958 = vmatpush.msra.mxu0 0.0
    %959 = vmatpush.msra.mxu0 0.0
    %960 = vmatpush.msra.mxu0 0.0
    %961 = vmatpush.msra.mxu0 0.0
    %962 = vmatpush.msra.mxu0 0.0
    %963 = vmatpush.msra.mxu0 0.0
    %964 = vmatpush.msra.mxu0 0.0
    %965 = vmatpush.msra.mxu0 0.0
    %966 = vmatpush.msra.mxu0 0.0
    %967 = vmatpush.msra.mxu0 0.0
    %968 = vmatpush.msra.mxu0 %v256
    %969 = vmatmul.f32.gmra.mxu0 %v948
    %v970 = vpop.f32.mrf.mxu0
    %v971 = vadd.f32 0.0, %v970
    %972 = vmatmul.f32.gmra.mxu0 %v951
    %v973 = vpop.f32.mrf.mxu0
    %v974 = vadd.f32 0.0, %v973
    %975 = vdwg.mxu0
    %v976 = vadd.f32 %v815, %v971
    %v977 = vadd.f32 %v816, %v974
    %v979 = vperm.slane %v257, 0
    %v981 = vadd.f32 %v976, %v979
    %v982 = vadd.f32 %v977, %v979
    %v983 = vadd.f32 %v234, %v981
    %v984 = vadd.f32 %v235, %v982
    %v985 = vld [vmem:[#allocation12] sm:$0x1]
    %v986 = vld [vmem:[#allocation13] sm:$0x1]
    %v987 = vsel %vm261, %v983, 0.0
    %988 = vadd.xlane.f32.xlu0 %v987
    %v989 = vpop.xlane.xlu0 %988
    %v990 = vsel %vm261, %v984, 0.0
    %991 = vadd.xlane.f32.xlu0 %v990
    %v992 = vpop.xlane.xlu0 %991
    %v993 = vrcp.pop 32.0
    %v994 = vmul.f32 32.0, %v993
    %v995 = vsub.f32 1.0, %v994
    %v996 = vmul.f32 %v993, %v995
    %v997 = vadd.f32 %v993, %v996
    %vm998 = vweird.f32 %v993
    %v999 = vsel %vm998, %v993, %v997
    %v1000 = vmul.f32 %v989, %v999
    %v1001 = vmul.f32 %v992, %v999
    %v1002 = vsub.f32 %v983, %v1000
    %v1003 = vsub.f32 %v984, %v1001
    %v1004 = vmul.f32 %v1002, %v1002
    %v1005 = vmul.f32 %v1003, %v1003
    %v1006 = vsel %vm261, %v1004, 0.0
    %1007 = vadd.xlane.f32.xlu0 %v1006
    %v1008 = vpop.xlane.xlu0 %1007
    %v1009 = vsel %vm261, %v1005, 0.0
    %1010 = vadd.xlane.f32.xlu0 %v1009
    %v1011 = vpop.xlane.xlu0 %1010
    %v1012 = vmul.f32 %v1008, %v999
    %v1013 = vmul.f32 %v1011, %v999
    %v1014 = vadd.f32 %v1012, 1e-05
    %v1015 = vadd.f32 %v1013, 1e-05
    %v1016 = vrsqrt.pop %v1014
    %v1017 = vmul.f32 %v1016, %v1014
    %v1018 = vmul.f32 %v1017, %v1016
    %v1019 = vmul.f32 0.5, %v1018
    %v1020 = vsub.f32 1.5, %v1019
    %v1021 = vmul.f32 %v1016, %v1020
    %vm1022 = vweird.f32 %v1014
    %vm1023 = vweird.f32 %v1016
    %vm1024 = vmor %vm1022, %vm1023
    %v1025 = vsel %vm1024, %v1016, %v1021
    %v1026 = vrsqrt.pop %v1015
    %v1027 = vmul.f32 %v1026, %v1015
    %v1028 = vmul.f32 %v1027, %v1026
    %v1029 = vmul.f32 0.5, %v1028
    %v1030 = vsub.f32 1.5, %v1029
    %v1031 = vmul.f32 %v1026, %v1030
    %vm1032 = vweird.f32 %v1015
    %vm1033 = vweird.f32 %v1026
    %vm1034 = vmor %vm1032, %vm1033
    %v1035 = vsel %vm1034, %v1026, %v1031
    %v1036 = vmul.f32 %v1002, %v1025
    %v1037 = vmul.f32 %v1003, %v1035
    %v1039 = vperm.slane %v985, 0
    %v1041 = vmul.f32 %v1036, %v1039
    %v1042 = vmul.f32 %v1037, %v1039
    %v1044 = vperm.slane %v986, 0
    %v1046 = vadd.f32 %v1041, %v1044
    %v1047 = vadd.f32 %v1042, %v1044
    %v1048 = vadd.f32 %v1046, %v236
    %v1049 = vadd.f32 %v1047, %v237
    %v1050 = vld [vmem:[%s8] sm:$0xff]
    %v1051 = vld [vmem:[%s8 + $0x8] sm:$0xff]
    %v1052 = vld [vmem:[%s8 + $0x10] sm:$0xff]
    %v1053 = vld [vmem:[%s8 + $0x18] sm:$0xff]
    %v1054 = vld [vmem:[#allocation6] sm:$0x1]
    %v1055 = vld [vmem:[%s10] sm:$0xff]
    %v1056 = vld [vmem:[%s10 + $0x8] sm:$0xff]
    %v1057 = vld [vmem:[%s10 + $0x10] sm:$0xff]
    %v1058 = vld [vmem:[%s10 + $0x18] sm:$0xff]
    %v1059 = vld [vmem:[#allocation7] sm:$0x1]
    %v1061 = vperm.slane %v1054, 0
    %v1064 = vsel %vm261, %v1048, 0
    %v1067 = vsel %vm261, %v1049, 0
    %1069 = vmatpush.msra.mxu0 0.0
    %1070 = vmatpush.msra.mxu0 0.0
    %1071 = vmatpush.msra.mxu0 0.0
    %1072 = vmatpush.msra.mxu0 0.0
    %1073 = vmatpush.msra.mxu0 0.0
    %1074 = vmatpush.msra.mxu0 0.0
    %1075 = vmatpush.msra.mxu0 0.0
    %1076 = vmatpush.msra.mxu0 0.0
    %1077 = vmatpush.msra.mxu0 0.0
    %1078 = vmatpush.msra.mxu0 0.0
    %1079 = vmatpush.msra.mxu0 0.0
    %1080 = vmatpush.msra.mxu0 0.0
    %1081 = vmatpush.msra.mxu0 %v1053
    %1082 = vmatpush.msra.mxu0 %v1052
    %1083 = vmatpush.msra.mxu0 %v1051
    %1084 = vmatpush.msra.mxu0 %v1050
    %1085 = vmatmul.f32.gmra.mxu0 %v1064
    %v1086 = vpop.f32.mrf.mxu0
    %v1087 = vadd.f32 %v1061, %v1086
    %1088 = vmatmul.f32.gmra.mxu0 %v1067
    %v1089 = vpop.f32.mrf.mxu0
    %v1090 = vadd.f32 %v1061, %v1089
    %1091 = vdwg.mxu0
    %1096 = vrot.lane.b32.xlu0 %v1050, 96
    %v1097 = vpop.permute.xlu0 %1096
    %1098 = vrot.lane.b32.xlu0 %v1051, 96
    %v1099 = vpop.permute.xlu0 %1098
    %1100 = vrot.lane.b32.xlu0 %v1052, 96
    %v1101 = vpop.permute.xlu0 %1100
    %1102 = vrot.lane.b32.xlu0 %v1053, 96
    %v1103 = vpop.permute.xlu0 %1102
    %1108 = vrot.lane.b32.xlu0 %v1061, 96
    %v1109 = vpop.permute.xlu0 %1108
    %v1112 = vsel %vm261, %v242, 0
    %v1115 = vsel %vm261, %v243, 0
    %v1118 = vsel %vm261, %v244, 0
    %v1121 = vsel %vm261, %v245, 0
    %1123 = vmatpush.msra.mxu0 0.0
    %1124 = vmatpush.msra.mxu0 0.0
    %1125 = vmatpush.msra.mxu0 0.0
    %1126 = vmatpush.msra.mxu0 0.0
    %1127 = vmatpush.msra.mxu0 0.0
    %1128 = vmatpush.msra.mxu0 0.0
    %1129 = vmatpush.msra.mxu0 0.0
    %1130 = vmatpush.msra.mxu0 0.0
    %1131 = vmatpush.msra.mxu0 0.0
    %1132 = vmatpush.msra.mxu0 0.0
    %1133 = vmatpush.msra.mxu0 0.0
    %1134 = vmatpush.msra.mxu0 0.0
    %1135 = vmatpush.msra.mxu0 %v1103
    %1136 = vmatpush.msra.mxu0 %v1101
    %1137 = vmatpush.msra.mxu0 %v1099
    %1138 = vmatpush.msra.mxu0 %v1097
    %1139 = vmatmul.f32.gmra.mxu0 %v1112
    %v1140 = vpop.f32.mrf.mxu0
    %v1141 = vadd.f32 %v1109, %v1140
    %1142 = vmatmul.f32.gmra.mxu0 %v1115
    %v1143 = vpop.f32.mrf.mxu0
    %v1144 = vadd.f32 %v1109, %v1143
    %1145 = vmatmul.f32.gmra.mxu0 %v1118
    %v1146 = vpop.f32.mrf.mxu0
    %v1147 = vadd.f32 %v1109, %v1146
    %1148 = vmatmul.f32.gmra.mxu0 %v1121
    %v1149 = vpop.f32.mrf.mxu0
    %v1150 = vadd.f32 %v1109, %v1149
    %1151 = vdwg.mxu0
    %1152 = vrot.lane.b32.xlu0 %v1050, 64
    %v1153 = vpop.permute.xlu0 %1152
    %1154 = vrot.lane.b32.xlu0 %v1051, 64
    %v1155 = vpop.permute.xlu0 %1154
    %1156 = vrot.lane.b32.xlu0 %v1052, 64
    %v1157 = vpop.permute.xlu0 %1156
    %1158 = vrot.lane.b32.xlu0 %v1053, 64
    %v1159 = vpop.permute.xlu0 %1158
    %1164 = vrot.lane.b32.xlu0 %v1061, 64
    %v1165 = vpop.permute.xlu0 %1164
    %v1168 = vsel %vm261, %v238, 0
    %v1171 = vsel %vm261, %v239, 0
    %v1174 = vsel %vm261, %v240, 0
    %v1177 = vsel %vm261, %v241, 0
    %1179 = vmatpush.msra.mxu0 0.0
    %1180 = vmatpush.msra.mxu0 0.0
    %1181 = vmatpush.msra.mxu0 0.0
    %1182 = vmatpush.msra.mxu0 0.0
    %1183 = vmatpush.msra.mxu0 0.0
    %1184 = vmatpush.msra.mxu0 0.0
    %1185 = vmatpush.msra.mxu0 0.0
    %1186 = vmatpush.msra.mxu0 0.0
    %1187 = vmatpush.msra.mxu0 0.0
    %1188 = vmatpush.msra.mxu0 0.0
    %1189 = vmatpush.msra.mxu0 0.0
    %1190 = vmatpush.msra.mxu0 0.0
    %1191 = vmatpush.msra.mxu0 %v1159
    %1192 = vmatpush.msra.mxu0 %v1157
    %1193 = vmatpush.msra.mxu0 %v1155
    %1194 = vmatpush.msra.mxu0 %v1153
    %1195 = vmatmul.f32.gmra.mxu0 %v1168
    %v1196 = vpop.f32.mrf.mxu0
    %v1197 = vadd.f32 %v1165, %v1196
    %1198 = vmatmul.f32.gmra.mxu0 %v1171
    %v1199 = vpop.f32.mrf.mxu0
    %v1200 = vadd.f32 %v1165, %v1199
    %1201 = vmatmul.f32.gmra.mxu0 %v1174
    %v1202 = vpop.f32.mrf.mxu0
    %v1203 = vadd.f32 %v1165, %v1202
    %1204 = vmatmul.f32.gmra.mxu0 %v1177
    %v1205 = vpop.f32.mrf.mxu0
    %v1206 = vadd.f32 %v1165, %v1205
    %1207 = vdwg.mxu0
    %v1208 = vmul.f32 %v1087, 0.35355338
    %v1209 = vmul.f32 %v1090, 0.35355338
    %v1211 = vsel %vm344, %v1208, 0
    %v1214 = vsel %vm344, %v1141, 0
    %v1217 = vsel %vm344, %v1144, 0
    %1219 = vmatpush.xpose.msra.mxu0 0.0
    %1220 = vmatpush.xpose.msra.mxu0 0.0
    %1221 = vmatpush.xpose.msra.mxu0 0.0
    %1222 = vmatpush.xpose.msra.mxu0 0.0
    %1223 = vmatpush.xpose.msra.mxu0 0.0
    %1224 = vmatpush.xpose.msra.mxu0 0.0
    %1225 = vmatpush.xpose.msra.mxu0 0.0
    %1226 = vmatpush.xpose.msra.mxu0 0.0
    %1227 = vmatpush.xpose.msra.mxu0 0.0
    %1228 = vmatpush.xpose.msra.mxu0 0.0
    %1229 = vmatpush.xpose.msra.mxu0 0.0
    %1230 = vmatpush.xpose.msra.mxu0 0.0
    %1231 = vmatpush.xpose.msra.mxu0 0.0
    %1232 = vmatpush.xpose.msra.mxu0 0.0
    %1233 = vmatpush.xpose.msra.mxu0 %v1217
    %1234 = vmatpush.xpose.msra.mxu0 %v1214
    %1235 = vmatmul.f32.gmra.mxu0 %v1211
    %v1236 = vpop.f32.mrf.mxu0
    %v1237 = vadd.f32 0.0, %v1236
    %1238 = vdwg.mxu0
    %v1240 = vsel %vm344, %v1209, 0
    %v1243 = vsel %vm344, %v1147, 0
    %v1246 = vsel %vm344, %v1150, 0
    %1248 = vmatpush.xpose.msra.mxu0 0.0
    %1249 = vmatpush.xpose.msra.mxu0 0.0
    %1250 = vmatpush.xpose.msra.mxu0 0.0
    %1251 = vmatpush.xpose.msra.mxu0 0.0
    %1252 = vmatpush.xpose.msra.mxu0 0.0
    %1253 = vmatpush.xpose.msra.mxu0 0.0
    %1254 = vmatpush.xpose.msra.mxu0 0.0
    %1255 = vmatpush.xpose.msra.mxu0 0.0
    %1256 = vmatpush.xpose.msra.mxu0 0.0
    %1257 = vmatpush.xpose.msra.mxu0 0.0
    %1258 = vmatpush.xpose.msra.mxu0 0.0
    %1259 = vmatpush.xpose.msra.mxu0 0.0
    %1260 = vmatpush.xpose.msra.mxu0 0.0
    %1261 = vmatpush.xpose.msra.mxu0 0.0
    %1262 = vmatpush.xpose.msra.mxu0 %v1246
    %1263 = vmatpush.xpose.msra.mxu0 %v1243
    %1264 = vmatmul.f32.gmra.mxu0 %v1240
    %v1265 = vpop.f32.mrf.mxu0
    %v1266 = vadd.f32 0.0, %v1265
    %1267 = vdwg.mxu0
    %vm1268 = vcmask 130048
    %v1269 = vsel %vm1268, %v1237, -inf
    %1270 = vmax.xlane.f32.xlu0 %v1269
    %v1271 = vpop.xlane.xlu0 %1270
    %v1272 = vsel %vm1268, %v1266, -inf
    %1273 = vmax.xlane.f32.xlu0 %v1272
    %v1274 = vpop.xlane.xlu0 %1273
    %v1275 = vsub.f32 %v1237, %v1271
    %v1276 = vsub.f32 %v1266, %v1274
    %v1277 = vmul.f32 %v1275, 1.442695
    %v1278 = vpow.pop %v1277
    %v1279 = vmul.f32 %v1276, 1.442695
    %v1280 = vpow.pop %v1279
    %v1281 = vsel %vm1268, %v1278, 0.0
    %1282 = vadd.xlane.f32.xlu0 %v1281
    %v1283 = vpop.xlane.xlu0 %1282
    %v1284 = vsel %vm1268, %v1280, 0.0
    %1285 = vadd.xlane.f32.xlu0 %v1284
    %v1286 = vpop.xlane.xlu0 %1285
    %v1287 = vrcp.pop %v1283
    %v1288 = vrcp.pop %v1286
    %v1289 = vmul.f32 %v1278, %v1287
    %v1290 = vmul.f32 %v1280, %v1288
    %v1292 = vsel %vm1268, %v1289, 0
    %1294 = vmatpush.msra.mxu0 0.0
    %1295 = vmatpush.msra.mxu0 0.0
    %1296 = vmatpush.msra.mxu0 0.0
    %1297 = vmatpush.msra.mxu0 0.0
    %1298 = vmatpush.msra.mxu0 0.0
    %1299 = vmatpush.msra.mxu0 0.0
    %1300 = vmatpush.msra.mxu0 0.0
    %1301 = vmatpush.msra.mxu0 0.0
    %1302 = vmatpush.msra.mxu0 0.0
    %1303 = vmatpush.msra.mxu0 0.0
    %1304 = vmatpush.msra.mxu0 0.0
    %1305 = vmatpush.msra.mxu0 0.0
    %1306 = vmatpush.msra.mxu0 0.0
    %1307 = vmatpush.msra.mxu0 0.0
    %1308 = vmatpush.msra.mxu0 %v1200
    %1309 = vmatpush.msra.mxu0 %v1197
    %1310 = vmatmul.f32.gmra.mxu0 %v1292
    %v1311 = vpop.f32.mrf.mxu0
    %v1312 = vadd.f32 0.0, %v1311
    %1313 = vdwg.mxu0
    %v1315 = vsel %vm1268, %v1290, 0
    %1317 = vmatpush.msra.mxu0 0.0
    %1318 = vmatpush.msra.mxu0 0.0
    %1319 = vmatpush.msra.mxu0 0.0
    %1320 = vmatpush.msra.mxu0 0.0
    %1321 = vmatpush.msra.mxu0 0.0
    %1322 = vmatpush.msra.mxu0 0.0
    %1323 = vmatpush.msra.mxu0 0.0
    %1324 = vmatpush.msra.mxu0 0.0
    %1325 = vmatpush.msra.mxu0 0.0
    %1326 = vmatpush.msra.mxu0 0.0
    %1327 = vmatpush.msra.mxu0 0.0
    %1328 = vmatpush.msra.mxu0 0.0
    %1329 = vmatpush.msra.mxu0 0.0
    %1330 = vmatpush.msra.mxu0 0.0
    %1331 = vmatpush.msra.mxu0 %v1206
    %1332 = vmatpush.msra.mxu0 %v1203
    %1333 = vmatmul.f32.gmra.mxu0 %v1315
    %v1334 = vpop.f32.mrf.mxu0
    %v1335 = vadd.f32 0.0, %v1334
    %1336 = vdwg.mxu0
    %1337 = vrot.lane.b32.xlu0 %v1208, 120
    %v1338 = vpop.permute.xlu0 %1337
    %1339 = vrot.lane.b32.xlu0 %v1141, 120
    %v1340 = vpop.permute.xlu0 %1339
    %1341 = vrot.lane.b32.xlu0 %v1144, 120
    %v1342 = vpop.permute.xlu0 %1341
    %v1343 = vsel %vm344, %v1338, 0
    %v1345 = vsel %vm344, %v1340, 0
    %v1347 = vsel %vm344, %v1342, 0
    %1349 = vmatpush.xpose.msra.mxu0 0.0
    %1350 = vmatpush.xpose.msra.mxu0 0.0
    %1351 = vmatpush.xpose.msra.mxu0 0.0
    %1352 = vmatpush.xpose.msra.mxu0 0.0
    %1353 = vmatpush.xpose.msra.mxu0 0.0
    %1354 = vmatpush.xpose.msra.mxu0 0.0
    %1355 = vmatpush.xpose.msra.mxu0 0.0
    %1356 = vmatpush.xpose.msra.mxu0 0.0
    %1357 = vmatpush.xpose.msra.mxu0 0.0
    %1358 = vmatpush.xpose.msra.mxu0 0.0
    %1359 = vmatpush.xpose.msra.mxu0 0.0
    %1360 = vmatpush.xpose.msra.mxu0 0.0
    %1361 = vmatpush.xpose.msra.mxu0 0.0
    %1362 = vmatpush.xpose.msra.mxu0 0.0
    %1363 = vmatpush.xpose.msra.mxu0 %v1347
    %1364 = vmatpush.xpose.msra.mxu0 %v1345
    %1365 = vmatmul.f32.gmra.mxu0 %v1343
    %v1366 = vpop.f32.mrf.mxu0
    %v1367 = vadd.f32 0.0, %v1366
    %1368 = vdwg.mxu0
    %1369 = vrot.lane.b32.xlu0 %v1209, 120
    %v1370 = vpop.permute.xlu0 %1369
    %1371 = vrot.lane.b32.xlu0 %v1147, 120
    %v1372 = vpop.permute.xlu0 %1371
    %1373 = vrot.lane.b32.xlu0 %v1150, 120
    %v1374 = vpop.permute.xlu0 %1373
    %v1375 = vsel %vm344, %v1370, 0
    %v1377 = vsel %vm344, %v1372, 0
    %v1379 = vsel %vm344, %v1374, 0
    %1381 = vmatpush.xpose.msra.mxu0 0.0
    %1382 = vmatpush.xpose.msra.mxu0 0.0
    %1383 = vmatpush.xpose.msra.mxu0 0.0
    %1384 = vmatpush.xpose.msra.mxu0 0.0
    %1385 = vmatpush.xpose.msra.mxu0 0.0
    %1386 = vmatpush.xpose.msra.mxu0 0.0
    %1387 = vmatpush.xpose.msra.mxu0 0.0
    %1388 = vmatpush.xpose.msra.mxu0 0.0
    %1389 = vmatpush.xpose.msra.mxu0 0.0
    %1390 = vmatpush.xpose.msra.mxu0 0.0
    %1391 = vmatpush.xpose.msra.mxu0 0.0
    %1392 = vmatpush.xpose.msra.mxu0 0.0
    %1393 = vmatpush.xpose.msra.mxu0 0.0
    %1394 = vmatpush.xpose.msra.mxu0 0.0
    %1395 = vmatpush.xpose.msra.mxu0 %v1379
    %1396 = vmatpush.xpose.msra.mxu0 %v1377
    %1397 = vmatmul.f32.gmra.mxu0 %v1375
    %v1398 = vpop.f32.mrf.mxu0
    %v1399 = vadd.f32 0.0, %v1398
    %1400 = vdwg.mxu0
    %v1401 = vsel %vm1268, %v1367, -inf
    %1402 = vmax.xlane.f32.xlu0 %v1401
    %v1403 = vpop.xlane.xlu0 %1402
    %v1404 = vsel %vm1268, %v1399, -inf
    %1405 = vmax.xlane.f32.xlu0 %v1404
    %v1406 = vpop.xlane.xlu0 %1405
    %v1407 = vsub.f32 %v1367, %v1403
    %v1408 = vsub.f32 %v1399, %v1406
    %v1409 = vmul.f32 %v1407, 1.442695
    %v1410 = vpow.pop %v1409
    %v1411 = vmul.f32 %v1408, 1.442695
    %v1412 = vpow.pop %v1411
    %v1413 = vsel %vm1268, %v1410, 0.0
    %1414 = vadd.xlane.f32.xlu0 %v1413
    %v1415 = vpop.xlane.xlu0 %1414
    %v1416 = vsel %vm1268, %v1412, 0.0
    %1417 = vadd.xlane.f32.xlu0 %v1416
    %v1418 = vpop.xlane.xlu0 %1417
    %v1419 = vrcp.pop %v1415
    %v1420 = vrcp.pop %v1418
    %v1421 = vmul.f32 %v1410, %v1419
    %v1422 = vmul.f32 %v1412, %v1420
    %1425 = vrot.lane.b32.xlu0 %v1197, 120
    %v1426 = vpop.permute.xlu0 %1425
    %1427 = vrot.lane.b32.xlu0 %v1200, 120
    %v1428 = vpop.permute.xlu0 %1427
    %v1432 = vsel %vm1268, %v1421, 0
    %1434 = vmatpush.msra.mxu0 0.0
    %1435 = vmatpush.msra.mxu0 0.0
    %1436 = vmatpush.msra.mxu0 0.0
    %1437 = vmatpush.msra.mxu0 0.0
    %1438 = vmatpush.msra.mxu0 0.0
    %1439 = vmatpush.msra.mxu0 0.0
    %1440 = vmatpush.msra.mxu0 0.0
    %1441 = vmatpush.msra.mxu0 0.0
    %1442 = vmatpush.msra.mxu0 0.0
    %1443 = vmatpush.msra.mxu0 0.0
    %1444 = vmatpush.msra.mxu0 0.0
    %1445 = vmatpush.msra.mxu0 0.0
    %1446 = vmatpush.msra.mxu0 0.0
    %1447 = vmatpush.msra.mxu0 0.0
    %1448 = vmatpush.msra.mxu0 %v1428
    %1449 = vmatpush.msra.mxu0 %v1426
    %1450 = vmatmul.f32.gmra.mxu0 %v1432
    %v1451 = vpop.f32.mrf.mxu0
    %v1452 = vadd.f32 0.0, %v1451
    %1453 = vdwg.mxu0
    %1456 = vrot.lane.b32.xlu0 %v1203, 120
    %v1457 = vpop.permute.xlu0 %1456
    %1458 = vrot.lane.b32.xlu0 %v1206, 120
    %v1459 = vpop.permute.xlu0 %1458
    %v1463 = vsel %vm1268, %v1422, 0
    %1465 = vmatpush.msra.mxu0 0.0
    %1466 = vmatpush.msra.mxu0 0.0
    %1467 = vmatpush.msra.mxu0 0.0
    %1468 = vmatpush.msra.mxu0 0.0
    %1469 = vmatpush.msra.mxu0 0.0
    %1470 = vmatpush.msra.mxu0 0.0
    %1471 = vmatpush.msra.mxu0 0.0
    %1472 = vmatpush.msra.mxu0 0.0
    %1473 = vmatpush.msra.mxu0 0.0
    %1474 = vmatpush.msra.mxu0 0.0
    %1475 = vmatpush.msra.mxu0 0.0
    %1476 = vmatpush.msra.mxu0 0.0
    %1477 = vmatpush.msra.mxu0 0.0
    %1478 = vmatpush.msra.mxu0 0.0
    %1479 = vmatpush.msra.mxu0 %v1459
    %1480 = vmatpush.msra.mxu0 %v1457
    %1481 = vmatmul.f32.gmra.mxu0 %v1463
    %v1482 = vpop.f32.mrf.mxu0
    %v1483 = vadd.f32 0.0, %v1482
    %1484 = vdwg.mxu0
    %v1486 = vsel %vm344, %v1452, 0
    %v1489 = vsel %vm344, %v1483, 0
    %1491 = vmatpush.msra.mxu0 0.0
    %1492 = vmatpush.msra.mxu0 0.0
    %1493 = vmatpush.msra.mxu0 0.0
    %1494 = vmatpush.msra.mxu0 0.0
    %1495 = vmatpush.msra.mxu0 0.0
    %1496 = vmatpush.msra.mxu0 0.0
    %1497 = vmatpush.msra.mxu0 0.0
    %1498 = vmatpush.msra.mxu0 0.0
    %1499 = vmatpush.msra.mxu0 0.0
    %1500 = vmatpush.msra.mxu0 0.0
    %1501 = vmatpush.msra.mxu0 0.0
    %1502 = vmatpush.msra.mxu0 0.0
    %1503 = vmatpush.msra.mxu0 0.0
    %1504 = vmatpush.msra.mxu0 0.0
    %1505 = vmatpush.msra.mxu0 0.0
    %1506 = vmatpush.msra.mxu0 %v1056
    %1507 = vmatmul.f32.gmra.mxu0 %v1486
    %v1508 = vpop.f32.mrf.mxu0
    %v1509 = vadd.f32 0.0, %v1508
    %1510 = vmatmul.f32.gmra.mxu0 %v1489
    %v1511 = vpop.f32.mrf.mxu0
    %v1512 = vadd.f32 0.0, %v1511
    %1513 = vdwg.mxu0
    %v1515 = vsel %vm344, %v1312, 0
    %v1518 = vsel %vm344, %v1335, 0
    %1520 = vmatpush.msra.mxu0 0.0
    %1521 = vmatpush.msra.mxu0 0.0
    %1522 = vmatpush.msra.mxu0 0.0
    %1523 = vmatpush.msra.mxu0 0.0
    %1524 = vmatpush.msra.mxu0 0.0
    %1525 = vmatpush.msra.mxu0 0.0
    %1526 = vmatpush.msra.mxu0 0.0
    %1527 = vmatpush.msra.mxu0 0.0
    %1528 = vmatpush.msra.mxu0 0.0
    %1529 = vmatpush.msra.mxu0 0.0
    %1530 = vmatpush.msra.mxu0 0.0
    %1531 = vmatpush.msra.mxu0 0.0
    %1532 = vmatpush.msra.mxu0 0.0
    %1533 = vmatpush.msra.mxu0 0.0
    %1534 = vmatpush.msra.mxu0 0.0
    %1535 = vmatpush.msra.mxu0 %v1055
    %1536 = vmatmul.f32.gmra.mxu0 %v1515
    %v1537 = vpop.f32.mrf.mxu0
    %v1538 = vadd.f32 %v1509, %v1537
    %1539 = vmatmul.f32.gmra.mxu0 %v1518
    %v1540 = vpop.f32.mrf.mxu0
    %v1541 = vadd.f32 %v1512, %v1540
    %1542 = vdwg.mxu0
    %1543 = vrot.lane.b32.xlu0 %v1208, 112
    %v1544 = vpop.permute.xlu0 %1543
    %1545 = vrot.lane.b32.xlu0 %v1141, 112
    %v1546 = vpop.permute.xlu0 %1545
    %1547 = vrot.lane.b32.xlu0 %v1144, 112
    %v1548 = vpop.permute.xlu0 %1547
    %v1549 = vsel %vm344, %v1544, 0
    %v1551 = vsel %vm344, %v1546, 0
    %v1553 = vsel %vm344, %v1548, 0
    %1555 = vmatpush.xpose.msra.mxu0 0.0
    %1556 = vmatpush.xpose.msra.mxu0 0.0
    %1557 = vmatpush.xpose.msra.mxu0 0.0
    %1558 = vmatpush.xpose.msra.mxu0 0.0
    %1559 = vmatpush.xpose.msra.mxu0 0.0
    %1560 = vmatpush.xpose.msra.mxu0 0.0
    %1561 = vmatpush.xpose.msra.mxu0 0.0
    %1562 = vmatpush.xpose.msra.mxu0 0.0
    %1563 = vmatpush.xpose.msra.mxu0 0.0
    %1564 = vmatpush.xpose.msra.mxu0 0.0
    %1565 = vmatpush.xpose.msra.mxu0 0.0
    %1566 = vmatpush.xpose.msra.mxu0 0.0
    %1567 = vmatpush.xpose.msra.mxu0 0.0
    %1568 = vmatpush.xpose.msra.mxu0 0.0
    %1569 = vmatpush.xpose.msra.mxu0 %v1553
    %1570 = vmatpush.xpose.msra.mxu0 %v1551
    %1571 = vmatmul.f32.gmra.mxu0 %v1549
    %v1572 = vpop.f32.mrf.mxu0
    %v1573 = vadd.f32 0.0, %v1572
    %1574 = vdwg.mxu0
    %1575 = vrot.lane.b32.xlu0 %v1209, 112
    %v1576 = vpop.permute.xlu0 %1575
    %1577 = vrot.lane.b32.xlu0 %v1147, 112
    %v1578 = vpop.permute.xlu0 %1577
    %1579 = vrot.lane.b32.xlu0 %v1150, 112
    %v1580 = vpop.permute.xlu0 %1579
    %v1581 = vsel %vm344, %v1576, 0
    %v1583 = vsel %vm344, %v1578, 0
    %v1585 = vsel %vm344, %v1580, 0
    %1587 = vmatpush.xpose.msra.mxu0 0.0
    %1588 = vmatpush.xpose.msra.mxu0 0.0
    %1589 = vmatpush.xpose.msra.mxu0 0.0
    %1590 = vmatpush.xpose.msra.mxu0 0.0
    %1591 = vmatpush.xpose.msra.mxu0 0.0
    %1592 = vmatpush.xpose.msra.mxu0 0.0
    %1593 = vmatpush.xpose.msra.mxu0 0.0
    %1594 = vmatpush.xpose.msra.mxu0 0.0
    %1595 = vmatpush.xpose.msra.mxu0 0.0
    %1596 = vmatpush.xpose.msra.mxu0 0.0
    %1597 = vmatpush.xpose.msra.mxu0 0.0
    %1598 = vmatpush.xpose.msra.mxu0 0.0
    %1599 = vmatpush.xpose.msra.mxu0 0.0
    %1600 = vmatpush.xpose.msra.mxu0 0.0
    %1601 = vmatpush.xpose.msra.mxu0 %v1585
    %1602 = vmatpush.xpose.msra.mxu0 %v1583
    %1603 = vmatmul.f32.gmra.mxu0 %v1581
    %v1604 = vpop.f32.mrf.mxu0
    %v1605 = vadd.f32 0.0, %v1604
    %1606 = vdwg.mxu0
    %v1607 = vsel %vm1268, %v1573, -inf
    %1608 = vmax.xlane.f32.xlu0 %v1607
    %v1609 = vpop.xlane.xlu0 %1608
    %v1610 = vsel %vm1268, %v1605, -inf
    %1611 = vmax.xlane.f32.xlu0 %v1610
    %v1612 = vpop.xlane.xlu0 %1611
    %v1613 = vsub.f32 %v1573, %v1609
    %v1614 = vsub.f32 %v1605, %v1612
    %v1615 = vmul.f32 %v1613, 1.442695
    %v1616 = vpow.pop %v1615
    %v1617 = vmul.f32 %v1614, 1.442695
    %v1618 = vpow.pop %v1617
    %v1619 = vsel %vm1268, %v1616, 0.0
    %1620 = vadd.xlane.f32.xlu0 %v1619
    %v1621 = vpop.xlane.xlu0 %1620
    %v1622 = vsel %vm1268, %v1618, 0.0
    %1623 = vadd.xlane.f32.xlu0 %v1622
    %v1624 = vpop.xlane.xlu0 %1623
    %v1625 = vrcp.pop %v1621
    %v1626 = vrcp.pop %v1624
    %v1627 = vmul.f32 %v1616, %v1625
    %v1628 = vmul.f32 %v1618, %v1626
    %1629 = vrot.lane.b32.xlu0 %v1197, 112
    %v1630 = vpop.permute.xlu0 %1629
    %1631 = vrot.lane.b32.xlu0 %v1200, 112
    %v1632 = vpop.permute.xlu0 %1631
    %v1636 = vsel %vm1268, %v1627, 0
    %1638 = vmatpush.msra.mxu0 0.0
    %1639 = vmatpush.msra.mxu0 0.0
    %1640 = vmatpush.msra.mxu0 0.0
    %1641 = vmatpush.msra.mxu0 0.0
    %1642 = vmatpush.msra.mxu0 0.0
    %1643 = vmatpush.msra.mxu0 0.0
    %1644 = vmatpush.msra.mxu0 0.0
    %1645 = vmatpush.msra.mxu0 0.0
    %1646 = vmatpush.msra.mxu0 0.0
    %1647 = vmatpush.msra.mxu0 0.0
    %1648 = vmatpush.msra.mxu0 0.0
    %1649 = vmatpush.msra.mxu0 0.0
    %1650 = vmatpush.msra.mxu0 0.0
    %1651 = vmatpush.msra.mxu0 0.0
    %1652 = vmatpush.msra.mxu0 %v1632
    %1653 = vmatpush.msra.mxu0 %v1630
    %1654 = vmatmul.f32.gmra.mxu0 %v1636
    %v1655 = vpop.f32.mrf.mxu0
    %v1656 = vadd.f32 0.0, %v1655
    %1657 = vdwg.mxu0
    %1658 = vrot.lane.b32.xlu0 %v1203, 112
    %v1659 = vpop.permute.xlu0 %1658
    %1660 = vrot.lane.b32.xlu0 %v1206, 112
    %v1661 = vpop.permute.xlu0 %1660
    %v1665 = vsel %vm1268, %v1628, 0
    %1667 = vmatpush.msra.mxu0 0.0
    %1668 = vmatpush.msra.mxu0 0.0
    %1669 = vmatpush.msra.mxu0 0.0
    %1670 = vmatpush.msra.mxu0 0.0
    %1671 = vmatpush.msra.mxu0 0.0
    %1672 = vmatpush.msra.mxu0 0.0
    %1673 = vmatpush.msra.mxu0 0.0
    %1674 = vmatpush.msra.mxu0 0.0
    %1675 = vmatpush.msra.mxu0 0.0
    %1676 = vmatpush.msra.mxu0 0.0
    %1677 = vmatpush.msra.mxu0 0.0
    %1678 = vmatpush.msra.mxu0 0.0
    %1679 = vmatpush.msra.mxu0 0.0
    %1680 = vmatpush.msra.mxu0 0.0
    %1681 = vmatpush.msra.mxu0 %v1661
    %1682 = vmatpush.msra.mxu0 %v1659
    %1683 = vmatmul.f32.gmra.mxu0 %v1665
    %v1684 = vpop.f32.mrf.mxu0
    %v1685 = vadd.f32 0.0, %v1684
    %1686 = vdwg.mxu0
    %v1688 = vsel %vm344, %v1656, 0
    %v1691 = vsel %vm344, %v1685, 0
    %1693 = vmatpush.msra.mxu0 0.0
    %1694 = vmatpush.msra.mxu0 0.0
    %1695 = vmatpush.msra.mxu0 0.0
    %1696 = vmatpush.msra.mxu0 0.0
    %1697 = vmatpush.msra.mxu0 0.0
    %1698 = vmatpush.msra.mxu0 0.0
    %1699 = vmatpush.msra.mxu0 0.0
    %1700 = vmatpush.msra.mxu0 0.0
    %1701 = vmatpush.msra.mxu0 0.0
    %1702 = vmatpush.msra.mxu0 0.0
    %1703 = vmatpush.msra.mxu0 0.0
    %1704 = vmatpush.msra.mxu0 0.0
    %1705 = vmatpush.msra.mxu0 0.0
    %1706 = vmatpush.msra.mxu0 0.0
    %1707 = vmatpush.msra.mxu0 0.0
    %1708 = vmatpush.msra.mxu0 %v1057
    %1709 = vmatmul.f32.gmra.mxu0 %v1688
    %v1710 = vpop.f32.mrf.mxu0
    %v1711 = vadd.f32 0.0, %v1710
    %1712 = vmatmul.f32.gmra.mxu0 %v1691
    %v1713 = vpop.f32.mrf.mxu0
    %v1714 = vadd.f32 0.0, %v1713
    %1715 = vdwg.mxu0
    %v1716 = vadd.f32 %v1538, %v1711
    %v1717 = vadd.f32 %v1541, %v1714
    %1718 = vrot.lane.b32.xlu0 %v1208, 104
    %v1719 = vpop.permute.xlu0 %1718
    %1720 = vrot.lane.b32.xlu0 %v1141, 104
    %v1721 = vpop.permute.xlu0 %1720
    %1722 = vrot.lane.b32.xlu0 %v1144, 104
    %v1723 = vpop.permute.xlu0 %1722
    %v1724 = vsel %vm344, %v1719, 0
    %v1726 = vsel %vm344, %v1721, 0
    %v1728 = vsel %vm344, %v1723, 0
    %1730 = vmatpush.xpose.msra.mxu0 0.0
    %1731 = vmatpush.xpose.msra.mxu0 0.0
    %1732 = vmatpush.xpose.msra.mxu0 0.0
    %1733 = vmatpush.xpose.msra.mxu0 0.0
    %1734 = vmatpush.xpose.msra.mxu0 0.0
    %1735 = vmatpush.xpose.msra.mxu0 0.0
    %1736 = vmatpush.xpose.msra.mxu0 0.0
    %1737 = vmatpush.xpose.msra.mxu0 0.0
    %1738 = vmatpush.xpose.msra.mxu0 0.0
    %1739 = vmatpush.xpose.msra.mxu0 0.0
    %1740 = vmatpush.xpose.msra.mxu0 0.0
    %1741 = vmatpush.xpose.msra.mxu0 0.0
    %1742 = vmatpush.xpose.msra.mxu0 0.0
    %1743 = vmatpush.xpose.msra.mxu0 0.0
    %1744 = vmatpush.xpose.msra.mxu0 %v1728
    %1745 = vmatpush.xpose.msra.mxu0 %v1726
    %1746 = vmatmul.f32.gmra.mxu0 %v1724
    %v1747 = vpop.f32.mrf.mxu0
    %v1748 = vadd.f32 0.0, %v1747
    %1749 = vdwg.mxu0
    %1750 = vrot.lane.b32.xlu0 %v1209, 104
    %v1751 = vpop.permute.xlu0 %1750
    %1752 = vrot.lane.b32.xlu0 %v1147, 104
    %v1753 = vpop.permute.xlu0 %1752
    %1754 = vrot.lane.b32.xlu0 %v1150, 104
    %v1755 = vpop.permute.xlu0 %1754
    %v1756 = vsel %vm344, %v1751, 0
    %v1758 = vsel %vm344, %v1753, 0
    %v1760 = vsel %vm344, %v1755, 0
    %1762 = vmatpush.xpose.msra.mxu0 0.0
    %1763 = vmatpush.xpose.msra.mxu0 0.0
    %1764 = vmatpush.xpose.msra.mxu0 0.0
    %1765 = vmatpush.xpose.msra.mxu0 0.0
    %1766 = vmatpush.xpose.msra.mxu0 0.0
    %1767 = vmatpush.xpose.msra.mxu0 0.0
    %1768 = vmatpush.xpose.msra.mxu0 0.0
    %1769 = vmatpush.xpose.msra.mxu0 0.0
    %1770 = vmatpush.xpose.msra.mxu0 0.0
    %1771 = vmatpush.xpose.msra.mxu0 0.0
    %1772 = vmatpush.xpose.msra.mxu0 0.0
    %1773 = vmatpush.xpose.msra.mxu0 0.0
    %1774 = vmatpush.xpose.msra.mxu0 0.0
    %1775 = vmatpush.xpose.msra.mxu0 0.0
    %1776 = vmatpush.xpose.msra.mxu0 %v1760
    %1777 = vmatpush.xpose.msra.mxu0 %v1758
    %1778 = vmatmul.f32.gmra.mxu0 %v1756
    %v1779 = vpop.f32.mrf.mxu0
    %v1780 = vadd.f32 0.0, %v1779
    %1781 = vdwg.mxu0
    %v1782 = vsel %vm1268, %v1748, -inf
    %1783 = vmax.xlane.f32.xlu0 %v1782
    %v1784 = vpop.xlane.xlu0 %1783
    %v1785 = vsel %vm1268, %v1780, -inf
    %1786 = vmax.xlane.f32.xlu0 %v1785
    %v1787 = vpop.xlane.xlu0 %1786
    %v1788 = vsub.f32 %v1748, %v1784
    %v1789 = vsub.f32 %v1780, %v1787
    %v1790 = vmul.f32 %v1788, 1.442695
    %v1791 = vpow.pop %v1790
    %v1792 = vmul.f32 %v1789, 1.442695
    %v1793 = vpow.pop %v1792
    %v1794 = vsel %vm1268, %v1791, 0.0
    %1795 = vadd.xlane.f32.xlu0 %v1794
    %v1796 = vpop.xlane.xlu0 %1795
    %v1797 = vsel %vm1268, %v1793, 0.0
    %1798 = vadd.xlane.f32.xlu0 %v1797
    %v1799 = vpop.xlane.xlu0 %1798
    %v1800 = vrcp.pop %v1796
    %v1801 = vrcp.pop %v1799
    %v1802 = vmul.f32 %v1791, %v1800
    %v1803 = vmul.f32 %v1793, %v1801
    %1804 = vrot.lane.b32.xlu0 %v1197, 104
    %v1805 = vpop.permute.xlu0 %1804
    %1806 = vrot.lane.b32.xlu0 %v1200, 104
    %v1807 = vpop.permute.xlu0 %1806
    %v1811 = vsel %vm1268, %v1802, 0
    %1813 = vmatpush.msra.mxu0 0.0
    %1814 = vmatpush.msra.mxu0 0.0
    %1815 = vmatpush.msra.mxu0 0.0
    %1816 = vmatpush.msra.mxu0 0.0
    %1817 = vmatpush.msra.mxu0 0.0
    %1818 = vmatpush.msra.mxu0 0.0
    %1819 = vmatpush.msra.mxu0 0.0
    %1820 = vmatpush.msra.mxu0 0.0
    %1821 = vmatpush.msra.mxu0 0.0
    %1822 = vmatpush.msra.mxu0 0.0
    %1823 = vmatpush.msra.mxu0 0.0
    %1824 = vmatpush.msra.mxu0 0.0
    %1825 = vmatpush.msra.mxu0 0.0
    %1826 = vmatpush.msra.mxu0 0.0
    %1827 = vmatpush.msra.mxu0 %v1807
    %1828 = vmatpush.msra.mxu0 %v1805
    %1829 = vmatmul.f32.gmra.mxu0 %v1811
    %v1830 = vpop.f32.mrf.mxu0
    %v1831 = vadd.f32 0.0, %v1830
    %1832 = vdwg.mxu0
    %1833 = vrot.lane.b32.xlu0 %v1203, 104
    %v1834 = vpop.permute.xlu0 %1833
    %1835 = vrot.lane.b32.xlu0 %v1206, 104
    %v1836 = vpop.permute.xlu0 %1835
    %v1840 = vsel %vm1268, %v1803, 0
    %1842 = vmatpush.msra.mxu0 0.0
    %1843 = vmatpush.msra.mxu0 0.0
    %1844 = vmatpush.msra.mxu0 0.0
    %1845 = vmatpush.msra.mxu0 0.0
    %1846 = vmatpush.msra.mxu0 0.0
    %1847 = vmatpush.msra.mxu0 0.0
    %1848 = vmatpush.msra.mxu0 0.0
    %1849 = vmatpush.msra.mxu0 0.0
    %1850 = vmatpush.msra.mxu0 0.0
    %1851 = vmatpush.msra.mxu0 0.0
    %1852 = vmatpush.msra.mxu0 0.0
    %1853 = vmatpush.msra.mxu0 0.0
    %1854 = vmatpush.msra.mxu0 0.0
    %1855 = vmatpush.msra.mxu0 0.0
    %1856 = vmatpush.msra.mxu0 %v1836
    %1857 = vmatpush.msra.mxu0 %v1834
    %1858 = vmatmul.f32.gmra.mxu0 %v1840
    %v1859 = vpop.f32.mrf.mxu0
    %v1860 = vadd.f32 0.0, %v1859
    %1861 = vdwg.mxu0
    %v1863 = vsel %vm344, %v1831, 0
    %v1866 = vsel %vm344, %v1860, 0
    %1868 = vmatpush.msra.mxu0 0.0
    %1869 = vmatpush.msra.mxu0 0.0
    %1870 = vmatpush.msra.mxu0 0.0
    %1871 = vmatpush.msra.mxu0 0.0
    %1872 = vmatpush.msra.mxu0 0.0
    %1873 = vmatpush.msra.mxu0 0.0
    %1874 = vmatpush.msra.mxu0 0.0
    %1875 = vmatpush.msra.mxu0 0.0
    %1876 = vmatpush.msra.mxu0 0.0
    %1877 = vmatpush.msra.mxu0 0.0
    %1878 = vmatpush.msra.mxu0 0.0
    %1879 = vmatpush.msra.mxu0 0.0
    %1880 = vmatpush.msra.mxu0 0.0
    %1881 = vmatpush.msra.mxu0 0.0
    %1882 = vmatpush.msra.mxu0 0.0
    %1883 = vmatpush.msra.mxu0 %v1058
    %1884 = vmatmul.f32.gmra.mxu0 %v1863
    %v1885 = vpop.f32.mrf.mxu0
    %v1886 = vadd.f32 0.0, %v1885
    %1887 = vmatmul.f32.gmra.mxu0 %v1866
    %v1888 = vpop.f32.mrf.mxu0
    %v1889 = vadd.f32 0.0, %v1888
    %1890 = vdwg.mxu0
    %v1891 = vadd.f32 %v1716, %v1886
    %v1892 = vadd.f32 %v1717, %v1889
    %v1894 = vperm.slane %v1059, 0
    %v1896 = vadd.f32 %v1891, %v1894
    %v1897 = vadd.f32 %v1892, %v1894
    %v1898 = vadd.f32 %v1046, %v1896
    %v1899 = vadd.f32 %v1047, %v1897
    %v1900 = vld [vmem:[#allocation15] sm:$0x1]
    %v1901 = vld [vmem:[#allocation16] sm:$0x1]
    %v1902 = vsel %vm261, %v1898, 0.0
    %1903 = vadd.xlane.f32.xlu0 %v1902
    %v1904 = vpop.xlane.xlu0 %1903
    %v1905 = vsel %vm261, %v1899, 0.0
    %1906 = vadd.xlane.f32.xlu0 %v1905
    %v1907 = vpop.xlane.xlu0 %1906
    %v1908 = vmul.f32 %v1904, %v999
    %v1909 = vmul.f32 %v1907, %v999
    %v1910 = vsub.f32 %v1898, %v1908
    %v1911 = vsub.f32 %v1899, %v1909
    %v1912 = vmul.f32 %v1910, %v1910
    %v1913 = vmul.f32 %v1911, %v1911
    %v1914 = vsel %vm261, %v1912, 0.0
    %1915 = vadd.xlane.f32.xlu0 %v1914
    %v1916 = vpop.xlane.xlu0 %1915
    %v1917 = vsel %vm261, %v1913, 0.0
    %1918 = vadd.xlane.f32.xlu0 %v1917
    %v1919 = vpop.xlane.xlu0 %1918
    %v1920 = vmul.f32 %v1916, %v999
    %v1921 = vmul.f32 %v1919, %v999
    %v1922 = vadd.f32 %v1920, 1e-05
    %v1923 = vadd.f32 %v1921, 1e-05
    %v1924 = vrsqrt.pop %v1922
    %v1925 = vmul.f32 %v1924, %v1922
    %v1926 = vmul.f32 %v1925, %v1924
    %v1927 = vmul.f32 0.5, %v1926
    %v1928 = vsub.f32 1.5, %v1927
    %v1929 = vmul.f32 %v1924, %v1928
    %vm1930 = vweird.f32 %v1922
    %vm1931 = vweird.f32 %v1924
    %vm1932 = vmor %vm1930, %vm1931
    %v1933 = vsel %vm1932, %v1924, %v1929
    %v1934 = vrsqrt.pop %v1923
    %v1935 = vmul.f32 %v1934, %v1923
    %v1936 = vmul.f32 %v1935, %v1934
    %v1937 = vmul.f32 0.5, %v1936
    %v1938 = vsub.f32 1.5, %v1937
    %v1939 = vmul.f32 %v1934, %v1938
    %vm1940 = vweird.f32 %v1923
    %vm1941 = vweird.f32 %v1934
    %vm1942 = vmor %vm1940, %vm1941
    %v1943 = vsel %vm1942, %v1934, %v1939
    %v1944 = vmul.f32 %v1910, %v1933
    %v1945 = vmul.f32 %v1911, %v1943
    %v1947 = vperm.slane %v1900, 0
    %v1949 = vmul.f32 %v1944, %v1947
    %v1950 = vmul.f32 %v1945, %v1947
    %v1952 = vperm.slane %v1901, 0
    %v1954 = vadd.f32 %v1949, %v1952
    %v1955 = vadd.f32 %v1950, %v1952
    %v1956 = vld [vmem:[%s12] sm:$0xff]
    %v1957 = vld [vmem:[%s12 + $0x8] sm:$0xff]
    %v1958 = vld [vmem:[%s12 + $0x10] sm:$0xff]
    %v1959 = vld [vmem:[%s12 + $0x18] sm:$0xff]
    %v1960 = vld [vmem:[#allocation9] sm:$0x1]
    %v1962 = vperm.slane %v1960, 0
    %v1965 = vsel %vm261, %v1954, 0
    %v1968 = vsel %vm261, %v1955, 0
    %1970 = vmatpush.msra.mxu0 0.0
    %1971 = vmatpush.msra.mxu0 0.0
    %1972 = vmatpush.msra.mxu0 0.0
    %1973 = vmatpush.msra.mxu0 0.0
    %1974 = vmatpush.msra.mxu0 0.0
    %1975 = vmatpush.msra.mxu0 0.0
    %1976 = vmatpush.msra.mxu0 0.0
    %1977 = vmatpush.msra.mxu0 0.0
    %1978 = vmatpush.msra.mxu0 0.0
    %1979 = vmatpush.msra.mxu0 0.0
    %1980 = vmatpush.msra.mxu0 0.0
    %1981 = vmatpush.msra.mxu0 0.0
    %1982 = vmatpush.msra.mxu0 %v1959
    %1983 = vmatpush.msra.mxu0 %v1958
    %1984 = vmatpush.msra.mxu0 %v1957
    %1985 = vmatpush.msra.mxu0 %v1956
    %1986 = vmatmul.f32.gmra.mxu0 %v1965
    %v1987 = vpop.f32.mrf.mxu0
    %v1988 = vadd.f32 %v1962, %v1987
    %1989 = vmatmul.f32.gmra.mxu0 %v1968
    %v1990 = vpop.f32.mrf.mxu0
    %v1991 = vadd.f32 %v1962, %v1990
    %1992 = vdwg.mxu0
    %v1993 = vmax.f32 %v1988, 0.0
    %v1994 = vmax.f32 %v1991, 0.0
    %v1995 = vld [vmem:[%s14] sm:$0xff]
    %v1996 = vld [vmem:[%s14 + $0x8] sm:$0xff]
    %v1997 = vld [vmem:[%s14 + $0x10] sm:$0xff]
    %v1998 = vld [vmem:[%s14 + $0x18] sm:$0xff]
    %v1999 = vld [vmem:[%s14 + $0x20] sm:$0xff]
    %v2000 = vld [vmem:[%s14 + $0x28] sm:$0xff]
    %v2001 = vld [vmem:[%s14 + $0x30] sm:$0xff]
    %v2002 = vld [vmem:[%s14 + $0x38] sm:$0xff]
    %v2003 = vld [vmem:[#allocation10] sm:$0x1]
    %v2005 = vperm.slane %v2003, 0
    %vm2007 = vcmask 523264
    %v2009 = vsel %vm2007, %v1993, 0
    %v2012 = vsel %vm2007, %v1994, 0
    %2014 = vmatpush.msra.mxu0 0.0
    %2015 = vmatpush.msra.mxu0 0.0
    %2016 = vmatpush.msra.mxu0 0.0
    %2017 = vmatpush.msra.mxu0 0.0
    %2018 = vmatpush.msra.mxu0 0.0
    %2019 = vmatpush.msra.mxu0 0.0
    %2020 = vmatpush.msra.mxu0 0.0
    %2021 = vmatpush.msra.mxu0 0.0
    %2022 = vmatpush.msra.mxu0 %v2002
    %2023 = vmatpush.msra.mxu0 %v2001
    %2024 = vmatpush.msra.mxu0 %v2000
    %2025 = vmatpush.msra.mxu0 %v1999
    %2026 = vmatpush.msra.mxu0 %v1998
    %2027 = vmatpush.msra.mxu0 %v1997
    %2028 = vmatpush.msra.mxu0 %v1996
    %2029 = vmatpush.msra.mxu0 %v1995
    %2030 = vmatmul.f32.gmra.mxu0 %v2009
    %v2031 = vpop.f32.mrf.mxu0
    %v2032 = vadd.f32 %v2005, %v2031
    %2033 = vmatmul.f32.gmra.mxu0 %v2012
    %v2034 = vpop.f32.mrf.mxu0
    %v2035 = vadd.f32 %v2005, %v2034
    %2036 = vdwg.mxu0
    %v2037 = vadd.f32 %v1954, %v2032
    %v2038 = vadd.f32 %v1955, %v2035
    %v2039 = vld [vmem:[#allocation18] sm:$0x1]
    %v2040 = vld [vmem:[#allocation19] sm:$0x1]
    %v2041 = vsel %vm261, %v2037, 0.0
    %2042 = vadd.xlane.f32.xlu0 %v2041
    %v2043 = vpop.xlane.xlu0 %2042
    %v2044 = vsel %vm261, %v2038, 0.0
    %2045 = vadd.xlane.f32.xlu0 %v2044
    %v2046 = vpop.xlane.xlu0 %2045
    %v2047 = vmul.f32 %v2043, %v999
    %v2048 = vmul.f32 %v2046, %v999
    %v2049 = vsub.f32 %v2037, %v2047
    %v2050 = vsub.f32 %v2038, %v2048
    %v2051 = vmul.f32 %v2049, %v2049
    %v2052 = vmul.f32 %v2050, %v2050
    %v2053 = vsel %vm261, %v2051, 0.0
    %2054 = vadd.xlane.f32.xlu0 %v2053
    %v2055 = vpop.xlane.xlu0 %2054
    %v2056 = vsel %vm261, %v2052, 0.0
    %2057 = vadd.xlane.f32.xlu0 %v2056
    %v2058 = vpop.xlane.xlu0 %2057
    %v2059 = vmul.f32 %v2055, %v999
    %v2060 = vmul.f32 %v2058, %v999
    %v2061 = vadd.f32 %v2059, 1e-05
    %v2062 = vadd.f32 %v2060, 1e-05
    %v2063 = vrsqrt.pop %v2061
    %v2064 = vmul.f32 %v2063, %v2061
    %v2065 = vmul.f32 %v2064, %v2063
    %v2066 = vmul.f32 0.5, %v2065
    %v2067 = vsub.f32 1.5, %v2066
    %v2068 = vmul.f32 %v2063, %v2067
    %vm2069 = vweird.f32 %v2061
    %vm2070 = vweird.f32 %v2063
    %vm2071 = vmor %vm2069, %vm2070
    %v2072 = vsel %vm2071, %v2063, %v2068
    %v2073 = vrsqrt.pop %v2062
    %v2074 = vmul.f32 %v2073, %v2062
    %v2075 = vmul.f32 %v2074, %v2073
    %v2076 = vmul.f32 0.5, %v2075
    %v2077 = vsub.f32 1.5, %v2076
    %v2078 = vmul.f32 %v2073, %v2077
    %vm2079 = vweird.f32 %v2062
    %vm2080 = vweird.f32 %v2073
    %vm2081 = vmor %vm2079, %vm2080
    %v2082 = vsel %vm2081, %v2073, %v2078
    %v2083 = vmul.f32 %v2049, %v2072
    %v2084 = vmul.f32 %v2050, %v2082
    %v2086 = vperm.slane %v2039, 0
    %v2088 = vmul.f32 %v2083, %v2086
    %v2089 = vmul.f32 %v2084, %v2086
    %v2091 = vperm.slane %v2040, 0
    %v2093 = vadd.f32 %v2088, %v2091
    %v2094 = vadd.f32 %v2089, %v2091
    %2095 = vst.msk [vmem:[%s22] sm:$0xff] %vm261, %v2093
    %2096 = vst.msk [vmem:[%s22 + $0x8] sm:$0xff] %vm261, %v2094
    // Predicated region
    $region138: #{transformer_decoder_forward.3} parent=1 // pred_check
      _
    $region139: #{transformer_decoder_forward.3} parent=1 // pred_check_branch
      %2098 = sbr.rel (0) target = $region141
    $region140: #{transformer_decoder_forward.3} parent=1 // pred_region
      _
    $region141: #{transformer_decoder_forward.3} parent=1 // pred_fallthru
      _
    // Predicated region
    $region142: #{transformer_decoder_forward.3} parent=1 // pred_check
      _
    $region143: #{transformer_decoder_forward.3} parent=1 // pred_check_branch
      %2100 = sbr.rel (0) target = $region145
    $region144: #{transformer_decoder_forward.3} parent=1 // pred_region
      _
    $region145: #{transformer_decoder_forward.3} parent=1 // pred_fallthru
      _
    %2101 = vsyncpa [#allocation3], 1
    %2102 = vsyncpa [#allocation5], 1
    %2103 = vsyncpa [#allocation8], 1
    %2104 = vsyncpa [#allocation11], 1
    %2105 = vsyncpa [#allocation14], 1
    %2106 = vsyncpa [#allocation17], 1
    %2107 = vsyncpa [#allocation20], 1

// kernel: transformer_decoder_forward.4
$region0: #{transformer_decoder_forward.4}
  #allocation0 [shape = 'u32[]', space=smem, size = 0x4, offset = 0x4, fixed_abs, tag = 'smem constant byte address 0x4 - core index']
  #allocation1 [shape = 'u32[72,128]{1,0:T(1,128)}', space=vmem, size = 0x9000, scoped, tag = 'internal scratch']
  %s0 = inlined_call_operand.vmem [shape: f32[2,8,32], index: 0, kind: input, shape index: {}]
  %s1 = inlined_call_operand.vmem [shape: f32[2,16,32], index: 1, kind: input, shape index: {}]
  %s2 = inlined_call_operand.vmem [shape: f32[2,16,32], index: 2, kind: input, shape index: {}]
  %s3 = inlined_call_operand.vmem [shape: f32[2,8,32], index: 3, kind: input, shape index: {}]
  %s4 = inlined_call_operand.vmem [shape: f32[32,96], index: 4, kind: input, shape index: {}]
  %s5 = inlined_call_operand.vmem [shape: f32[1,96], index: 5, kind: input, shape index: {}]
  %s6 = inlined_call_operand.vmem [shape: f32[32,32], index: 6, kind: input, shape index: {}]
  %s7 = inlined_call_operand.vmem [shape: f32[1,32], index: 7, kind: input, shape index: {}]
  %s8 = inlined_call_operand.vmem [shape: f32[32,96], index: 8, kind: input, shape index: {}]
  %s9 = inlined_call_operand.hbm [shape: f32[1,96], index: 9, kind: input, shape index: {}]
  %s10 = inlined_call_operand.vmem [shape: f32[32,32], index: 10, kind: input, shape index: {}]
  %s11 = inlined_call_operand.hbm [shape: f32[1,32], index: 11, kind: input, shape index: {}]
  %s12 = inlined_call_operand.vmem [shape: f32[32,64], index: 12, kind: input, shape index: {}]
  %s13 = inlined_call_operand.hbm [shape: f32[1,64], index: 13, kind: input, shape index: {}]
  %s14 = inlined_call_operand.vmem [shape: f32[64,32], index: 14, kind: input, shape index: {}]
  %s15 = inlined_call_operand.hbm [shape: f32[1,32], index: 15, kind: input, shape index: {}]
  %s16 = inlined_call_operand.hbm [shape: f32[1,32], index: 16, kind: input, shape index: {}]
  %s17 = inlined_call_operand.hbm [shape: f32[1,32], index: 17, kind: input, shape index: {}]
  %s18 = inlined_call_operand.vmem [shape: f32[1,32], index: 18, kind: input, shape index: {}]
  %s19 = inlined_call_operand.vmem [shape: f32[1,32], index: 19, kind: input, shape index: {}]
  %s20 = inlined_call_operand.hbm [shape: f32[1,32], index: 20, kind: input, shape index: {}]
  %s21 = inlined_call_operand.hbm [shape: f32[1,32], index: 21, kind: input, shape index: {}]
  %s22 = inlined_call_operand.vmem [shape: f32[2,8,32], index: 22, kind: output, shape index: {0}]
  %s23 = inlined_call_operand.hbm [shape: f32[2,8,16], index: 23, kind: output, shape index: {1}]
  %24 = xla_tuple %s22, %s23
  %s25 = sld [smem:[#allocation0]]
  $region138: #{transformer_decoder_forward.4} parent=0
    _
  %s27 = ssub.s32 1, %s25
  %s28 = scalar_select 0, %s27, %s25
  $region1: #{transformer_decoder_forward.4} parent=0
    #allocation2 [shape = 'u8[512]{0}', space=vmem, size = 0x400, scoped, tag = 'input window, operand 9, single buffered']
    #allocation3 [shape = 's32[1]{0}', space=sflag, size = 0x4, scoped, tag = 'scoped memory for transformer_decoder_forward.4']
    #allocation4 [shape = 's32[1]{0}', space=sflag, size = 0x4, scoped, tag = 'scoped memory for transformer_decoder_forward.4']
    #allocation5 [shape = 'u8[512]{0}', space=vmem, size = 0x400, scoped, tag = 'input window, operand 11, single buffered']
    #allocation6 [shape = 's32[1]{0}', space=sflag, size = 0x4, scoped, tag = 'scoped memory for transformer_decoder_forward.4']
    #allocation7 [shape = 'u8[512]{0}', space=vmem, size = 0x400, scoped, tag = 'input window, operand 13, single buffered']
    #allocation8 [shape = 'u8[512]{0}', space=vmem, size = 0x400, scoped, tag = 'input window, operand 15, single buffered']
    #allocation9 [shape = 's32[1]{0}', space=sflag, size = 0x4, scoped, tag = 'scoped memory for transformer_decoder_forward.4']
    #allocation10 [shape = 'u8[512]{0}', space=vmem, size = 0x400, scoped, tag = 'input window, operand 16, single buffered']
    #allocation11 [shape = 'u8[512]{0}', space=vmem, size = 0x400, scoped, tag = 'input window, operand 17, single buffered']
    #allocation12 [shape = 's32[1]{0}', space=sflag, size = 0x4, scoped, tag = 'scoped memory for transformer_decoder_forward.4']
    #allocation13 [shape = 'u8[512]{0}', space=vmem, size = 0x400, scoped, tag = 'input window, operand 20, single buffered']
    #allocation14 [shape = 'u8[512]{0}', space=vmem, size = 0x400, scoped, tag = 'input window, operand 21, single buffered']
    #allocation15 [shape = 's32[1]{0}', space=sflag, size = 0x4, scoped, tag = 'scoped memory for transformer_decoder_forward.4']
    #allocation16 [shape = 'u8[8192]{0}', space=vmem, size = 0x2000, scoped, tag = 'output window, operand 1, single buffered']
    %29 = vsyncpa [#allocation3], 0
    %30 = vsyncpa [#allocation6], 0
    %31 = vsyncpa [#allocation9], 0
    %32 = vsyncpa [#allocation12], 0
    %33 = vsyncpa [#allocation15], 0
    %34 = vsyncpa [#allocation4], 0
    // Predicated region
    $region2: #{transformer_decoder_forward.4} parent=1 // pred_check
      _
    $region3: #{transformer_decoder_forward.4} parent=1 // pred_check_branch
      %36 = sbr.rel (0) target = $region5
    $region4: #{transformer_decoder_forward.4} parent=1 // pred_region
      _
    $region5: #{transformer_decoder_forward.4} parent=1 // pred_fallthru
      _
    // Predicated region
    $region6: #{transformer_decoder_forward.4} parent=1 // pred_check
      _
    $region7: #{transformer_decoder_forward.4} parent=1 // pred_check_branch
      %38 = sbr.rel (0) target = $region9
    $region8: #{transformer_decoder_forward.4} parent=1 // pred_region
      _
    $region9: #{transformer_decoder_forward.4} parent=1 // pred_fallthru
      _
    // Predicated region
    $region10: #{transformer_decoder_forward.4} parent=1 // pred_check
      _
    $region11: #{transformer_decoder_forward.4} parent=1 // pred_check_branch
      %40 = sbr.rel (0) target = $region13
    $region12: #{transformer_decoder_forward.4} parent=1 // pred_region
      _
    $region13: #{transformer_decoder_forward.4} parent=1 // pred_fallthru
      _
    // Predicated region
    $region14: #{transformer_decoder_forward.4} parent=1 // pred_check
      _
    $region15: #{transformer_decoder_forward.4} parent=1 // pred_check_branch
      %42 = sbr.rel (0) target = $region17
    $region16: #{transformer_decoder_forward.4} parent=1 // pred_region
      _
    $region17: #{transformer_decoder_forward.4} parent=1 // pred_fallthru
      _
    // Predicated region
    $region18: #{transformer_decoder_forward.4} parent=1 // pred_check
      _
    $region19: #{transformer_decoder_forward.4} parent=1 // pred_check_branch
      %44 = sbr.rel (0) target = $region21
    $region20: #{transformer_decoder_forward.4} parent=1 // pred_region
      _
    $region21: #{transformer_decoder_forward.4} parent=1 // pred_fallthru
      _
    // Predicated region
    $region22: #{transformer_decoder_forward.4} parent=1 // pred_check
      _
    $region23: #{transformer_decoder_forward.4} parent=1 // pred_check_branch
      %46 = sbr.rel (0) target = $region25
    $region24: #{transformer_decoder_forward.4} parent=1 // pred_region
      _
    $region25: #{transformer_decoder_forward.4} parent=1 // pred_fallthru
      _
    // Predicated region
    $region26: #{transformer_decoder_forward.4} parent=1 // pred_check
      _
    $region27: #{transformer_decoder_forward.4} parent=1 // pred_check_branch
      %48 = sbr.rel (0) target = $region29
    $region28: #{transformer_decoder_forward.4} parent=1 // pred_region
      _
    $region29: #{transformer_decoder_forward.4} parent=1 // pred_fallthru
      _
    // Predicated region
    $region30: #{transformer_decoder_forward.4} parent=1 // pred_check
      _
    $region31: #{transformer_decoder_forward.4} parent=1 // pred_check_branch
      %50 = sbr.rel (0) target = $region33
    $region32: #{transformer_decoder_forward.4} parent=1 // pred_region
      _
    $region33: #{transformer_decoder_forward.4} parent=1 // pred_fallthru
      _
    // Predicated region
    $region34: #{transformer_decoder_forward.4} parent=1 // pred_check
      _
    $region35: #{transformer_decoder_forward.4} parent=1 // pred_check_branch
      %52 = sbr.rel (0) target = $region37
    $region36: #{transformer_decoder_forward.4} parent=1 // pred_region
      _
    $region37: #{transformer_decoder_forward.4} parent=1 // pred_fallthru
      _
    // Predicated region
    $region38: #{transformer_decoder_forward.4} parent=1 // pred_check
      _
    $region39: #{transformer_decoder_forward.4} parent=1 // pred_check_branch
      %54 = sbr.rel (0) target = $region41
    $region40: #{transformer_decoder_forward.4} parent=1 // pred_region
      %56 = vsyncadd [#allocation3], 0
      %s58 = sshll.u32 %s9, 4
      %s59 = int_to_ptr.hbm [resolvable:$true] %s58
      %s60 = sshll.u32 [#allocation2], 4
      %s61 = int_to_ptr.vmem [resolvable:$true] %s60
      %63 = dma.hbm_to_vmem [thread:$0]  %s59, 16, %s61, [#allocation3]
    $region41: #{transformer_decoder_forward.4} parent=1 // pred_fallthru
      _
    // Predicated region
    $region42: #{transformer_decoder_forward.4} parent=1 // pred_check
      _
    $region43: #{transformer_decoder_forward.4} parent=1 // pred_check_branch
      %65 = sbr.rel (0) target = $region45
    $region44: #{transformer_decoder_forward.4} parent=1 // pred_region
      _
    $region45: #{transformer_decoder_forward.4} parent=1 // pred_fallthru
      _
    // Predicated region
    $region46: #{transformer_decoder_forward.4} parent=1 // pred_check
      _
    $region47: #{transformer_decoder_forward.4} parent=1 // pred_check_branch
      %67 = sbr.rel (0) target = $region49
    $region48: #{transformer_decoder_forward.4} parent=1 // pred_region
      %69 = vsyncadd [#allocation6], 0
      %s71 = sshll.u32 %s11, 4
      %s72 = int_to_ptr.hbm [resolvable:$true] %s71
      %s73 = sshll.u32 [#allocation5], 4
      %s74 = int_to_ptr.vmem [resolvable:$true] %s73
      %76 = dma.hbm_to_vmem [thread:$0]  %s72, 16, %s74, [#allocation6]
    $region49: #{transformer_decoder_forward.4} parent=1 // pred_fallthru
      _
    // Predicated region
    $region50: #{transformer_decoder_forward.4} parent=1 // pred_check
      _
    $region51: #{transformer_decoder_forward.4} parent=1 // pred_check_branch
      %78 = sbr.rel (0) target = $region53
    $region52: #{transformer_decoder_forward.4} parent=1 // pred_region
      _
    $region53: #{transformer_decoder_forward.4} parent=1 // pred_fallthru
      _
    // Predicated region
    $region54: #{transformer_decoder_forward.4} parent=1 // pred_check
      _
    $region55: #{transformer_decoder_forward.4} parent=1 // pred_check_branch
      %80 = sbr.rel (0) target = $region57
    $region56: #{transformer_decoder_forward.4} parent=1 // pred_region
      %82 = vsyncadd [#allocation6], 0
      %s84 = sshll.u32 %s13, 4
      %s85 = int_to_ptr.hbm [resolvable:$true] %s84
      %s86 = sshll.u32 [#allocation7], 4
      %s87 = int_to_ptr.vmem [resolvable:$true] %s86
      %89 = dma.hbm_to_vmem [thread:$0]  %s85, 16, %s87, [#allocation6]
    $region57: #{transformer_decoder_forward.4} parent=1 // pred_fallthru
      _
    // Predicated region
    $region58: #{transformer_decoder_forward.4} parent=1 // pred_check
      _
    $region59: #{transformer_decoder_forward.4} parent=1 // pred_check_branch
      %91 = sbr.rel (0) target = $region61
    $region60: #{transformer_decoder_forward.4} parent=1 // pred_region
      _
    $region61: #{transformer_decoder_forward.4} parent=1 // pred_fallthru
      _
    // Predicated region
    $region62: #{transformer_decoder_forward.4} parent=1 // pred_check
      _
    $region63: #{transformer_decoder_forward.4} parent=1 // pred_check_branch
      %93 = sbr.rel (0) target = $region65
    $region64: #{transformer_decoder_forward.4} parent=1 // pred_region
      %95 = vsyncadd [#allocation9], 0
      %s97 = sshll.u32 %s15, 4
      %s98 = int_to_ptr.hbm [resolvable:$true] %s97
      %s99 = sshll.u32 [#allocation8], 4
      %s100 = int_to_ptr.vmem [resolvable:$true] %s99
      %102 = dma.hbm_to_vmem [thread:$0]  %s98, 16, %s100, [#allocation9]
    $region65: #{transformer_decoder_forward.4} parent=1 // pred_fallthru
      _
    // Predicated region
    $region66: #{transformer_decoder_forward.4} parent=1 // pred_check
      _
    $region67: #{transformer_decoder_forward.4} parent=1 // pred_check_branch
      %104 = sbr.rel (0) target = $region69
    $region68: #{transformer_decoder_forward.4} parent=1 // pred_region
      %106 = vsyncadd [#allocation9], 0
      %s108 = sshll.u32 %s16, 4
      %s109 = int_to_ptr.hbm [resolvable:$true] %s108
      %s110 = sshll.u32 [#allocation10], 4
      %s111 = int_to_ptr.vmem [resolvable:$true] %s110
      %113 = dma.hbm_to_vmem [thread:$0]  %s109, 16, %s111, [#allocation9]
    $region69: #{transformer_decoder_forward.4} parent=1 // pred_fallthru
      _
    // Predicated region
    $region70: #{transformer_decoder_forward.4} parent=1 // pred_check
      _
    $region71: #{transformer_decoder_forward.4} parent=1 // pred_check_branch
      %115 = sbr.rel (0) target = $region73
    $region72: #{transformer_decoder_forward.4} parent=1 // pred_region
      %117 = vsyncadd [#allocation12], 0
      %s119 = sshll.u32 %s17, 4
      %s120 = int_to_ptr.hbm [resolvable:$true] %s119
      %s121 = sshll.u32 [#allocation11], 4
      %s122 = int_to_ptr.vmem [resolvable:$true] %s121
      %124 = dma.hbm_to_vmem [thread:$0]  %s120, 16, %s122, [#allocation12]
    $region73: #{transformer_decoder_forward.4} parent=1 // pred_fallthru
      _
    // Predicated region
    $region74: #{transformer_decoder_forward.4} parent=1 // pred_check
      _
    $region75: #{transformer_decoder_forward.4} parent=1 // pred_check_branch
      %126 = sbr.rel (0) target = $region77
    $region76: #{transformer_decoder_forward.4} parent=1 // pred_region
      _
    $region77: #{transformer_decoder_forward.4} parent=1 // pred_fallthru
      _
    // Predicated region
    $region78: #{transformer_decoder_forward.4} parent=1 // pred_check
      _
    $region79: #{transformer_decoder_forward.4} parent=1 // pred_check_branch
      %128 = sbr.rel (0) target = $region81
    $region80: #{transformer_decoder_forward.4} parent=1 // pred_region
      _
    $region81: #{transformer_decoder_forward.4} parent=1 // pred_fallthru
      _
    // Predicated region
    $region82: #{transformer_decoder_forward.4} parent=1 // pred_check
      _
    $region83: #{transformer_decoder_forward.4} parent=1 // pred_check_branch
      %130 = sbr.rel (0) target = $region85
    $region84: #{transformer_decoder_forward.4} parent=1 // pred_region
      %132 = vsyncadd [#allocation12], 0
      %s134 = sshll.u32 %s20, 4
      %s135 = int_to_ptr.hbm [resolvable:$true] %s134
      %s136 = sshll.u32 [#allocation13], 4
      %s137 = int_to_ptr.vmem [resolvable:$true] %s136
      %139 = dma.hbm_to_vmem [thread:$0]  %s135, 16, %s137, [#allocation12]
    $region85: #{transformer_decoder_forward.4} parent=1 // pred_fallthru
      _
    // Predicated region
    $region86: #{transformer_decoder_forward.4} parent=1 // pred_check
      _
    $region87: #{transformer_decoder_forward.4} parent=1 // pred_check_branch
      %141 = sbr.rel (0) target = $region89
    $region88: #{transformer_decoder_forward.4} parent=1 // pred_region
      %143 = vsyncadd [#allocation15], 0
      %s145 = sshll.u32 %s21, 4
      %s146 = int_to_ptr.hbm [resolvable:$true] %s145
      %s147 = sshll.u32 [#allocation14], 4
      %s148 = int_to_ptr.vmem [resolvable:$true] %s147
      %150 = dma.hbm_to_vmem [thread:$0]  %s146, 16, %s148, [#allocation15]
    $region89: #{transformer_decoder_forward.4} parent=1 // pred_fallthru
      _
    // Predicated region
    $region90: #{transformer_decoder_forward.4} parent=1 // pred_check
      _
    $region91: #{transformer_decoder_forward.4} parent=1 // pred_check_branch
      %152 = sbr.rel (0) target = $region93
    $region92: #{transformer_decoder_forward.4} parent=1 // pred_region
      %154 = dma.done [#allocation3], 16
    $region93: #{transformer_decoder_forward.4} parent=1 // pred_fallthru
      _
    // Predicated region
    $region94: #{transformer_decoder_forward.4} parent=1 // pred_check
      _
    $region95: #{transformer_decoder_forward.4} parent=1 // pred_check_branch
      %156 = sbr.rel (0) target = $region97
    $region96: #{transformer_decoder_forward.4} parent=1 // pred_region
      %158 = dma.done [#allocation6], 16
    $region97: #{transformer_decoder_forward.4} parent=1 // pred_fallthru
      _
    // Predicated region
    $region98: #{transformer_decoder_forward.4} parent=1 // pred_check
      _
    $region99: #{transformer_decoder_forward.4} parent=1 // pred_check_branch
      %160 = sbr.rel (0) target = $region101
    $region100: #{transformer_decoder_forward.4} parent=1 // pred_region
      %162 = dma.done [#allocation6], 16
    $region101: #{transformer_decoder_forward.4} parent=1 // pred_fallthru
      _
    // Predicated region
    $region102: #{transformer_decoder_forward.4} parent=1 // pred_check
      _
    $region103: #{transformer_decoder_forward.4} parent=1 // pred_check_branch
      %164 = sbr.rel (0) target = $region105
    $region104: #{transformer_decoder_forward.4} parent=1 // pred_region
      %166 = dma.done [#allocation9], 16
    $region105: #{transformer_decoder_forward.4} parent=1 // pred_fallthru
      _
    // Predicated region
    $region106: #{transformer_decoder_forward.4} parent=1 // pred_check
      _
    $region107: #{transformer_decoder_forward.4} parent=1 // pred_check_branch
      %168 = sbr.rel (0) target = $region109
    $region108: #{transformer_decoder_forward.4} parent=1 // pred_region
      %170 = dma.done [#allocation9], 16
    $region109: #{transformer_decoder_forward.4} parent=1 // pred_fallthru
      _
    // Predicated region
    $region110: #{transformer_decoder_forward.4} parent=1 // pred_check
      _
    $region111: #{transformer_decoder_forward.4} parent=1 // pred_check_branch
      %172 = sbr.rel (0) target = $region113
    $region112: #{transformer_decoder_forward.4} parent=1 // pred_region
      %174 = dma.done [#allocation12], 16
    $region113: #{transformer_decoder_forward.4} parent=1 // pred_fallthru
      _
    // Predicated region
    $region114: #{transformer_decoder_forward.4} parent=1 // pred_check
      _
    $region115: #{transformer_decoder_forward.4} parent=1 // pred_check_branch
      %176 = sbr.rel (0) target = $region117
    $region116: #{transformer_decoder_forward.4} parent=1 // pred_region
      %178 = dma.done [#allocation12], 16
    $region117: #{transformer_decoder_forward.4} parent=1 // pred_fallthru
      _
    // Predicated region
    $region118: #{transformer_decoder_forward.4} parent=1 // pred_check
      _
    $region119: #{transformer_decoder_forward.4} parent=1 // pred_check_branch
      %180 = sbr.rel (0) target = $region121
    $region120: #{transformer_decoder_forward.4} parent=1 // pred_region
      %182 = dma.done [#allocation15], 16
    $region121: #{transformer_decoder_forward.4} parent=1 // pred_fallthru
      _
    %v183 = vld [vmem:[%s0] sm:$0xff]
    %v184 = vld [vmem:[%s0 + $0x8] sm:$0xff]
    %v185 = vld [vmem:[%s3] sm:$0xff]
    %v186 = vld [vmem:[%s3 + $0x8] sm:$0xff]
    %v187 = vld [vmem:[%s1] sm:$0xff]
    %v188 = vld [vmem:[%s1 + $0x8] sm:$0xff]
    %v189 = vld [vmem:[%s1 + $0x10] sm:$0xff]
    %v190 = vld [vmem:[%s1 + $0x18] sm:$0xff]
    %v191 = vld [vmem:[%s2] sm:$0xff]
    %v192 = vld [vmem:[%s2 + $0x8] sm:$0xff]
    %v193 = vld [vmem:[%s2 + $0x10] sm:$0xff]
    %v194 = vld [vmem:[%s2 + $0x18] sm:$0xff]
    %v195 = vadd.f32 %v183, %v185
    %v196 = vadd.f32 %v184, %v186
    %v197 = vld [vmem:[%s4] sm:$0xff]
    %v198 = vld [vmem:[%s4 + $0x8] sm:$0xff]
    %v199 = vld [vmem:[%s4 + $0x10] sm:$0xff]
    %v200 = vld [vmem:[%s4 + $0x18] sm:$0xff]
    %v201 = vld [vmem:[%s5] sm:$0x1]
    %v202 = vld [vmem:[%s6] sm:$0xff]
    %v203 = vld [vmem:[%s6 + $0x8] sm:$0xff]
    %v204 = vld [vmem:[%s6 + $0x10] sm:$0xff]
    %v205 = vld [vmem:[%s6 + $0x18] sm:$0xff]
    %v206 = vld [vmem:[%s7] sm:$0x1]
    %v208 = vperm.slane %v201, 0
    %vm210 = vcmask 261120
    %v212 = vsel %vm210, %v195, 0
    %v215 = vsel %vm210, %v196, 0
    %217 = vmatpush.msra.mxu0 0.0
    %218 = vmatpush.msra.mxu0 0.0
    %219 = vmatpush.msra.mxu0 0.0
    %220 = vmatpush.msra.mxu0 0.0
    %221 = vmatpush.msra.mxu0 0.0
    %222 = vmatpush.msra.mxu0 0.0
    %223 = vmatpush.msra.mxu0 0.0
    %224 = vmatpush.msra.mxu0 0.0
    %225 = vmatpush.msra.mxu0 0.0
    %226 = vmatpush.msra.mxu0 0.0
    %227 = vmatpush.msra.mxu0 0.0
    %228 = vmatpush.msra.mxu0 0.0
    %229 = vmatpush.msra.mxu0 %v200
    %230 = vmatpush.msra.mxu0 %v199
    %231 = vmatpush.msra.mxu0 %v198
    %232 = vmatpush.msra.mxu0 %v197
    %233 = vmatmul.f32.gmra.mxu0 %v212
    %v234 = vpop.f32.mrf.mxu0
    %v235 = vadd.f32 %v208, %v234
    %236 = vmatmul.f32.gmra.mxu0 %v215
    %v237 = vpop.f32.mrf.mxu0
    %v238 = vadd.f32 %v208, %v237
    %239 = vdwg.mxu0
    %244 = vrot.lane.b32.xlu0 %v197, 64
    %v245 = vpop.permute.xlu0 %244
    %246 = vrot.lane.b32.xlu0 %v198, 64
    %v247 = vpop.permute.xlu0 %246
    %248 = vrot.lane.b32.xlu0 %v199, 64
    %v249 = vpop.permute.xlu0 %248
    %250 = vrot.lane.b32.xlu0 %v200, 64
    %v251 = vpop.permute.xlu0 %250
    %256 = vrot.lane.b32.xlu0 %v208, 64
    %v257 = vpop.permute.xlu0 %256
    %v260 = vsel %vm210, %v183, 0
    %v263 = vsel %vm210, %v184, 0
    %265 = vmatpush.msra.mxu0 0.0
    %266 = vmatpush.msra.mxu0 0.0
    %267 = vmatpush.msra.mxu0 0.0
    %268 = vmatpush.msra.mxu0 0.0
    %269 = vmatpush.msra.mxu0 0.0
    %270 = vmatpush.msra.mxu0 0.0
    %271 = vmatpush.msra.mxu0 0.0
    %272 = vmatpush.msra.mxu0 0.0
    %273 = vmatpush.msra.mxu0 0.0
    %274 = vmatpush.msra.mxu0 0.0
    %275 = vmatpush.msra.mxu0 0.0
    %276 = vmatpush.msra.mxu0 0.0
    %277 = vmatpush.msra.mxu0 %v251
    %278 = vmatpush.msra.mxu0 %v249
    %279 = vmatpush.msra.mxu0 %v247
    %280 = vmatpush.msra.mxu0 %v245
    %281 = vmatmul.f32.gmra.mxu0 %v260
    %v282 = vpop.f32.mrf.mxu0
    %v283 = vadd.f32 %v257, %v282
    %284 = vmatmul.f32.gmra.mxu0 %v263
    %v285 = vpop.f32.mrf.mxu0
    %v286 = vadd.f32 %v257, %v285
    %287 = vdwg.mxu0
    %v288 = vmul.f32 %v235, 0.35355338
    %v289 = vmul.f32 %v238, 0.35355338
    %291 = vrot.lane.b32.xlu0 %v235, 96
    %v292 = vpop.permute.xlu0 %291
    %vm293 = vcmask 64512
    %v295 = vsel %vm293, %v288, 0
    %v297 = vsel %vm293, %v292, 0
    %299 = vmatpush.xpose.msra.mxu0 0.0
    %300 = vmatpush.xpose.msra.mxu0 0.0
    %301 = vmatpush.xpose.msra.mxu0 0.0
    %302 = vmatpush.xpose.msra.mxu0 0.0
    %303 = vmatpush.xpose.msra.mxu0 0.0
    %304 = vmatpush.xpose.msra.mxu0 0.0
    %305 = vmatpush.xpose.msra.mxu0 0.0
    %306 = vmatpush.xpose.msra.mxu0 0.0
    %307 = vmatpush.xpose.msra.mxu0 0.0
    %308 = vmatpush.xpose.msra.mxu0 0.0
    %309 = vmatpush.xpose.msra.mxu0 0.0
    %310 = vmatpush.xpose.msra.mxu0 0.0
    %311 = vmatpush.xpose.msra.mxu0 0.0
    %312 = vmatpush.xpose.msra.mxu0 0.0
    %313 = vmatpush.xpose.msra.mxu0 0.0
    %314 = vmatpush.xpose.msra.mxu0 %v297
    %315 = vmatmul.f32.gmra.mxu0 %v295
    %v316 = vpop.f32.mrf.mxu0
    %v317 = vadd.f32 0.0, %v316
    %318 = vdwg.mxu0
    %320 = vrot.lane.b32.xlu0 %v238, 96
    %v321 = vpop.permute.xlu0 %320
    %v323 = vsel %vm293, %v289, 0
    %v325 = vsel %vm293, %v321, 0
    %327 = vmatpush.xpose.msra.mxu0 0.0
    %328 = vmatpush.xpose.msra.mxu0 0.0
    %329 = vmatpush.xpose.msra.mxu0 0.0
    %330 = vmatpush.xpose.msra.mxu0 0.0
    %331 = vmatpush.xpose.msra.mxu0 0.0
    %332 = vmatpush.xpose.msra.mxu0 0.0
    %333 = vmatpush.xpose.msra.mxu0 0.0
    %334 = vmatpush.xpose.msra.mxu0 0.0
    %335 = vmatpush.xpose.msra.mxu0 0.0
    %336 = vmatpush.xpose.msra.mxu0 0.0
    %337 = vmatpush.xpose.msra.mxu0 0.0
    %338 = vmatpush.xpose.msra.mxu0 0.0
    %339 = vmatpush.xpose.msra.mxu0 0.0
    %340 = vmatpush.xpose.msra.mxu0 0.0
    %341 = vmatpush.xpose.msra.mxu0 0.0
    %342 = vmatpush.xpose.msra.mxu0 %v325
    %343 = vmatmul.f32.gmra.mxu0 %v323
    %v344 = vpop.f32.mrf.mxu0
    %v345 = vadd.f32 0.0, %v344
    %346 = vdwg.mxu0
    %v347 = vsel %vm293, %v317, -inf
    %348 = vmax.xlane.f32.xlu0 %v347
    %v349 = vpop.xlane.xlu0 %348
    %v350 = vsel %vm293, %v345, -inf
    %351 = vmax.xlane.f32.xlu0 %v350
    %v352 = vpop.xlane.xlu0 %351
    %v353 = vsub.f32 %v317, %v349
    %v354 = vsub.f32 %v345, %v352
    %v355 = vmul.f32 %v353, 1.442695
    %v356 = vpow.pop %v355
    %v357 = vmul.f32 %v354, 1.442695
    %v358 = vpow.pop %v357
    %v359 = vsel %vm293, %v356, 0.0
    %360 = vadd.xlane.f32.xlu0 %v359
    %v361 = vpop.xlane.xlu0 %360
    %v362 = vsel %vm293, %v358, 0.0
    %363 = vadd.xlane.f32.xlu0 %v362
    %v364 = vpop.xlane.xlu0 %363
    %v365 = vrcp.pop %v361
    %v366 = vrcp.pop %v364
    %v367 = vmul.f32 %v356, %v365
    %v368 = vmul.f32 %v358, %v366
    %v370 = vsel %vm293, %v367, 0
    %372 = vmatpush.msra.mxu0 0.0
    %373 = vmatpush.msra.mxu0 0.0
    %374 = vmatpush.msra.mxu0 0.0
    %375 = vmatpush.msra.mxu0 0.0
    %376 = vmatpush.msra.mxu0 0.0
    %377 = vmatpush.msra.mxu0 0.0
    %378 = vmatpush.msra.mxu0 0.0
    %379 = vmatpush.msra.mxu0 0.0
    %380 = vmatpush.msra.mxu0 0.0
    %381 = vmatpush.msra.mxu0 0.0
    %382 = vmatpush.msra.mxu0 0.0
    %383 = vmatpush.msra.mxu0 0.0
    %384 = vmatpush.msra.mxu0 0.0
    %385 = vmatpush.msra.mxu0 0.0
    %386 = vmatpush.msra.mxu0 0.0
    %387 = vmatpush.msra.mxu0 %v283
    %388 = vmatmul.f32.gmra.mxu0 %v370
    %v389 = vpop.f32.mrf.mxu0
    %v390 = vadd.f32 0.0, %v389
    %391 = vdwg.mxu0
    %v393 = vsel %vm293, %v368, 0
    %395 = vmatpush.msra.mxu0 0.0
    %396 = vmatpush.msra.mxu0 0.0
    %397 = vmatpush.msra.mxu0 0.0
    %398 = vmatpush.msra.mxu0 0.0
    %399 = vmatpush.msra.mxu0 0.0
    %400 = vmatpush.msra.mxu0 0.0
    %401 = vmatpush.msra.mxu0 0.0
    %402 = vmatpush.msra.mxu0 0.0
    %403 = vmatpush.msra.mxu0 0.0
    %404 = vmatpush.msra.mxu0 0.0
    %405 = vmatpush.msra.mxu0 0.0
    %406 = vmatpush.msra.mxu0 0.0
    %407 = vmatpush.msra.mxu0 0.0
    %408 = vmatpush.msra.mxu0 0.0
    %409 = vmatpush.msra.mxu0 0.0
    %410 = vmatpush.msra.mxu0 %v286
    %411 = vmatmul.f32.gmra.mxu0 %v393
    %v412 = vpop.f32.mrf.mxu0
    %v413 = vadd.f32 0.0, %v412
    %414 = vdwg.mxu0
    %415 = vrot.lane.b32.xlu0 %v288, 120
    %v416 = vpop.permute.xlu0 %415
    %417 = vrot.lane.b32.xlu0 %v235, 88
    %v418 = vpop.permute.xlu0 %417
    %v419 = vsel %vm293, %v416, 0
    %v421 = vsel %vm293, %v418, 0
    %423 = vmatpush.xpose.msra.mxu0 0.0
    %424 = vmatpush.xpose.msra.mxu0 0.0
    %425 = vmatpush.xpose.msra.mxu0 0.0
    %426 = vmatpush.xpose.msra.mxu0 0.0
    %427 = vmatpush.xpose.msra.mxu0 0.0
    %428 = vmatpush.xpose.msra.mxu0 0.0
    %429 = vmatpush.xpose.msra.mxu0 0.0
    %430 = vmatpush.xpose.msra.mxu0 0.0
    %431 = vmatpush.xpose.msra.mxu0 0.0
    %432 = vmatpush.xpose.msra.mxu0 0.0
    %433 = vmatpush.xpose.msra.mxu0 0.0
    %434 = vmatpush.xpose.msra.mxu0 0.0
    %435 = vmatpush.xpose.msra.mxu0 0.0
    %436 = vmatpush.xpose.msra.mxu0 0.0
    %437 = vmatpush.xpose.msra.mxu0 0.0
    %438 = vmatpush.xpose.msra.mxu0 %v421
    %439 = vmatmul.f32.gmra.mxu0 %v419
    %v440 = vpop.f32.mrf.mxu0
    %v441 = vadd.f32 0.0, %v440
    %442 = vdwg.mxu0
    %443 = vrot.lane.b32.xlu0 %v289, 120
    %v444 = vpop.permute.xlu0 %443
    %445 = vrot.lane.b32.xlu0 %v238, 88
    %v446 = vpop.permute.xlu0 %445
    %v447 = vsel %vm293, %v444, 0
    %v449 = vsel %vm293, %v446, 0
    %451 = vmatpush.xpose.msra.mxu0 0.0
    %452 = vmatpush.xpose.msra.mxu0 0.0
    %453 = vmatpush.xpose.msra.mxu0 0.0
    %454 = vmatpush.xpose.msra.mxu0 0.0
    %455 = vmatpush.xpose.msra.mxu0 0.0
    %456 = vmatpush.xpose.msra.mxu0 0.0
    %457 = vmatpush.xpose.msra.mxu0 0.0
    %458 = vmatpush.xpose.msra.mxu0 0.0
    %459 = vmatpush.xpose.msra.mxu0 0.0
    %460 = vmatpush.xpose.msra.mxu0 0.0
    %461 = vmatpush.xpose.msra.mxu0 0.0
    %462 = vmatpush.xpose.msra.mxu0 0.0
    %463 = vmatpush.xpose.msra.mxu0 0.0
    %464 = vmatpush.xpose.msra.mxu0 0.0
    %465 = vmatpush.xpose.msra.mxu0 0.0
    %466 = vmatpush.xpose.msra.mxu0 %v449
    %467 = vmatmul.f32.gmra.mxu0 %v447
    %v468 = vpop.f32.mrf.mxu0
    %v469 = vadd.f32 0.0, %v468
    %470 = vdwg.mxu0
    %v471 = vsel %vm293, %v441, -inf
    %472 = vmax.xlane.f32.xlu0 %v471
    %v473 = vpop.xlane.xlu0 %472
    %v474 = vsel %vm293, %v469, -inf
    %475 = vmax.xlane.f32.xlu0 %v474
    %v476 = vpop.xlane.xlu0 %475
    %v477 = vsub.f32 %v441, %v473
    %v478 = vsub.f32 %v469, %v476
    %v479 = vmul.f32 %v477, 1.442695
    %v480 = vpow.pop %v479
    %v481 = vmul.f32 %v478, 1.442695
    %v482 = vpow.pop %v481
    %v483 = vsel %vm293, %v480, 0.0
    %484 = vadd.xlane.f32.xlu0 %v483
    %v485 = vpop.xlane.xlu0 %484
    %v486 = vsel %vm293, %v482, 0.0
    %487 = vadd.xlane.f32.xlu0 %v486
    %v488 = vpop.xlane.xlu0 %487
    %v489 = vrcp.pop %v485
    %v490 = vrcp.pop %v488
    %v491 = vmul.f32 %v480, %v489
    %v492 = vmul.f32 %v482, %v490
    %494 = vrot.lane.b32.xlu0 %v283, 120
    %v495 = vpop.permute.xlu0 %494
    %v498 = vsel %vm293, %v491, 0
    %500 = vmatpush.msra.mxu0 0.0
    %501 = vmatpush.msra.mxu0 0.0
    %502 = vmatpush.msra.mxu0 0.0
    %503 = vmatpush.msra.mxu0 0.0
    %504 = vmatpush.msra.mxu0 0.0
    %505 = vmatpush.msra.mxu0 0.0
    %506 = vmatpush.msra.mxu0 0.0
    %507 = vmatpush.msra.mxu0 0.0
    %508 = vmatpush.msra.mxu0 0.0
    %509 = vmatpush.msra.mxu0 0.0
    %510 = vmatpush.msra.mxu0 0.0
    %511 = vmatpush.msra.mxu0 0.0
    %512 = vmatpush.msra.mxu0 0.0
    %513 = vmatpush.msra.mxu0 0.0
    %514 = vmatpush.msra.mxu0 0.0
    %515 = vmatpush.msra.mxu0 %v495
    %516 = vmatmul.f32.gmra.mxu0 %v498
    %v517 = vpop.f32.mrf.mxu0
    %v518 = vadd.f32 0.0, %v517
    %519 = vdwg.mxu0
    %521 = vrot.lane.b32.xlu0 %v286, 120
    %v522 = vpop.permute.xlu0 %521
    %v525 = vsel %vm293, %v492, 0
    %527 = vmatpush.msra.mxu0 0.0
    %528 = vmatpush.msra.mxu0 0.0
    %529 = vmatpush.msra.mxu0 0.0
    %530 = vmatpush.msra.mxu0 0.0
    %531 = vmatpush.msra.mxu0 0.0
    %532 = vmatpush.msra.mxu0 0.0
    %533 = vmatpush.msra.mxu0 0.0
    %534 = vmatpush.msra.mxu0 0.0
    %535 = vmatpush.msra.mxu0 0.0
    %536 = vmatpush.msra.mxu0 0.0
    %537 = vmatpush.msra.mxu0 0.0
    %538 = vmatpush.msra.mxu0 0.0
    %539 = vmatpush.msra.mxu0 0.0
    %540 = vmatpush.msra.mxu0 0.0
    %541 = vmatpush.msra.mxu0 0.0
    %542 = vmatpush.msra.mxu0 %v522
    %543 = vmatmul.f32.gmra.mxu0 %v525
    %v544 = vpop.f32.mrf.mxu0
    %v545 = vadd.f32 0.0, %v544
    %546 = vdwg.mxu0
    %v548 = vsel %vm293, %v518, 0
    %v551 = vsel %vm293, %v545, 0
    %553 = vmatpush.msra.mxu0 0.0
    %554 = vmatpush.msra.mxu0 0.0
    %555 = vmatpush.msra.mxu0 0.0
    %556 = vmatpush.msra.mxu0 0.0
    %557 = vmatpush.msra.mxu0 0.0
    %558 = vmatpush.msra.mxu0 0.0
    %559 = vmatpush.msra.mxu0 0.0
    %560 = vmatpush.msra.mxu0 0.0
    %561 = vmatpush.msra.mxu0 0.0
    %562 = vmatpush.msra.mxu0 0.0
    %563 = vmatpush.msra.mxu0 0.0
    %564 = vmatpush.msra.mxu0 0.0
    %565 = vmatpush.msra.mxu0 0.0
    %566 = vmatpush.msra.mxu0 0.0
    %567 = vmatpush.msra.mxu0 0.0
    %568 = vmatpush.msra.mxu0 %v203
    %569 = vmatmul.f32.gmra.mxu0 %v548
    %v570 = vpop.f32.mrf.mxu0
    %v571 = vadd.f32 0.0, %v570
    %572 = vmatmul.f32.gmra.mxu0 %v551
    %v573 = vpop.f32.mrf.mxu0
    %v574 = vadd.f32 0.0, %v573
    %575 = vdwg.mxu0
    %v577 = vsel %vm293, %v390, 0
    %v580 = vsel %vm293, %v413, 0
    %582 = vmatpush.msra.mxu0 0.0
    %583 = vmatpush.msra.mxu0 0.0
    %584 = vmatpush.msra.mxu0 0.0
    %585 = vmatpush.msra.mxu0 0.0
    %586 = vmatpush.msra.mxu0 0.0
    %587 = vmatpush.msra.mxu0 0.0
    %588 = vmatpush.msra.mxu0 0.0
    %589 = vmatpush.msra.mxu0 0.0
    %590 = vmatpush.msra.mxu0 0.0
    %591 = vmatpush.msra.mxu0 0.0
    %592 = vmatpush.msra.mxu0 0.0
    %593 = vmatpush.msra.mxu0 0.0
    %594 = vmatpush.msra.mxu0 0.0
    %595 = vmatpush.msra.mxu0 0.0
    %596 = vmatpush.msra.mxu0 0.0
    %597 = vmatpush.msra.mxu0 %v202
    %598 = vmatmul.f32.gmra.mxu0 %v577
    %v599 = vpop.f32.mrf.mxu0
    %v600 = vadd.f32 %v571, %v599
    %601 = vmatmul.f32.gmra.mxu0 %v580
    %v602 = vpop.f32.mrf.mxu0
    %v603 = vadd.f32 %v574, %v602
    %604 = vdwg.mxu0
    %605 = vrot.lane.b32.xlu0 %v288, 112
    %v606 = vpop.permute.xlu0 %605
    %607 = vrot.lane.b32.xlu0 %v235, 80
    %v608 = vpop.permute.xlu0 %607
    %v609 = vsel %vm293, %v606, 0
    %v611 = vsel %vm293, %v608, 0
    %613 = vmatpush.xpose.msra.mxu0 0.0
    %614 = vmatpush.xpose.msra.mxu0 0.0
    %615 = vmatpush.xpose.msra.mxu0 0.0
    %616 = vmatpush.xpose.msra.mxu0 0.0
    %617 = vmatpush.xpose.msra.mxu0 0.0
    %618 = vmatpush.xpose.msra.mxu0 0.0
    %619 = vmatpush.xpose.msra.mxu0 0.0
    %620 = vmatpush.xpose.msra.mxu0 0.0
    %621 = vmatpush.xpose.msra.mxu0 0.0
    %622 = vmatpush.xpose.msra.mxu0 0.0
    %623 = vmatpush.xpose.msra.mxu0 0.0
    %624 = vmatpush.xpose.msra.mxu0 0.0
    %625 = vmatpush.xpose.msra.mxu0 0.0
    %626 = vmatpush.xpose.msra.mxu0 0.0
    %627 = vmatpush.xpose.msra.mxu0 0.0
    %628 = vmatpush.xpose.msra.mxu0 %v611
    %629 = vmatmul.f32.gmra.mxu0 %v609
    %v630 = vpop.f32.mrf.mxu0
    %v631 = vadd.f32 0.0, %v630
    %632 = vdwg.mxu0
    %633 = vrot.lane.b32.xlu0 %v289, 112
    %v634 = vpop.permute.xlu0 %633
    %635 = vrot.lane.b32.xlu0 %v238, 80
    %v636 = vpop.permute.xlu0 %635
    %v637 = vsel %vm293, %v634, 0
    %v639 = vsel %vm293, %v636, 0
    %641 = vmatpush.xpose.msra.mxu0 0.0
    %642 = vmatpush.xpose.msra.mxu0 0.0
    %643 = vmatpush.xpose.msra.mxu0 0.0
    %644 = vmatpush.xpose.msra.mxu0 0.0
    %645 = vmatpush.xpose.msra.mxu0 0.0
    %646 = vmatpush.xpose.msra.mxu0 0.0
    %647 = vmatpush.xpose.msra.mxu0 0.0
    %648 = vmatpush.xpose.msra.mxu0 0.0
    %649 = vmatpush.xpose.msra.mxu0 0.0
    %650 = vmatpush.xpose.msra.mxu0 0.0
    %651 = vmatpush.xpose.msra.mxu0 0.0
    %652 = vmatpush.xpose.msra.mxu0 0.0
    %653 = vmatpush.xpose.msra.mxu0 0.0
    %654 = vmatpush.xpose.msra.mxu0 0.0
    %655 = vmatpush.xpose.msra.mxu0 0.0
    %656 = vmatpush.xpose.msra.mxu0 %v639
    %657 = vmatmul.f32.gmra.mxu0 %v637
    %v658 = vpop.f32.mrf.mxu0
    %v659 = vadd.f32 0.0, %v658
    %660 = vdwg.mxu0
    %v661 = vsel %vm293, %v631, -inf
    %662 = vmax.xlane.f32.xlu0 %v661
    %v663 = vpop.xlane.xlu0 %662
    %v664 = vsel %vm293, %v659, -inf
    %665 = vmax.xlane.f32.xlu0 %v664
    %v666 = vpop.xlane.xlu0 %665
    %v667 = vsub.f32 %v631, %v663
    %v668 = vsub.f32 %v659, %v666
    %v669 = vmul.f32 %v667, 1.442695
    %v670 = vpow.pop %v669
    %v671 = vmul.f32 %v668, 1.442695
    %v672 = vpow.pop %v671
    %v673 = vsel %vm293, %v670, 0.0
    %674 = vadd.xlane.f32.xlu0 %v673
    %v675 = vpop.xlane.xlu0 %674
    %v676 = vsel %vm293, %v672, 0.0
    %677 = vadd.xlane.f32.xlu0 %v676
    %v678 = vpop.xlane.xlu0 %677
    %v679 = vrcp.pop %v675
    %v680 = vrcp.pop %v678
    %v681 = vmul.f32 %v670, %v679
    %v682 = vmul.f32 %v672, %v680
    %683 = vrot.lane.b32.xlu0 %v283, 112
    %v684 = vpop.permute.xlu0 %683
    %v687 = vsel %vm293, %v681, 0
    %689 = vmatpush.msra.mxu0 0.0
    %690 = vmatpush.msra.mxu0 0.0
    %691 = vmatpush.msra.mxu0 0.0
    %692 = vmatpush.msra.mxu0 0.0
    %693 = vmatpush.msra.mxu0 0.0
    %694 = vmatpush.msra.mxu0 0.0
    %695 = vmatpush.msra.mxu0 0.0
    %696 = vmatpush.msra.mxu0 0.0
    %697 = vmatpush.msra.mxu0 0.0
    %698 = vmatpush.msra.mxu0 0.0
    %699 = vmatpush.msra.mxu0 0.0
    %700 = vmatpush.msra.mxu0 0.0
    %701 = vmatpush.msra.mxu0 0.0
    %702 = vmatpush.msra.mxu0 0.0
    %703 = vmatpush.msra.mxu0 0.0
    %704 = vmatpush.msra.mxu0 %v684
    %705 = vmatmul.f32.gmra.mxu0 %v687
    %v706 = vpop.f32.mrf.mxu0
    %v707 = vadd.f32 0.0, %v706
    %708 = vdwg.mxu0
    %709 = vrot.lane.b32.xlu0 %v286, 112
    %v710 = vpop.permute.xlu0 %709
    %v713 = vsel %vm293, %v682, 0
    %715 = vmatpush.msra.mxu0 0.0
    %716 = vmatpush.msra.mxu0 0.0
    %717 = vmatpush.msra.mxu0 0.0
    %718 = vmatpush.msra.mxu0 0.0
    %719 = vmatpush.msra.mxu0 0.0
    %720 = vmatpush.msra.mxu0 0.0
    %721 = vmatpush.msra.mxu0 0.0
    %722 = vmatpush.msra.mxu0 0.0
    %723 = vmatpush.msra.mxu0 0.0
    %724 = vmatpush.msra.mxu0 0.0
    %725 = vmatpush.msra.mxu0 0.0
    %726 = vmatpush.msra.mxu0 0.0
    %727 = vmatpush.msra.mxu0 0.0
    %728 = vmatpush.msra.mxu0 0.0
    %729 = vmatpush.msra.mxu0 0.0
    %730 = vmatpush.msra.mxu0 %v710
    %731 = vmatmul.f32.gmra.mxu0 %v713
    %v732 = vpop.f32.mrf.mxu0
    %v733 = vadd.f32 0.0, %v732
    %734 = vdwg.mxu0
    %v736 = vsel %vm293, %v707, 0
    %v739 = vsel %vm293, %v733, 0
    %741 = vmatpush.msra.mxu0 0.0
    %742 = vmatpush.msra.mxu0 0.0
    %743 = vmatpush.msra.mxu0 0.0
    %744 = vmatpush.msra.mxu0 0.0
    %745 = vmatpush.msra.mxu0 0.0
    %746 = vmatpush.msra.mxu0 0.0
    %747 = vmatpush.msra.mxu0 0.0
    %748 = vmatpush.msra.mxu0 0.0
    %749 = vmatpush.msra.mxu0 0.0
    %750 = vmatpush.msra.mxu0 0.0
    %751 = vmatpush.msra.mxu0 0.0
    %752 = vmatpush.msra.mxu0 0.0
    %753 = vmatpush.msra.mxu0 0.0
    %754 = vmatpush.msra.mxu0 0.0
    %755 = vmatpush.msra.mxu0 0.0
    %756 = vmatpush.msra.mxu0 %v204
    %757 = vmatmul.f32.gmra.mxu0 %v736
    %v758 = vpop.f32.mrf.mxu0
    %v759 = vadd.f32 0.0, %v758
    %760 = vmatmul.f32.gmra.mxu0 %v739
    %v761 = vpop.f32.mrf.mxu0
    %v762 = vadd.f32 0.0, %v761
    %763 = vdwg.mxu0
    %v764 = vadd.f32 %v600, %v759
    %v765 = vadd.f32 %v603, %v762
    %766 = vrot.lane.b32.xlu0 %v288, 104
    %v767 = vpop.permute.xlu0 %766
    %768 = vrot.lane.b32.xlu0 %v235, 72
    %v769 = vpop.permute.xlu0 %768
    %v770 = vsel %vm293, %v767, 0
    %v772 = vsel %vm293, %v769, 0
    %774 = vmatpush.xpose.msra.mxu0 0.0
    %775 = vmatpush.xpose.msra.mxu0 0.0
    %776 = vmatpush.xpose.msra.mxu0 0.0
    %777 = vmatpush.xpose.msra.mxu0 0.0
    %778 = vmatpush.xpose.msra.mxu0 0.0
    %779 = vmatpush.xpose.msra.mxu0 0.0
    %780 = vmatpush.xpose.msra.mxu0 0.0
    %781 = vmatpush.xpose.msra.mxu0 0.0
    %782 = vmatpush.xpose.msra.mxu0 0.0
    %783 = vmatpush.xpose.msra.mxu0 0.0
    %784 = vmatpush.xpose.msra.mxu0 0.0
    %785 = vmatpush.xpose.msra.mxu0 0.0
    %786 = vmatpush.xpose.msra.mxu0 0.0
    %787 = vmatpush.xpose.msra.mxu0 0.0
    %788 = vmatpush.xpose.msra.mxu0 0.0
    %789 = vmatpush.xpose.msra.mxu0 %v772
    %790 = vmatmul.f32.gmra.mxu0 %v770
    %v791 = vpop.f32.mrf.mxu0
    %v792 = vadd.f32 0.0, %v791
    %793 = vdwg.mxu0
    %794 = vrot.lane.b32.xlu0 %v289, 104
    %v795 = vpop.permute.xlu0 %794
    %796 = vrot.lane.b32.xlu0 %v238, 72
    %v797 = vpop.permute.xlu0 %796
    %v798 = vsel %vm293, %v795, 0
    %v800 = vsel %vm293, %v797, 0
    %802 = vmatpush.xpose.msra.mxu0 0.0
    %803 = vmatpush.xpose.msra.mxu0 0.0
    %804 = vmatpush.xpose.msra.mxu0 0.0
    %805 = vmatpush.xpose.msra.mxu0 0.0
    %806 = vmatpush.xpose.msra.mxu0 0.0
    %807 = vmatpush.xpose.msra.mxu0 0.0
    %808 = vmatpush.xpose.msra.mxu0 0.0
    %809 = vmatpush.xpose.msra.mxu0 0.0
    %810 = vmatpush.xpose.msra.mxu0 0.0
    %811 = vmatpush.xpose.msra.mxu0 0.0
    %812 = vmatpush.xpose.msra.mxu0 0.0
    %813 = vmatpush.xpose.msra.mxu0 0.0
    %814 = vmatpush.xpose.msra.mxu0 0.0
    %815 = vmatpush.xpose.msra.mxu0 0.0
    %816 = vmatpush.xpose.msra.mxu0 0.0
    %817 = vmatpush.xpose.msra.mxu0 %v800
    %818 = vmatmul.f32.gmra.mxu0 %v798
    %v819 = vpop.f32.mrf.mxu0
    %v820 = vadd.f32 0.0, %v819
    %821 = vdwg.mxu0
    %v822 = vsel %vm293, %v792, -inf
    %823 = vmax.xlane.f32.xlu0 %v822
    %v824 = vpop.xlane.xlu0 %823
    %v825 = vsel %vm293, %v820, -inf
    %826 = vmax.xlane.f32.xlu0 %v825
    %v827 = vpop.xlane.xlu0 %826
    %v828 = vsub.f32 %v792, %v824
    %v829 = vsub.f32 %v820, %v827
    %v830 = vmul.f32 %v828, 1.442695
    %v831 = vpow.pop %v830
    %v832 = vmul.f32 %v829, 1.442695
    %v833 = vpow.pop %v832
    %v834 = vsel %vm293, %v831, 0.0
    %835 = vadd.xlane.f32.xlu0 %v834
    %v836 = vpop.xlane.xlu0 %835
    %v837 = vsel %vm293, %v833, 0.0
    %838 = vadd.xlane.f32.xlu0 %v837
    %v839 = vpop.xlane.xlu0 %838
    %v840 = vrcp.pop %v836
    %v841 = vrcp.pop %v839
    %v842 = vmul.f32 %v831, %v840
    %v843 = vmul.f32 %v833, %v841
    %844 = vrot.lane.b32.xlu0 %v283, 104
    %v845 = vpop.permute.xlu0 %844
    %v848 = vsel %vm293, %v842, 0
    %850 = vmatpush.msra.mxu0 0.0
    %851 = vmatpush.msra.mxu0 0.0
    %852 = vmatpush.msra.mxu0 0.0
    %853 = vmatpush.msra.mxu0 0.0
    %854 = vmatpush.msra.mxu0 0.0
    %855 = vmatpush.msra.mxu0 0.0
    %856 = vmatpush.msra.mxu0 0.0
    %857 = vmatpush.msra.mxu0 0.0
    %858 = vmatpush.msra.mxu0 0.0
    %859 = vmatpush.msra.mxu0 0.0
    %860 = vmatpush.msra.mxu0 0.0
    %861 = vmatpush.msra.mxu0 0.0
    %862 = vmatpush.msra.mxu0 0.0
    %863 = vmatpush.msra.mxu0 0.0
    %864 = vmatpush.msra.mxu0 0.0
    %865 = vmatpush.msra.mxu0 %v845
    %866 = vmatmul.f32.gmra.mxu0 %v848
    %v867 = vpop.f32.mrf.mxu0
    %v868 = vadd.f32 0.0, %v867
    %869 = vdwg.mxu0
    %870 = vrot.lane.b32.xlu0 %v286, 104
    %v871 = vpop.permute.xlu0 %870
    %v874 = vsel %vm293, %v843, 0
    %876 = vmatpush.msra.mxu0 0.0
    %877 = vmatpush.msra.mxu0 0.0
    %878 = vmatpush.msra.mxu0 0.0
    %879 = vmatpush.msra.mxu0 0.0
    %880 = vmatpush.msra.mxu0 0.0
    %881 = vmatpush.msra.mxu0 0.0
    %882 = vmatpush.msra.mxu0 0.0
    %883 = vmatpush.msra.mxu0 0.0
    %884 = vmatpush.msra.mxu0 0.0
    %885 = vmatpush.msra.mxu0 0.0
    %886 = vmatpush.msra.mxu0 0.0
    %887 = vmatpush.msra.mxu0 0.0
    %888 = vmatpush.msra.mxu0 0.0
    %889 = vmatpush.msra.mxu0 0.0
    %890 = vmatpush.msra.mxu0 0.0
    %891 = vmatpush.msra.mxu0 %v871
    %892 = vmatmul.f32.gmra.mxu0 %v874
    %v893 = vpop.f32.mrf.mxu0
    %v894 = vadd.f32 0.0, %v893
    %895 = vdwg.mxu0
    %v897 = vsel %vm293, %v868, 0
    %v900 = vsel %vm293, %v894, 0
    %902 = vmatpush.msra.mxu0 0.0
    %903 = vmatpush.msra.mxu0 0.0
    %904 = vmatpush.msra.mxu0 0.0
    %905 = vmatpush.msra.mxu0 0.0
    %906 = vmatpush.msra.mxu0 0.0
    %907 = vmatpush.msra.mxu0 0.0
    %908 = vmatpush.msra.mxu0 0.0
    %909 = vmatpush.msra.mxu0 0.0
    %910 = vmatpush.msra.mxu0 0.0
    %911 = vmatpush.msra.mxu0 0.0
    %912 = vmatpush.msra.mxu0 0.0
    %913 = vmatpush.msra.mxu0 0.0
    %914 = vmatpush.msra.mxu0 0.0
    %915 = vmatpush.msra.mxu0 0.0
    %916 = vmatpush.msra.mxu0 0.0
    %917 = vmatpush.msra.mxu0 %v205
    %918 = vmatmul.f32.gmra.mxu0 %v897
    %v919 = vpop.f32.mrf.mxu0
    %v920 = vadd.f32 0.0, %v919
    %921 = vmatmul.f32.gmra.mxu0 %v900
    %v922 = vpop.f32.mrf.mxu0
    %v923 = vadd.f32 0.0, %v922
    %924 = vdwg.mxu0
    %v925 = vadd.f32 %v764, %v920
    %v926 = vadd.f32 %v765, %v923
    %v928 = vperm.slane %v206, 0
    %v930 = vadd.f32 %v925, %v928
    %v931 = vadd.f32 %v926, %v928
    %v932 = vadd.f32 %v183, %v930
    %v933 = vadd.f32 %v184, %v931
    %v934 = vld [vmem:[#allocation10] sm:$0x1]
    %v935 = vld [vmem:[#allocation11] sm:$0x1]
    %v936 = vsel %vm210, %v932, 0.0
    %937 = vadd.xlane.f32.xlu0 %v936
    %v938 = vpop.xlane.xlu0 %937
    %v939 = vsel %vm210, %v933, 0.0
    %940 = vadd.xlane.f32.xlu0 %v939
    %v941 = vpop.xlane.xlu0 %940
    %v942 = vrcp.pop 32.0
    %v943 = vmul.f32 32.0, %v942
    %v944 = vsub.f32 1.0, %v943
    %v945 = vmul.f32 %v942, %v944
    %v946 = vadd.f32 %v942, %v945
    %vm947 = vweird.f32 %v942
    %v948 = vsel %vm947, %v942, %v946
    %v949 = vmul.f32 %v938, %v948
    %v950 = vmul.f32 %v941, %v948
    %v951 = vsub.f32 %v932, %v949
    %v952 = vsub.f32 %v933, %v950
    %v953 = vmul.f32 %v951, %v951
    %v954 = vmul.f32 %v952, %v952
    %v955 = vsel %vm210, %v953, 0.0
    %956 = vadd.xlane.f32.xlu0 %v955
    %v957 = vpop.xlane.xlu0 %956
    %v958 = vsel %vm210, %v954, 0.0
    %959 = vadd.xlane.f32.xlu0 %v958
    %v960 = vpop.xlane.xlu0 %959
    %v961 = vmul.f32 %v957, %v948
    %v962 = vmul.f32 %v960, %v948
    %v963 = vadd.f32 %v961, 1e-05
    %v964 = vadd.f32 %v962, 1e-05
    %v965 = vrsqrt.pop %v963
    %v966 = vmul.f32 %v965, %v963
    %v967 = vmul.f32 %v966, %v965
    %v968 = vmul.f32 0.5, %v967
    %v969 = vsub.f32 1.5, %v968
    %v970 = vmul.f32 %v965, %v969
    %vm971 = vweird.f32 %v963
    %vm972 = vweird.f32 %v965
    %vm973 = vmor %vm971, %vm972
    %v974 = vsel %vm973, %v965, %v970
    %v975 = vrsqrt.pop %v964
    %v976 = vmul.f32 %v975, %v964
    %v977 = vmul.f32 %v976, %v975
    %v978 = vmul.f32 0.5, %v977
    %v979 = vsub.f32 1.5, %v978
    %v980 = vmul.f32 %v975, %v979
    %vm981 = vweird.f32 %v964
    %vm982 = vweird.f32 %v975
    %vm983 = vmor %vm981, %vm982
    %v984 = vsel %vm983, %v975, %v980
    %v985 = vmul.f32 %v951, %v974
    %v986 = vmul.f32 %v952, %v984
    %v988 = vperm.slane %v934, 0
    %v990 = vmul.f32 %v985, %v988
    %v991 = vmul.f32 %v986, %v988
    %v993 = vperm.slane %v935, 0
    %v995 = vadd.f32 %v990, %v993
    %v996 = vadd.f32 %v991, %v993
    %v997 = vadd.f32 %v995, %v185
    %v998 = vadd.f32 %v996, %v186
    %v999 = vld [vmem:[%s8] sm:$0xff]
    %v1000 = vld [vmem:[%s8 + $0x8] sm:$0xff]
    %v1001 = vld [vmem:[%s8 + $0x10] sm:$0xff]
    %v1002 = vld [vmem:[%s8 + $0x18] sm:$0xff]
    %v1003 = vld [vmem:[#allocation2] sm:$0x1]
    %v1004 = vld [vmem:[%s10] sm:$0xff]
    %v1005 = vld [vmem:[%s10 + $0x8] sm:$0xff]
    %v1006 = vld [vmem:[%s10 + $0x10] sm:$0xff]
    %v1007 = vld [vmem:[%s10 + $0x18] sm:$0xff]
    %v1008 = vld [vmem:[#allocation5] sm:$0x1]
    %v1010 = vperm.slane %v1003, 0
    %v1013 = vsel %vm210, %v997, 0
    %v1016 = vsel %vm210, %v998, 0
    %1018 = vmatpush.msra.mxu0 0.0
    %1019 = vmatpush.msra.mxu0 0.0
    %1020 = vmatpush.msra.mxu0 0.0
    %1021 = vmatpush.msra.mxu0 0.0
    %1022 = vmatpush.msra.mxu0 0.0
    %1023 = vmatpush.msra.mxu0 0.0
    %1024 = vmatpush.msra.mxu0 0.0
    %1025 = vmatpush.msra.mxu0 0.0
    %1026 = vmatpush.msra.mxu0 0.0
    %1027 = vmatpush.msra.mxu0 0.0
    %1028 = vmatpush.msra.mxu0 0.0
    %1029 = vmatpush.msra.mxu0 0.0
    %1030 = vmatpush.msra.mxu0 %v1002
    %1031 = vmatpush.msra.mxu0 %v1001
    %1032 = vmatpush.msra.mxu0 %v1000
    %1033 = vmatpush.msra.mxu0 %v999
    %1034 = vmatmul.f32.gmra.mxu0 %v1013
    %v1035 = vpop.f32.mrf.mxu0
    %v1036 = vadd.f32 %v1010, %v1035
    %1037 = vmatmul.f32.gmra.mxu0 %v1016
    %v1038 = vpop.f32.mrf.mxu0
    %v1039 = vadd.f32 %v1010, %v1038
    %1040 = vdwg.mxu0
    %1045 = vrot.lane.b32.xlu0 %v999, 96
    %v1046 = vpop.permute.xlu0 %1045
    %1047 = vrot.lane.b32.xlu0 %v1000, 96
    %v1048 = vpop.permute.xlu0 %1047
    %1049 = vrot.lane.b32.xlu0 %v1001, 96
    %v1050 = vpop.permute.xlu0 %1049
    %1051 = vrot.lane.b32.xlu0 %v1002, 96
    %v1052 = vpop.permute.xlu0 %1051
    %1057 = vrot.lane.b32.xlu0 %v1010, 96
    %v1058 = vpop.permute.xlu0 %1057
    %v1061 = vsel %vm210, %v191, 0
    %v1064 = vsel %vm210, %v192, 0
    %v1067 = vsel %vm210, %v193, 0
    %v1070 = vsel %vm210, %v194, 0
    %1072 = vmatpush.msra.mxu0 0.0
    %1073 = vmatpush.msra.mxu0 0.0
    %1074 = vmatpush.msra.mxu0 0.0
    %1075 = vmatpush.msra.mxu0 0.0
    %1076 = vmatpush.msra.mxu0 0.0
    %1077 = vmatpush.msra.mxu0 0.0
    %1078 = vmatpush.msra.mxu0 0.0
    %1079 = vmatpush.msra.mxu0 0.0
    %1080 = vmatpush.msra.mxu0 0.0
    %1081 = vmatpush.msra.mxu0 0.0
    %1082 = vmatpush.msra.mxu0 0.0
    %1083 = vmatpush.msra.mxu0 0.0
    %1084 = vmatpush.msra.mxu0 %v1052
    %1085 = vmatpush.msra.mxu0 %v1050
    %1086 = vmatpush.msra.mxu0 %v1048
    %1087 = vmatpush.msra.mxu0 %v1046
    %1088 = vmatmul.f32.gmra.mxu0 %v1061
    %v1089 = vpop.f32.mrf.mxu0
    %v1090 = vadd.f32 %v1058, %v1089
    %1091 = vmatmul.f32.gmra.mxu0 %v1064
    %v1092 = vpop.f32.mrf.mxu0
    %v1093 = vadd.f32 %v1058, %v1092
    %1094 = vmatmul.f32.gmra.mxu0 %v1067
    %v1095 = vpop.f32.mrf.mxu0
    %v1096 = vadd.f32 %v1058, %v1095
    %1097 = vmatmul.f32.gmra.mxu0 %v1070
    %v1098 = vpop.f32.mrf.mxu0
    %v1099 = vadd.f32 %v1058, %v1098
    %1100 = vdwg.mxu0
    %1101 = vrot.lane.b32.xlu0 %v999, 64
    %v1102 = vpop.permute.xlu0 %1101
    %1103 = vrot.lane.b32.xlu0 %v1000, 64
    %v1104 = vpop.permute.xlu0 %1103
    %1105 = vrot.lane.b32.xlu0 %v1001, 64
    %v1106 = vpop.permute.xlu0 %1105
    %1107 = vrot.lane.b32.xlu0 %v1002, 64
    %v1108 = vpop.permute.xlu0 %1107
    %1113 = vrot.lane.b32.xlu0 %v1010, 64
    %v1114 = vpop.permute.xlu0 %1113
    %v1117 = vsel %vm210, %v187, 0
    %v1120 = vsel %vm210, %v188, 0
    %v1123 = vsel %vm210, %v189, 0
    %v1126 = vsel %vm210, %v190, 0
    %1128 = vmatpush.msra.mxu0 0.0
    %1129 = vmatpush.msra.mxu0 0.0
    %1130 = vmatpush.msra.mxu0 0.0
    %1131 = vmatpush.msra.mxu0 0.0
    %1132 = vmatpush.msra.mxu0 0.0
    %1133 = vmatpush.msra.mxu0 0.0
    %1134 = vmatpush.msra.mxu0 0.0
    %1135 = vmatpush.msra.mxu0 0.0
    %1136 = vmatpush.msra.mxu0 0.0
    %1137 = vmatpush.msra.mxu0 0.0
    %1138 = vmatpush.msra.mxu0 0.0
    %1139 = vmatpush.msra.mxu0 0.0
    %1140 = vmatpush.msra.mxu0 %v1108
    %1141 = vmatpush.msra.mxu0 %v1106
    %1142 = vmatpush.msra.mxu0 %v1104
    %1143 = vmatpush.msra.mxu0 %v1102
    %1144 = vmatmul.f32.gmra.mxu0 %v1117
    %v1145 = vpop.f32.mrf.mxu0
    %v1146 = vadd.f32 %v1114, %v1145
    %1147 = vmatmul.f32.gmra.mxu0 %v1120
    %v1148 = vpop.f32.mrf.mxu0
    %v1149 = vadd.f32 %v1114, %v1148
    %1150 = vmatmul.f32.gmra.mxu0 %v1123
    %v1151 = vpop.f32.mrf.mxu0
    %v1152 = vadd.f32 %v1114, %v1151
    %1153 = vmatmul.f32.gmra.mxu0 %v1126
    %v1154 = vpop.f32.mrf.mxu0
    %v1155 = vadd.f32 %v1114, %v1154
    %1156 = vdwg.mxu0
    %v1157 = vmul.f32 %v1036, 0.35355338
    %v1158 = vmul.f32 %v1039, 0.35355338
    %v1160 = vsel %vm293, %v1157, 0
    %v1163 = vsel %vm293, %v1090, 0
    %v1166 = vsel %vm293, %v1093, 0
    %1168 = vmatpush.xpose.msra.mxu0 0.0
    %1169 = vmatpush.xpose.msra.mxu0 0.0
    %1170 = vmatpush.xpose.msra.mxu0 0.0
    %1171 = vmatpush.xpose.msra.mxu0 0.0
    %1172 = vmatpush.xpose.msra.mxu0 0.0
    %1173 = vmatpush.xpose.msra.mxu0 0.0
    %1174 = vmatpush.xpose.msra.mxu0 0.0
    %1175 = vmatpush.xpose.msra.mxu0 0.0
    %1176 = vmatpush.xpose.msra.mxu0 0.0
    %1177 = vmatpush.xpose.msra.mxu0 0.0
    %1178 = vmatpush.xpose.msra.mxu0 0.0
    %1179 = vmatpush.xpose.msra.mxu0 0.0
    %1180 = vmatpush.xpose.msra.mxu0 0.0
    %1181 = vmatpush.xpose.msra.mxu0 0.0
    %1182 = vmatpush.xpose.msra.mxu0 %v1166
    %1183 = vmatpush.xpose.msra.mxu0 %v1163
    %1184 = vmatmul.f32.gmra.mxu0 %v1160
    %v1185 = vpop.f32.mrf.mxu0
    %v1186 = vadd.f32 0.0, %v1185
    %1187 = vdwg.mxu0
    %v1189 = vsel %vm293, %v1158, 0
    %v1192 = vsel %vm293, %v1096, 0
    %v1195 = vsel %vm293, %v1099, 0
    %1197 = vmatpush.xpose.msra.mxu0 0.0
    %1198 = vmatpush.xpose.msra.mxu0 0.0
    %1199 = vmatpush.xpose.msra.mxu0 0.0
    %1200 = vmatpush.xpose.msra.mxu0 0.0
    %1201 = vmatpush.xpose.msra.mxu0 0.0
    %1202 = vmatpush.xpose.msra.mxu0 0.0
    %1203 = vmatpush.xpose.msra.mxu0 0.0
    %1204 = vmatpush.xpose.msra.mxu0 0.0
    %1205 = vmatpush.xpose.msra.mxu0 0.0
    %1206 = vmatpush.xpose.msra.mxu0 0.0
    %1207 = vmatpush.xpose.msra.mxu0 0.0
    %1208 = vmatpush.xpose.msra.mxu0 0.0
    %1209 = vmatpush.xpose.msra.mxu0 0.0
    %1210 = vmatpush.xpose.msra.mxu0 0.0
    %1211 = vmatpush.xpose.msra.mxu0 %v1195
    %1212 = vmatpush.xpose.msra.mxu0 %v1192
    %1213 = vmatmul.f32.gmra.mxu0 %v1189
    %v1214 = vpop.f32.mrf.mxu0
    %v1215 = vadd.f32 0.0, %v1214
    %1216 = vdwg.mxu0
    %vm1217 = vcmask 130048
    %v1218 = vsel %vm1217, %v1186, -inf
    %1219 = vmax.xlane.f32.xlu0 %v1218
    %v1220 = vpop.xlane.xlu0 %1219
    %v1221 = vsel %vm1217, %v1215, -inf
    %1222 = vmax.xlane.f32.xlu0 %v1221
    %v1223 = vpop.xlane.xlu0 %1222
    %v1224 = vsub.f32 %v1186, %v1220
    %v1225 = vsub.f32 %v1215, %v1223
    %v1226 = vmul.f32 %v1224, 1.442695
    %v1227 = vpow.pop %v1226
    %v1228 = vmul.f32 %v1225, 1.442695
    %v1229 = vpow.pop %v1228
    %v1230 = vsel %vm1217, %v1227, 0.0
    %1231 = vadd.xlane.f32.xlu0 %v1230
    %v1232 = vpop.xlane.xlu0 %1231
    %v1233 = vsel %vm1217, %v1229, 0.0
    %1234 = vadd.xlane.f32.xlu0 %v1233
    %v1235 = vpop.xlane.xlu0 %1234
    %v1236 = vrcp.pop %v1232
    %v1237 = vrcp.pop %v1235
    %v1238 = vmul.f32 %v1227, %v1236
    %v1239 = vmul.f32 %v1229, %v1237
    %v1241 = vsel %vm1217, %v1238, 0
    %1243 = vmatpush.msra.mxu0 0.0
    %1244 = vmatpush.msra.mxu0 0.0
    %1245 = vmatpush.msra.mxu0 0.0
    %1246 = vmatpush.msra.mxu0 0.0
    %1247 = vmatpush.msra.mxu0 0.0
    %1248 = vmatpush.msra.mxu0 0.0
    %1249 = vmatpush.msra.mxu0 0.0
    %1250 = vmatpush.msra.mxu0 0.0
    %1251 = vmatpush.msra.mxu0 0.0
    %1252 = vmatpush.msra.mxu0 0.0
    %1253 = vmatpush.msra.mxu0 0.0
    %1254 = vmatpush.msra.mxu0 0.0
    %1255 = vmatpush.msra.mxu0 0.0
    %1256 = vmatpush.msra.mxu0 0.0
    %1257 = vmatpush.msra.mxu0 %v1149
    %1258 = vmatpush.msra.mxu0 %v1146
    %1259 = vmatmul.f32.gmra.mxu0 %v1241
    %v1260 = vpop.f32.mrf.mxu0
    %v1261 = vadd.f32 0.0, %v1260
    %1262 = vdwg.mxu0
    %v1264 = vsel %vm1217, %v1239, 0
    %1266 = vmatpush.msra.mxu0 0.0
    %1267 = vmatpush.msra.mxu0 0.0
    %1268 = vmatpush.msra.mxu0 0.0
    %1269 = vmatpush.msra.mxu0 0.0
    %1270 = vmatpush.msra.mxu0 0.0
    %1271 = vmatpush.msra.mxu0 0.0
    %1272 = vmatpush.msra.mxu0 0.0
    %1273 = vmatpush.msra.mxu0 0.0
    %1274 = vmatpush.msra.mxu0 0.0
    %1275 = vmatpush.msra.mxu0 0.0
    %1276 = vmatpush.msra.mxu0 0.0
    %1277 = vmatpush.msra.mxu0 0.0
    %1278 = vmatpush.msra.mxu0 0.0
    %1279 = vmatpush.msra.mxu0 0.0
    %1280 = vmatpush.msra.mxu0 %v1155
    %1281 = vmatpush.msra.mxu0 %v1152
    %1282 = vmatmul.f32.gmra.mxu0 %v1264
    %v1283 = vpop.f32.mrf.mxu0
    %v1284 = vadd.f32 0.0, %v1283
    %1285 = vdwg.mxu0
    %v1286 = vadd.f32 %v1238, 0.0
    %v1287 = vadd.f32 %v1239, 0.0
    %1288 = vrot.lane.b32.xlu0 %v1157, 120
    %v1289 = vpop.permute.xlu0 %1288
    %1290 = vrot.lane.b32.xlu0 %v1090, 120
    %v1291 = vpop.permute.xlu0 %1290
    %1292 = vrot.lane.b32.xlu0 %v1093, 120
    %v1293 = vpop.permute.xlu0 %1292
    %v1294 = vsel %vm293, %v1289, 0
    %v1296 = vsel %vm293, %v1291, 0
    %v1298 = vsel %vm293, %v1293, 0
    %1300 = vmatpush.xpose.msra.mxu0 0.0
    %1301 = vmatpush.xpose.msra.mxu0 0.0
    %1302 = vmatpush.xpose.msra.mxu0 0.0
    %1303 = vmatpush.xpose.msra.mxu0 0.0
    %1304 = vmatpush.xpose.msra.mxu0 0.0
    %1305 = vmatpush.xpose.msra.mxu0 0.0
    %1306 = vmatpush.xpose.msra.mxu0 0.0
    %1307 = vmatpush.xpose.msra.mxu0 0.0
    %1308 = vmatpush.xpose.msra.mxu0 0.0
    %1309 = vmatpush.xpose.msra.mxu0 0.0
    %1310 = vmatpush.xpose.msra.mxu0 0.0
    %1311 = vmatpush.xpose.msra.mxu0 0.0
    %1312 = vmatpush.xpose.msra.mxu0 0.0
    %1313 = vmatpush.xpose.msra.mxu0 0.0
    %1314 = vmatpush.xpose.msra.mxu0 %v1298
    %1315 = vmatpush.xpose.msra.mxu0 %v1296
    %1316 = vmatmul.f32.gmra.mxu0 %v1294
    %v1317 = vpop.f32.mrf.mxu0
    %v1318 = vadd.f32 0.0, %v1317
    %1319 = vdwg.mxu0
    %1320 = vrot.lane.b32.xlu0 %v1158, 120
    %v1321 = vpop.permute.xlu0 %1320
    %1322 = vrot.lane.b32.xlu0 %v1096, 120
    %v1323 = vpop.permute.xlu0 %1322
    %1324 = vrot.lane.b32.xlu0 %v1099, 120
    %v1325 = vpop.permute.xlu0 %1324
    %v1326 = vsel %vm293, %v1321, 0
    %v1328 = vsel %vm293, %v1323, 0
    %v1330 = vsel %vm293, %v1325, 0
    %1332 = vmatpush.xpose.msra.mxu0 0.0
    %1333 = vmatpush.xpose.msra.mxu0 0.0
    %1334 = vmatpush.xpose.msra.mxu0 0.0
    %1335 = vmatpush.xpose.msra.mxu0 0.0
    %1336 = vmatpush.xpose.msra.mxu0 0.0
    %1337 = vmatpush.xpose.msra.mxu0 0.0
    %1338 = vmatpush.xpose.msra.mxu0 0.0
    %1339 = vmatpush.xpose.msra.mxu0 0.0
    %1340 = vmatpush.xpose.msra.mxu0 0.0
    %1341 = vmatpush.xpose.msra.mxu0 0.0
    %1342 = vmatpush.xpose.msra.mxu0 0.0
    %1343 = vmatpush.xpose.msra.mxu0 0.0
    %1344 = vmatpush.xpose.msra.mxu0 0.0
    %1345 = vmatpush.xpose.msra.mxu0 0.0
    %1346 = vmatpush.xpose.msra.mxu0 %v1330
    %1347 = vmatpush.xpose.msra.mxu0 %v1328
    %1348 = vmatmul.f32.gmra.mxu0 %v1326
    %v1349 = vpop.f32.mrf.mxu0
    %v1350 = vadd.f32 0.0, %v1349
    %1351 = vdwg.mxu0
    %v1352 = vsel %vm1217, %v1318, -inf
    %1353 = vmax.xlane.f32.xlu0 %v1352
    %v1354 = vpop.xlane.xlu0 %1353
    %v1355 = vsel %vm1217, %v1350, -inf
    %1356 = vmax.xlane.f32.xlu0 %v1355
    %v1357 = vpop.xlane.xlu0 %1356
    %v1358 = vsub.f32 %v1318, %v1354
    %v1359 = vsub.f32 %v1350, %v1357
    %v1360 = vmul.f32 %v1358, 1.442695
    %v1361 = vpow.pop %v1360
    %v1362 = vmul.f32 %v1359, 1.442695
    %v1363 = vpow.pop %v1362
    %v1364 = vsel %vm1217, %v1361, 0.0
    %1365 = vadd.xlane.f32.xlu0 %v1364
    %v1366 = vpop.xlane.xlu0 %1365
    %v1367 = vsel %vm1217, %v1363, 0.0
    %1368 = vadd.xlane.f32.xlu0 %v1367
    %v1369 = vpop.xlane.xlu0 %1368
    %v1370 = vrcp.pop %v1366
    %v1371 = vrcp.pop %v1369
    %v1372 = vmul.f32 %v1361, %v1370
    %v1373 = vmul.f32 %v1363, %v1371
    %1376 = vrot.lane.b32.xlu0 %v1146, 120
    %v1377 = vpop.permute.xlu0 %1376
    %1378 = vrot.lane.b32.xlu0 %v1149, 120
    %v1379 = vpop.permute.xlu0 %1378
    %v1383 = vsel %vm1217, %v1372, 0
    %1385 = vmatpush.msra.mxu0 0.0
    %1386 = vmatpush.msra.mxu0 0.0
    %1387 = vmatpush.msra.mxu0 0.0
    %1388 = vmatpush.msra.mxu0 0.0
    %1389 = vmatpush.msra.mxu0 0.0
    %1390 = vmatpush.msra.mxu0 0.0
    %1391 = vmatpush.msra.mxu0 0.0
    %1392 = vmatpush.msra.mxu0 0.0
    %1393 = vmatpush.msra.mxu0 0.0
    %1394 = vmatpush.msra.mxu0 0.0
    %1395 = vmatpush.msra.mxu0 0.0
    %1396 = vmatpush.msra.mxu0 0.0
    %1397 = vmatpush.msra.mxu0 0.0
    %1398 = vmatpush.msra.mxu0 0.0
    %1399 = vmatpush.msra.mxu0 %v1379
    %1400 = vmatpush.msra.mxu0 %v1377
    %1401 = vmatmul.f32.gmra.mxu0 %v1383
    %v1402 = vpop.f32.mrf.mxu0
    %v1403 = vadd.f32 0.0, %v1402
    %1404 = vdwg.mxu0
    %1407 = vrot.lane.b32.xlu0 %v1152, 120
    %v1408 = vpop.permute.xlu0 %1407
    %1409 = vrot.lane.b32.xlu0 %v1155, 120
    %v1410 = vpop.permute.xlu0 %1409
    %v1414 = vsel %vm1217, %v1373, 0
    %1416 = vmatpush.msra.mxu0 0.0
    %1417 = vmatpush.msra.mxu0 0.0
    %1418 = vmatpush.msra.mxu0 0.0
    %1419 = vmatpush.msra.mxu0 0.0
    %1420 = vmatpush.msra.mxu0 0.0
    %1421 = vmatpush.msra.mxu0 0.0
    %1422 = vmatpush.msra.mxu0 0.0
    %1423 = vmatpush.msra.mxu0 0.0
    %1424 = vmatpush.msra.mxu0 0.0
    %1425 = vmatpush.msra.mxu0 0.0
    %1426 = vmatpush.msra.mxu0 0.0
    %1427 = vmatpush.msra.mxu0 0.0
    %1428 = vmatpush.msra.mxu0 0.0
    %1429 = vmatpush.msra.mxu0 0.0
    %1430 = vmatpush.msra.mxu0 %v1410
    %1431 = vmatpush.msra.mxu0 %v1408
    %1432 = vmatmul.f32.gmra.mxu0 %v1414
    %v1433 = vpop.f32.mrf.mxu0
    %v1434 = vadd.f32 0.0, %v1433
    %1435 = vdwg.mxu0
    %v1437 = vsel %vm293, %v1403, 0
    %v1440 = vsel %vm293, %v1434, 0
    %1442 = vmatpush.msra.mxu0 0.0
    %1443 = vmatpush.msra.mxu0 0.0
    %1444 = vmatpush.msra.mxu0 0.0
    %1445 = vmatpush.msra.mxu0 0.0
    %1446 = vmatpush.msra.mxu0 0.0
    %1447 = vmatpush.msra.mxu0 0.0
    %1448 = vmatpush.msra.mxu0 0.0
    %1449 = vmatpush.msra.mxu0 0.0
    %1450 = vmatpush.msra.mxu0 0.0
    %1451 = vmatpush.msra.mxu0 0.0
    %1452 = vmatpush.msra.mxu0 0.0
    %1453 = vmatpush.msra.mxu0 0.0
    %1454 = vmatpush.msra.mxu0 0.0
    %1455 = vmatpush.msra.mxu0 0.0
    %1456 = vmatpush.msra.mxu0 0.0
    %1457 = vmatpush.msra.mxu0 %v1005
    %1458 = vmatmul.f32.gmra.mxu0 %v1437
    %v1459 = vpop.f32.mrf.mxu0
    %v1460 = vadd.f32 0.0, %v1459
    %1461 = vmatmul.f32.gmra.mxu0 %v1440
    %v1462 = vpop.f32.mrf.mxu0
    %v1463 = vadd.f32 0.0, %v1462
    %1464 = vdwg.mxu0
    %v1466 = vsel %vm293, %v1261, 0
    %v1469 = vsel %vm293, %v1284, 0
    %1471 = vmatpush.msra.mxu0 0.0
    %1472 = vmatpush.msra.mxu0 0.0
    %1473 = vmatpush.msra.mxu0 0.0
    %1474 = vmatpush.msra.mxu0 0.0
    %1475 = vmatpush.msra.mxu0 0.0
    %1476 = vmatpush.msra.mxu0 0.0
    %1477 = vmatpush.msra.mxu0 0.0
    %1478 = vmatpush.msra.mxu0 0.0
    %1479 = vmatpush.msra.mxu0 0.0
    %1480 = vmatpush.msra.mxu0 0.0
    %1481 = vmatpush.msra.mxu0 0.0
    %1482 = vmatpush.msra.mxu0 0.0
    %1483 = vmatpush.msra.mxu0 0.0
    %1484 = vmatpush.msra.mxu0 0.0
    %1485 = vmatpush.msra.mxu0 0.0
    %1486 = vmatpush.msra.mxu0 %v1004
    %1487 = vmatmul.f32.gmra.mxu0 %v1466
    %v1488 = vpop.f32.mrf.mxu0
    %v1489 = vadd.f32 %v1460, %v1488
    %1490 = vmatmul.f32.gmra.mxu0 %v1469
    %v1491 = vpop.f32.mrf.mxu0
    %v1492 = vadd.f32 %v1463, %v1491
    %1493 = vdwg.mxu0
    %v1494 = vadd.f32 %v1286, %v1372
    %v1495 = vadd.f32 %v1287, %v1373
    %1496 = vrot.lane.b32.xlu0 %v1157, 112
    %v1497 = vpop.permute.xlu0 %1496
    %1498 = vrot.lane.b32.xlu0 %v1090, 112
    %v1499 = vpop.permute.xlu0 %1498
    %1500 = vrot.lane.b32.xlu0 %v1093, 112
    %v1501 = vpop.permute.xlu0 %1500
    %v1502 = vsel %vm293, %v1497, 0
    %v1504 = vsel %vm293, %v1499, 0
    %v1506 = vsel %vm293, %v1501, 0
    %1508 = vmatpush.xpose.msra.mxu0 0.0
    %1509 = vmatpush.xpose.msra.mxu0 0.0
    %1510 = vmatpush.xpose.msra.mxu0 0.0
    %1511 = vmatpush.xpose.msra.mxu0 0.0
    %1512 = vmatpush.xpose.msra.mxu0 0.0
    %1513 = vmatpush.xpose.msra.mxu0 0.0
    %1514 = vmatpush.xpose.msra.mxu0 0.0
    %1515 = vmatpush.xpose.msra.mxu0 0.0
    %1516 = vmatpush.xpose.msra.mxu0 0.0
    %1517 = vmatpush.xpose.msra.mxu0 0.0
    %1518 = vmatpush.xpose.msra.mxu0 0.0
    %1519 = vmatpush.xpose.msra.mxu0 0.0
    %1520 = vmatpush.xpose.msra.mxu0 0.0
    %1521 = vmatpush.xpose.msra.mxu0 0.0
    %1522 = vmatpush.xpose.msra.mxu0 %v1506
    %1523 = vmatpush.xpose.msra.mxu0 %v1504
    %1524 = vmatmul.f32.gmra.mxu0 %v1502
    %v1525 = vpop.f32.mrf.mxu0
    %v1526 = vadd.f32 0.0, %v1525
    %1527 = vdwg.mxu0
    %1528 = vrot.lane.b32.xlu0 %v1158, 112
    %v1529 = vpop.permute.xlu0 %1528
    %1530 = vrot.lane.b32.xlu0 %v1096, 112
    %v1531 = vpop.permute.xlu0 %1530
    %1532 = vrot.lane.b32.xlu0 %v1099, 112
    %v1533 = vpop.permute.xlu0 %1532
    %v1534 = vsel %vm293, %v1529, 0
    %v1536 = vsel %vm293, %v1531, 0
    %v1538 = vsel %vm293, %v1533, 0
    %1540 = vmatpush.xpose.msra.mxu0 0.0
    %1541 = vmatpush.xpose.msra.mxu0 0.0
    %1542 = vmatpush.xpose.msra.mxu0 0.0
    %1543 = vmatpush.xpose.msra.mxu0 0.0
    %1544 = vmatpush.xpose.msra.mxu0 0.0
    %1545 = vmatpush.xpose.msra.mxu0 0.0
    %1546 = vmatpush.xpose.msra.mxu0 0.0
    %1547 = vmatpush.xpose.msra.mxu0 0.0
    %1548 = vmatpush.xpose.msra.mxu0 0.0
    %1549 = vmatpush.xpose.msra.mxu0 0.0
    %1550 = vmatpush.xpose.msra.mxu0 0.0
    %1551 = vmatpush.xpose.msra.mxu0 0.0
    %1552 = vmatpush.xpose.msra.mxu0 0.0
    %1553 = vmatpush.xpose.msra.mxu0 0.0
    %1554 = vmatpush.xpose.msra.mxu0 %v1538
    %1555 = vmatpush.xpose.msra.mxu0 %v1536
    %1556 = vmatmul.f32.gmra.mxu0 %v1534
    %v1557 = vpop.f32.mrf.mxu0
    %v1558 = vadd.f32 0.0, %v1557
    %1559 = vdwg.mxu0
    %v1560 = vsel %vm1217, %v1526, -inf
    %1561 = vmax.xlane.f32.xlu0 %v1560
    %v1562 = vpop.xlane.xlu0 %1561
    %v1563 = vsel %vm1217, %v1558, -inf
    %1564 = vmax.xlane.f32.xlu0 %v1563
    %v1565 = vpop.xlane.xlu0 %1564
    %v1566 = vsub.f32 %v1526, %v1562
    %v1567 = vsub.f32 %v1558, %v1565
    %v1568 = vmul.f32 %v1566, 1.442695
    %v1569 = vpow.pop %v1568
    %v1570 = vmul.f32 %v1567, 1.442695
    %v1571 = vpow.pop %v1570
    %v1572 = vsel %vm1217, %v1569, 0.0
    %1573 = vadd.xlane.f32.xlu0 %v1572
    %v1574 = vpop.xlane.xlu0 %1573
    %v1575 = vsel %vm1217, %v1571, 0.0
    %1576 = vadd.xlane.f32.xlu0 %v1575
    %v1577 = vpop.xlane.xlu0 %1576
    %v1578 = vrcp.pop %v1574
    %v1579 = vrcp.pop %v1577
    %v1580 = vmul.f32 %v1569, %v1578
    %v1581 = vmul.f32 %v1571, %v1579
    %1582 = vrot.lane.b32.xlu0 %v1146, 112
    %v1583 = vpop.permute.xlu0 %1582
    %1584 = vrot.lane.b32.xlu0 %v1149, 112
    %v1585 = vpop.permute.xlu0 %1584
    %v1589 = vsel %vm1217, %v1580, 0
    %1591 = vmatpush.msra.mxu0 0.0
    %1592 = vmatpush.msra.mxu0 0.0
    %1593 = vmatpush.msra.mxu0 0.0
    %1594 = vmatpush.msra.mxu0 0.0
    %1595 = vmatpush.msra.mxu0 0.0
    %1596 = vmatpush.msra.mxu0 0.0
    %1597 = vmatpush.msra.mxu0 0.0
    %1598 = vmatpush.msra.mxu0 0.0
    %1599 = vmatpush.msra.mxu0 0.0
    %1600 = vmatpush.msra.mxu0 0.0
    %1601 = vmatpush.msra.mxu0 0.0
    %1602 = vmatpush.msra.mxu0 0.0
    %1603 = vmatpush.msra.mxu0 0.0
    %1604 = vmatpush.msra.mxu0 0.0
    %1605 = vmatpush.msra.mxu0 %v1585
    %1606 = vmatpush.msra.mxu0 %v1583
    %1607 = vmatmul.f32.gmra.mxu0 %v1589
    %v1608 = vpop.f32.mrf.mxu0
    %v1609 = vadd.f32 0.0, %v1608
    %1610 = vdwg.mxu0
    %1611 = vrot.lane.b32.xlu0 %v1152, 112
    %v1612 = vpop.permute.xlu0 %1611
    %1613 = vrot.lane.b32.xlu0 %v1155, 112
    %v1614 = vpop.permute.xlu0 %1613
    %v1618 = vsel %vm1217, %v1581, 0
    %1620 = vmatpush.msra.mxu0 0.0
    %1621 = vmatpush.msra.mxu0 0.0
    %1622 = vmatpush.msra.mxu0 0.0
    %1623 = vmatpush.msra.mxu0 0.0
    %1624 = vmatpush.msra.mxu0 0.0
    %1625 = vmatpush.msra.mxu0 0.0
    %1626 = vmatpush.msra.mxu0 0.0
    %1627 = vmatpush.msra.mxu0 0.0
    %1628 = vmatpush.msra.mxu0 0.0
    %1629 = vmatpush.msra.mxu0 0.0
    %1630 = vmatpush.msra.mxu0 0.0
    %1631 = vmatpush.msra.mxu0 0.0
    %1632 = vmatpush.msra.mxu0 0.0
    %1633 = vmatpush.msra.mxu0 0.0
    %1634 = vmatpush.msra.mxu0 %v1614
    %1635 = vmatpush.msra.mxu0 %v1612
    %1636 = vmatmul.f32.gmra.mxu0 %v1618
    %v1637 = vpop.f32.mrf.mxu0
    %v1638 = vadd.f32 0.0, %v1637
    %1639 = vdwg.mxu0
    %v1641 = vsel %vm293, %v1609, 0
    %v1644 = vsel %vm293, %v1638, 0
    %1646 = vmatpush.msra.mxu0 0.0
    %1647 = vmatpush.msra.mxu0 0.0
    %1648 = vmatpush.msra.mxu0 0.0
    %1649 = vmatpush.msra.mxu0 0.0
    %1650 = vmatpush.msra.mxu0 0.0
    %1651 = vmatpush.msra.mxu0 0.0
    %1652 = vmatpush.msra.mxu0 0.0
    %1653 = vmatpush.msra.mxu0 0.0
    %1654 = vmatpush.msra.mxu0 0.0
    %1655 = vmatpush.msra.mxu0 0.0
    %1656 = vmatpush.msra.mxu0 0.0
    %1657 = vmatpush.msra.mxu0 0.0
    %1658 = vmatpush.msra.mxu0 0.0
    %1659 = vmatpush.msra.mxu0 0.0
    %1660 = vmatpush.msra.mxu0 0.0
    %1661 = vmatpush.msra.mxu0 %v1006
    %1662 = vmatmul.f32.gmra.mxu0 %v1641
    %v1663 = vpop.f32.mrf.mxu0
    %v1664 = vadd.f32 0.0, %v1663
    %1665 = vmatmul.f32.gmra.mxu0 %v1644
    %v1666 = vpop.f32.mrf.mxu0
    %v1667 = vadd.f32 0.0, %v1666
    %1668 = vdwg.mxu0
    %v1669 = vadd.f32 %v1489, %v1664
    %v1670 = vadd.f32 %v1492, %v1667
    %v1671 = vadd.f32 %v1494, %v1580
    %v1672 = vadd.f32 %v1495, %v1581
    %1673 = vrot.lane.b32.xlu0 %v1157, 104
    %v1674 = vpop.permute.xlu0 %1673
    %1675 = vrot.lane.b32.xlu0 %v1090, 104
    %v1676 = vpop.permute.xlu0 %1675
    %1677 = vrot.lane.b32.xlu0 %v1093, 104
    %v1678 = vpop.permute.xlu0 %1677
    %v1679 = vsel %vm293, %v1674, 0
    %v1681 = vsel %vm293, %v1676, 0
    %v1683 = vsel %vm293, %v1678, 0
    %1685 = vmatpush.xpose.msra.mxu0 0.0
    %1686 = vmatpush.xpose.msra.mxu0 0.0
    %1687 = vmatpush.xpose.msra.mxu0 0.0
    %1688 = vmatpush.xpose.msra.mxu0 0.0
    %1689 = vmatpush.xpose.msra.mxu0 0.0
    %1690 = vmatpush.xpose.msra.mxu0 0.0
    %1691 = vmatpush.xpose.msra.mxu0 0.0
    %1692 = vmatpush.xpose.msra.mxu0 0.0
    %1693 = vmatpush.xpose.msra.mxu0 0.0
    %1694 = vmatpush.xpose.msra.mxu0 0.0
    %1695 = vmatpush.xpose.msra.mxu0 0.0
    %1696 = vmatpush.xpose.msra.mxu0 0.0
    %1697 = vmatpush.xpose.msra.mxu0 0.0
    %1698 = vmatpush.xpose.msra.mxu0 0.0
    %1699 = vmatpush.xpose.msra.mxu0 %v1683
    %1700 = vmatpush.xpose.msra.mxu0 %v1681
    %1701 = vmatmul.f32.gmra.mxu0 %v1679
    %v1702 = vpop.f32.mrf.mxu0
    %v1703 = vadd.f32 0.0, %v1702
    %1704 = vdwg.mxu0
    %1705 = vrot.lane.b32.xlu0 %v1158, 104
    %v1706 = vpop.permute.xlu0 %1705
    %1707 = vrot.lane.b32.xlu0 %v1096, 104
    %v1708 = vpop.permute.xlu0 %1707
    %1709 = vrot.lane.b32.xlu0 %v1099, 104
    %v1710 = vpop.permute.xlu0 %1709
    %v1711 = vsel %vm293, %v1706, 0
    %v1713 = vsel %vm293, %v1708, 0
    %v1715 = vsel %vm293, %v1710, 0
    %1717 = vmatpush.xpose.msra.mxu0 0.0
    %1718 = vmatpush.xpose.msra.mxu0 0.0
    %1719 = vmatpush.xpose.msra.mxu0 0.0
    %1720 = vmatpush.xpose.msra.mxu0 0.0
    %1721 = vmatpush.xpose.msra.mxu0 0.0
    %1722 = vmatpush.xpose.msra.mxu0 0.0
    %1723 = vmatpush.xpose.msra.mxu0 0.0
    %1724 = vmatpush.xpose.msra.mxu0 0.0
    %1725 = vmatpush.xpose.msra.mxu0 0.0
    %1726 = vmatpush.xpose.msra.mxu0 0.0
    %1727 = vmatpush.xpose.msra.mxu0 0.0
    %1728 = vmatpush.xpose.msra.mxu0 0.0
    %1729 = vmatpush.xpose.msra.mxu0 0.0
    %1730 = vmatpush.xpose.msra.mxu0 0.0
    %1731 = vmatpush.xpose.msra.mxu0 %v1715
    %1732 = vmatpush.xpose.msra.mxu0 %v1713
    %1733 = vmatmul.f32.gmra.mxu0 %v1711
    %v1734 = vpop.f32.mrf.mxu0
    %v1735 = vadd.f32 0.0, %v1734
    %1736 = vdwg.mxu0
    %v1737 = vsel %vm1217, %v1703, -inf
    %1738 = vmax.xlane.f32.xlu0 %v1737
    %v1739 = vpop.xlane.xlu0 %1738
    %v1740 = vsel %vm1217, %v1735, -inf
    %1741 = vmax.xlane.f32.xlu0 %v1740
    %v1742 = vpop.xlane.xlu0 %1741
    %v1743 = vsub.f32 %v1703, %v1739
    %v1744 = vsub.f32 %v1735, %v1742
    %v1745 = vmul.f32 %v1743, 1.442695
    %v1746 = vpow.pop %v1745
    %v1747 = vmul.f32 %v1744, 1.442695
    %v1748 = vpow.pop %v1747
    %v1749 = vsel %vm1217, %v1746, 0.0
    %1750 = vadd.xlane.f32.xlu0 %v1749
    %v1751 = vpop.xlane.xlu0 %1750
    %v1752 = vsel %vm1217, %v1748, 0.0
    %1753 = vadd.xlane.f32.xlu0 %v1752
    %v1754 = vpop.xlane.xlu0 %1753
    %v1755 = vrcp.pop %v1751
    %v1756 = vrcp.pop %v1754
    %v1757 = vmul.f32 %v1746, %v1755
    %v1758 = vmul.f32 %v1748, %v1756
    %1759 = vrot.lane.b32.xlu0 %v1146, 104
    %v1760 = vpop.permute.xlu0 %1759
    %1761 = vrot.lane.b32.xlu0 %v1149, 104
    %v1762 = vpop.permute.xlu0 %1761
    %v1766 = vsel %vm1217, %v1757, 0
    %1768 = vmatpush.msra.mxu0 0.0
    %1769 = vmatpush.msra.mxu0 0.0
    %1770 = vmatpush.msra.mxu0 0.0
    %1771 = vmatpush.msra.mxu0 0.0
    %1772 = vmatpush.msra.mxu0 0.0
    %1773 = vmatpush.msra.mxu0 0.0
    %1774 = vmatpush.msra.mxu0 0.0
    %1775 = vmatpush.msra.mxu0 0.0
    %1776 = vmatpush.msra.mxu0 0.0
    %1777 = vmatpush.msra.mxu0 0.0
    %1778 = vmatpush.msra.mxu0 0.0
    %1779 = vmatpush.msra.mxu0 0.0
    %1780 = vmatpush.msra.mxu0 0.0
    %1781 = vmatpush.msra.mxu0 0.0
    %1782 = vmatpush.msra.mxu0 %v1762
    %1783 = vmatpush.msra.mxu0 %v1760
    %1784 = vmatmul.f32.gmra.mxu0 %v1766
    %v1785 = vpop.f32.mrf.mxu0
    %v1786 = vadd.f32 0.0, %v1785
    %1787 = vdwg.mxu0
    %1788 = vrot.lane.b32.xlu0 %v1152, 104
    %v1789 = vpop.permute.xlu0 %1788
    %1790 = vrot.lane.b32.xlu0 %v1155, 104
    %v1791 = vpop.permute.xlu0 %1790
    %v1795 = vsel %vm1217, %v1758, 0
    %1797 = vmatpush.msra.mxu0 0.0
    %1798 = vmatpush.msra.mxu0 0.0
    %1799 = vmatpush.msra.mxu0 0.0
    %1800 = vmatpush.msra.mxu0 0.0
    %1801 = vmatpush.msra.mxu0 0.0
    %1802 = vmatpush.msra.mxu0 0.0
    %1803 = vmatpush.msra.mxu0 0.0
    %1804 = vmatpush.msra.mxu0 0.0
    %1805 = vmatpush.msra.mxu0 0.0
    %1806 = vmatpush.msra.mxu0 0.0
    %1807 = vmatpush.msra.mxu0 0.0
    %1808 = vmatpush.msra.mxu0 0.0
    %1809 = vmatpush.msra.mxu0 0.0
    %1810 = vmatpush.msra.mxu0 0.0
    %1811 = vmatpush.msra.mxu0 %v1791
    %1812 = vmatpush.msra.mxu0 %v1789
    %1813 = vmatmul.f32.gmra.mxu0 %v1795
    %v1814 = vpop.f32.mrf.mxu0
    %v1815 = vadd.f32 0.0, %v1814
    %1816 = vdwg.mxu0
    %v1818 = vsel %vm293, %v1786, 0
    %v1821 = vsel %vm293, %v1815, 0
    %1823 = vmatpush.msra.mxu0 0.0
    %1824 = vmatpush.msra.mxu0 0.0
    %1825 = vmatpush.msra.mxu0 0.0
    %1826 = vmatpush.msra.mxu0 0.0
    %1827 = vmatpush.msra.mxu0 0.0
    %1828 = vmatpush.msra.mxu0 0.0
    %1829 = vmatpush.msra.mxu0 0.0
    %1830 = vmatpush.msra.mxu0 0.0
    %1831 = vmatpush.msra.mxu0 0.0
    %1832 = vmatpush.msra.mxu0 0.0
    %1833 = vmatpush.msra.mxu0 0.0
    %1834 = vmatpush.msra.mxu0 0.0
    %1835 = vmatpush.msra.mxu0 0.0
    %1836 = vmatpush.msra.mxu0 0.0
    %1837 = vmatpush.msra.mxu0 0.0
    %1838 = vmatpush.msra.mxu0 %v1007
    %1839 = vmatmul.f32.gmra.mxu0 %v1818
    %v1840 = vpop.f32.mrf.mxu0
    %v1841 = vadd.f32 0.0, %v1840
    %1842 = vmatmul.f32.gmra.mxu0 %v1821
    %v1843 = vpop.f32.mrf.mxu0
    %v1844 = vadd.f32 0.0, %v1843
    %1845 = vdwg.mxu0
    %v1846 = vadd.f32 %v1669, %v1841
    %v1847 = vadd.f32 %v1670, %v1844
    %v1848 = vadd.f32 %v1671, %v1757
    %v1849 = vadd.f32 %v1672, %v1758
    %v1851 = vperm.slane %v1008, 0
    %v1853 = vadd.f32 %v1846, %v1851
    %v1854 = vadd.f32 %v1847, %v1851
    %v1855 = vmul.f32 %v1848, 0.25
    %v1856 = vmul.f32 %v1849, 0.25
    %v1857 = vadd.f32 %v995, %v1853
    %v1858 = vadd.f32 %v996, %v1854
    %v1859 = vld [vmem:[%s18] sm:$0x1]
    %v1860 = vld [vmem:[%s19] sm:$0x1]
    %v1861 = vsel %vm210, %v1857, 0.0
    %1862 = vadd.xlane.f32.xlu0 %v1861
    %v1863 = vpop.xlane.xlu0 %1862
    %v1864 = vsel %vm210, %v1858, 0.0
    %1865 = vadd.xlane.f32.xlu0 %v1864
    %v1866 = vpop.xlane.xlu0 %1865
    %v1867 = vmul.f32 %v1863, %v948
    %v1868 = vmul.f32 %v1866, %v948
    %v1869 = vsub.f32 %v1857, %v1867
    %v1870 = vsub.f32 %v1858, %v1868
    %v1871 = vmul.f32 %v1869, %v1869
    %v1872 = vmul.f32 %v1870, %v1870
    %v1873 = vsel %vm210, %v1871, 0.0
    %1874 = vadd.xlane.f32.xlu0 %v1873
    %v1875 = vpop.xlane.xlu0 %1874
    %v1876 = vsel %vm210, %v1872, 0.0
    %1877 = vadd.xlane.f32.xlu0 %v1876
    %v1878 = vpop.xlane.xlu0 %1877
    %v1879 = vmul.f32 %v1875, %v948
    %v1880 = vmul.f32 %v1878, %v948
    %v1881 = vadd.f32 %v1879, 1e-05
    %v1882 = vadd.f32 %v1880, 1e-05
    %v1883 = vrsqrt.pop %v1881
    %v1884 = vmul.f32 %v1883, %v1881
    %v1885 = vmul.f32 %v1884, %v1883
    %v1886 = vmul.f32 0.5, %v1885
    %v1887 = vsub.f32 1.5, %v1886
    %v1888 = vmul.f32 %v1883, %v1887
    %vm1889 = vweird.f32 %v1881
    %vm1890 = vweird.f32 %v1883
    %vm1891 = vmor %vm1889, %vm1890
    %v1892 = vsel %vm1891, %v1883, %v1888
    %v1893 = vrsqrt.pop %v1882
    %v1894 = vmul.f32 %v1893, %v1882
    %v1895 = vmul.f32 %v1894, %v1893
    %v1896 = vmul.f32 0.5, %v1895
    %v1897 = vsub.f32 1.5, %v1896
    %v1898 = vmul.f32 %v1893, %v1897
    %vm1899 = vweird.f32 %v1882
    %vm1900 = vweird.f32 %v1893
    %vm1901 = vmor %vm1899, %vm1900
    %v1902 = vsel %vm1901, %v1893, %v1898
    %v1903 = vmul.f32 %v1869, %v1892
    %v1904 = vmul.f32 %v1870, %v1902
    %v1906 = vperm.slane %v1859, 0
    %v1908 = vmul.f32 %v1903, %v1906
    %v1909 = vmul.f32 %v1904, %v1906
    %v1911 = vperm.slane %v1860, 0
    %v1913 = vadd.f32 %v1908, %v1911
    %v1914 = vadd.f32 %v1909, %v1911
    %v1915 = vld [vmem:[%s12] sm:$0xff]
    %v1916 = vld [vmem:[%s12 + $0x8] sm:$0xff]
    %v1917 = vld [vmem:[%s12 + $0x10] sm:$0xff]
    %v1918 = vld [vmem:[%s12 + $0x18] sm:$0xff]
    %v1919 = vld [vmem:[#allocation7] sm:$0x1]
    %v1921 = vperm.slane %v1919, 0
    %v1924 = vsel %vm210, %v1913, 0
    %v1927 = vsel %vm210, %v1914, 0
    %1929 = vmatpush.msra.mxu0 0.0
    %1930 = vmatpush.msra.mxu0 0.0
    %1931 = vmatpush.msra.mxu0 0.0
    %1932 = vmatpush.msra.mxu0 0.0
    %1933 = vmatpush.msra.mxu0 0.0
    %1934 = vmatpush.msra.mxu0 0.0
    %1935 = vmatpush.msra.mxu0 0.0
    %1936 = vmatpush.msra.mxu0 0.0
    %1937 = vmatpush.msra.mxu0 0.0
    %1938 = vmatpush.msra.mxu0 0.0
    %1939 = vmatpush.msra.mxu0 0.0
    %1940 = vmatpush.msra.mxu0 0.0
    %1941 = vmatpush.msra.mxu0 %v1918
    %1942 = vmatpush.msra.mxu0 %v1917
    %1943 = vmatpush.msra.mxu0 %v1916
    %1944 = vmatpush.msra.mxu0 %v1915
    %1945 = vmatmul.f32.gmra.mxu0 %v1924
    %v1946 = vpop.f32.mrf.mxu0
    %v1947 = vadd.f32 %v1921, %v1946
    %1948 = vmatmul.f32.gmra.mxu0 %v1927
    %v1949 = vpop.f32.mrf.mxu0
    %v1950 = vadd.f32 %v1921, %v1949
    %1951 = vdwg.mxu0
    %v1952 = vmax.f32 %v1947, 0.0
    %v1953 = vmax.f32 %v1950, 0.0
    %v1954 = vld [vmem:[%s14] sm:$0xff]
    %v1955 = vld [vmem:[%s14 + $0x8] sm:$0xff]
    %v1956 = vld [vmem:[%s14 + $0x10] sm:$0xff]
    %v1957 = vld [vmem:[%s14 + $0x18] sm:$0xff]
    %v1958 = vld [vmem:[%s14 + $0x20] sm:$0xff]
    %v1959 = vld [vmem:[%s14 + $0x28] sm:$0xff]
    %v1960 = vld [vmem:[%s14 + $0x30] sm:$0xff]
    %v1961 = vld [vmem:[%s14 + $0x38] sm:$0xff]
    %v1962 = vld [vmem:[#allocation8] sm:$0x1]
    %v1964 = vperm.slane %v1962, 0
    %vm1966 = vcmask 523264
    %v1968 = vsel %vm1966, %v1952, 0
    %v1971 = vsel %vm1966, %v1953, 0
    %1973 = vmatpush.msra.mxu0 0.0
    %1974 = vmatpush.msra.mxu0 0.0
    %1975 = vmatpush.msra.mxu0 0.0
    %1976 = vmatpush.msra.mxu0 0.0
    %1977 = vmatpush.msra.mxu0 0.0
    %1978 = vmatpush.msra.mxu0 0.0
    %1979 = vmatpush.msra.mxu0 0.0
    %1980 = vmatpush.msra.mxu0 0.0
    %1981 = vmatpush.msra.mxu0 %v1961
    %1982 = vmatpush.msra.mxu0 %v1960
    %1983 = vmatpush.msra.mxu0 %v1959
    %1984 = vmatpush.msra.mxu0 %v1958
    %1985 = vmatpush.msra.mxu0 %v1957
    %1986 = vmatpush.msra.mxu0 %v1956
    %1987 = vmatpush.msra.mxu0 %v1955
    %1988 = vmatpush.msra.mxu0 %v1954
    %1989 = vmatmul.f32.gmra.mxu0 %v1968
    %v1990 = vpop.f32.mrf.mxu0
    %v1991 = vadd.f32 %v1964, %v1990
    %1992 = vmatmul.f32.gmra.mxu0 %v1971
    %v1993 = vpop.f32.mrf.mxu0
    %v1994 = vadd.f32 %v1964, %v1993
    %1995 = vdwg.mxu0
    %v1996 = vadd.f32 %v1913, %v1991
    %v1997 = vadd.f32 %v1914, %v1994
    %v1998 = vld [vmem:[#allocation13] sm:$0x1]
    %v1999 = vld [vmem:[#allocation14] sm:$0x1]
    %v2000 = vsel %vm210, %v1996, 0.0
    %2001 = vadd.xlane.f32.xlu0 %v2000
    %v2002 = vpop.xlane.xlu0 %2001
    %v2003 = vsel %vm210, %v1997, 0.0
    %2004 = vadd.xlane.f32.xlu0 %v2003
    %v2005 = vpop.xlane.xlu0 %2004
    %v2006 = vmul.f32 %v2002, %v948
    %v2007 = vmul.f32 %v2005, %v948
    %v2008 = vsub.f32 %v1996, %v2006
    %v2009 = vsub.f32 %v1997, %v2007
    %v2010 = vmul.f32 %v2008, %v2008
    %v2011 = vmul.f32 %v2009, %v2009
    %v2012 = vsel %vm210, %v2010, 0.0
    %2013 = vadd.xlane.f32.xlu0 %v2012
    %v2014 = vpop.xlane.xlu0 %2013
    %v2015 = vsel %vm210, %v2011, 0.0
    %2016 = vadd.xlane.f32.xlu0 %v2015
    %v2017 = vpop.xlane.xlu0 %2016
    %v2018 = vmul.f32 %v2014, %v948
    %v2019 = vmul.f32 %v2017, %v948
    %v2020 = vadd.f32 %v2018, 1e-05
    %v2021 = vadd.f32 %v2019, 1e-05
    %v2022 = vrsqrt.pop %v2020
    %v2023 = vmul.f32 %v2022, %v2020
    %v2024 = vmul.f32 %v2023, %v2022
    %v2025 = vmul.f32 0.5, %v2024
    %v2026 = vsub.f32 1.5, %v2025
    %v2027 = vmul.f32 %v2022, %v2026
    %vm2028 = vweird.f32 %v2020
    %vm2029 = vweird.f32 %v2022
    %vm2030 = vmor %vm2028, %vm2029
    %v2031 = vsel %vm2030, %v2022, %v2027
    %v2032 = vrsqrt.pop %v2021
    %v2033 = vmul.f32 %v2032, %v2021
    %v2034 = vmul.f32 %v2033, %v2032
    %v2035 = vmul.f32 0.5, %v2034
    %v2036 = vsub.f32 1.5, %v2035
    %v2037 = vmul.f32 %v2032, %v2036
    %vm2038 = vweird.f32 %v2021
    %vm2039 = vweird.f32 %v2032
    %vm2040 = vmor %vm2038, %vm2039
    %v2041 = vsel %vm2040, %v2032, %v2037
    %v2042 = vmul.f32 %v2008, %v2031
    %v2043 = vmul.f32 %v2009, %v2041
    %v2045 = vperm.slane %v1998, 0
    %v2047 = vmul.f32 %v2042, %v2045
    %v2048 = vmul.f32 %v2043, %v2045
    %v2050 = vperm.slane %v1999, 0
    %v2052 = vadd.f32 %v2047, %v2050
    %v2053 = vadd.f32 %v2048, %v2050
    %2054 = vst.msk [vmem:[%s22] sm:$0xff] %vm210, %v2052
    %2055 = vst.msk [vmem:[%s22 + $0x8] sm:$0xff] %vm210, %v2053
    %2056 = vst.msk [vmem:[#allocation16] sm:$0xff] %vm1217, %v1855
    %2057 = vst.msk [vmem:[#allocation16 + $0x8] sm:$0xff] %vm1217, %v1856
    // Predicated region
    $region122: #{transformer_decoder_forward.4} parent=1 // pred_check
      _
    $region123: #{transformer_decoder_forward.4} parent=1 // pred_check_branch
      %2059 = sbr.rel (0) target = $region125
    $region124: #{transformer_decoder_forward.4} parent=1 // pred_region
      _
    $region125: #{transformer_decoder_forward.4} parent=1 // pred_fallthru
      _
    // Predicated region
    $region126: #{transformer_decoder_forward.4} parent=1 // pred_check
      _
    $region127: #{transformer_decoder_forward.4} parent=1 // pred_check_branch
      %2061 = sbr.rel (0) target = $region129
    $region128: #{transformer_decoder_forward.4} parent=1 // pred_region
      %2063 = vsyncadd [#allocation4], 0
      %s2064 = sshll.u32 [#allocation16], 4
      %s2065 = int_to_ptr.vmem [resolvable:$true] %s2064
      %s2066 = sshll.u32 %s23, 4
      %s2067 = int_to_ptr.hbm [resolvable:$true] %s2066
      %2072 = dma.vmem_to_hbm [thread:$0]  %s2065, 256, %s2067, [#allocation4], 128, 128, 8
    $region129: #{transformer_decoder_forward.4} parent=1 // pred_fallthru
      _
    // Predicated region
    $region130: #{transformer_decoder_forward.4} parent=1 // pred_check
      _
    $region131: #{transformer_decoder_forward.4} parent=1 // pred_check_branch
      %2074 = sbr.rel (0) target = $region133
    $region132: #{transformer_decoder_forward.4} parent=1 // pred_region
      _
    $region133: #{transformer_decoder_forward.4} parent=1 // pred_fallthru
      _
    // Predicated region
    $region134: #{transformer_decoder_forward.4} parent=1 // pred_check
      _
    $region135: #{transformer_decoder_forward.4} parent=1 // pred_check_branch
      %2076 = sbr.rel (0) target = $region137
    $region136: #{transformer_decoder_forward.4} parent=1 // pred_region
      %2078 = dma.done [#allocation4], 256
    $region137: #{transformer_decoder_forward.4} parent=1 // pred_fallthru
      _
    %2079 = vsyncpa [#allocation3], 1
    %2080 = vsyncpa [#allocation6], 1
    %2081 = vsyncpa [#allocation9], 1
    %2082 = vsyncpa [#allocation12], 1
    %2083 = vsyncpa [#allocation15], 1
    %2084 = vsyncpa [#allocation4], 1

</llo_original>
